<compile_context>
chip_gen: v5e
topology: v5e:2x2
jax: 0.10.0
libtpu: 0.0.40
codegen_flags: <defaults>
</compile_context>

<pallas_src>
import functools

import jax
import jax.numpy as jnp
from jax import lax
from jax.experimental import pallas as pl
from jax.experimental.pallas import tpu as pltpu


def _round_up(x, m):
    return ((x + m - 1) // m) * m


def _tensorcores_per_chip():
    """2 on v7x (dual TensorCore per chip); 1 on v5e/v6e and anything unknown."""
    try:
        kind = jax.devices()[0].device_kind.lower()
    except Exception:
        return 1
    return 2 if ("v7" in kind or "7x" in kind) else 1


def _netvlad2_kernel(x_ref, w_ref, b_ref, vout_ref, aout_ref, v_acc, a_acc,
                     *, tn, tiles_per_core, n_valid, n_padded):
    """Per tile: normalize rows (folded), fc+softmax (lane-dense, K on sublanes),
    accumulate V = s_w @ x and a_sum = sum(s)."""
    c = pl.program_id(0)           # core (sharded on v7x, size-1 otherwise)
    i = pl.program_id(1)           # N-reduction axis

    @pl.when(i == 0)
    def _init():
        v_acc[...] = jnp.zeros_like(v_acc)
        a_acc[...] = jnp.zeros_like(a_acc)

    x = x_ref[...].astype(jnp.float32)          # (tn, D)  (bf16 stream -> f32)
    w = w_ref[...].astype(jnp.float32)          # (K, D)
    b = b_ref[...].astype(jnp.float32)          # (K, 1)

    # Raw logits, lane-dense: g[k, n] = sum_d w[k, d] * x[n, d].   (MXU)
    g = lax.dot_general(w, x, (((1,), (1,)), ((), ())),
                        preferred_element_type=jnp.float32)        # (K, tn)

    # Per-row squared norms, lane-dense, on the MXU (rows are identical copies
    # so every later op is a plain elementwise vreg op -- no broadcasts/relayouts):
    # sumsq[k, n] = sum_d x[n, d]^2.
    sumsq = lax.dot_general(jnp.ones_like(w), x * x, (((1,), (1,)), ((), ())),
                            preferred_element_type=jnp.float32)    # (K, tn)

    # F.normalize(x, p=2, dim=1): clamp_min(norm, 1e-12) <=> clamp sumsq at 1e-24.
    r = lax.rsqrt(jnp.maximum(sumsq, 1e-24))                       # (K, tn)

    # Logits of the *normalized* rows: fold 1/||x|| into the raw logits.
    logits = g * r + b                                             # (K, tn)

    # Softmax over clusters (axis 0 == sublanes; cheap XLU reductions).
    m = jnp.max(logits, axis=0, keepdims=True)                     # (1, tn)
    e = jnp.exp(logits - m)                                        # (K, tn)
    inv_den = 1.0 / jnp.sum(e, axis=0, keepdims=True)              # (1, tn)
    s = e * inv_den                                                # (K, tn)
    s_w = s * r          # soft-assign scaled by 1/||x||:  s_w @ x == s @ x_n

    def _accumulate(s_m, s_w_m):
        # V[k, d] += sum_n s_w[k, n] * x[n, d]   (contract the tn axis, MXU)
        v_acc[...] += lax.dot_general(s_w_m, x, (((1,), (0,)), ((), ())),
                                      preferred_element_type=jnp.float32)
        a_acc[...] += jnp.sum(s_m, axis=1, keepdims=True)          # (K, 1)

    if n_padded == n_valid:
        _accumulate(s, s_w)
    else:
        # Masking is only needed on the (globally last) ragged / fully padded
        # tiles; full tiles take the unmasked branch.
        row0 = (c * tiles_per_core + i) * tn
        tile_end = row0 + tn

        @pl.when(tile_end <= n_valid)
        def _full_tile():
            _accumulate(s, s_w)

        @pl.when(tile_end > n_valid)
        def _ragged_tile():
            col = row0 + lax.broadcasted_iota(jnp.int32, (1, tn), 1)
            valid = col < n_valid
            _accumulate(jnp.where(valid, s, 0.0), jnp.where(valid, s_w, 0.0))

    @pl.when(i == pl.num_programs(1) - 1)
    def _finalize():
        vout_ref[...] = v_acc[...]                                 # (K, D)
        aout_ref[...] = a_acc[...]                                 # (K, 1)


def netvlad2_forward(x, fc_w, fc_b, centroids, *, tn=2048,
                     stream_dtype=jnp.bfloat16):
    """x: (N, D) float32.  Returns (1, K*D) float32 VLAD descriptor."""
    N, D = x.shape
    K = fc_w.shape[0]

    # Tile rows: multiple of 16 (bf16 sublane packing), no larger than needed.
    tn = _round_up(max(16, min(tn, _round_up(N, 16))), 16)
    total_tiles = pl.cdiv(N, tn)

    cores = _tensorcores_per_chip()
    nc = cores if (cores > 1 and total_tiles >= cores) else 1
    tiles_per_core = pl.cdiv(total_tiles, nc)
    n_pad = nc * tiles_per_core * tn

    x = x.astype(stream_dtype)                    # halve HBM traffic (bf16)
    if n_pad != N:
        x = jnp.pad(x, ((0, n_pad - N), (0, 0)))

    kernel = functools.partial(
        _netvlad2_kernel,
        tn=tn, tiles_per_core=tiles_per_core, n_valid=N, n_padded=n_pad)

    if nc > 1:
        # v7x: actually shard the leading axis across the two TensorCores.
        dim_sem = (pltpu.CORE_PARALLEL, pltpu.ARBITRARY)
    else:
        # Single TC (v5e / v6e): plain serial reduction loop.
        dim_sem = ("arbitrary", "arbitrary")

    grid_spec = pltpu.PrefetchScalarGridSpec(
        num_scalar_prefetch=0,
        grid=(nc, tiles_per_core),
        in_specs=[
            # x: streamed (tn, D) tiles; each core walks its own contiguous range.
            pl.BlockSpec((tn, D), lambda c, i: (c * tiles_per_core + i, 0)),
            # fc weight / bias: resident across the whole grid.
            pl.BlockSpec((K, D), lambda c, i: (0, 0)),
            pl.BlockSpec((K, 1), lambda c, i: (0, 0)),
        ],
        out_specs=(
            # Per-core partial V (K, D): lane-dense, written once at last step.
            pl.BlockSpec((None, K, D), lambda c, i: (c, 0, 0)),
            # Per-core partial a_sum (K, 1).
            pl.BlockSpec((None, K, 1), lambda c, i: (c, 0, 0)),
        ),
        scratch_shapes=[
            pltpu.VMEM((K, D), jnp.float32),     # V accumulator
            pltpu.VMEM((K, 1), jnp.float32),     # a_sum accumulator
        ],
    )

    bytes_accessed = (n_pad * D * x.dtype.itemsize
                      + 4 * (K * D + K + nc * (K * D + K)))
    flops = 4 * n_pad * D * K + 6 * n_pad * D
    transcendentals = n_pad * (K + 2)

    v_parts, a_parts = pl.pallas_call(
        kernel,
        grid_spec=grid_spec,
        out_shape=(
            jax.ShapeDtypeStruct((nc, K, D), jnp.float32),
            jax.ShapeDtypeStruct((nc, K, 1), jnp.float32),
        ),
        compiler_params=pltpu.CompilerParams(dimension_semantics=dim_sem),
        cost_estimate=pl.CostEstimate(
            flops=flops,
            transcendentals=transcendentals,
            bytes_accessed=bytes_accessed),
    )(x, fc_w, fc_b.reshape(K, 1))

    # Tiny epilogue (a few KiB) in plain XLA: combine per-core partials,
    # subtract a_sum * centroids, restore the (d, k) flatten order, normalize.
    V = jnp.sum(v_parts, axis=0)                              # (K, D)
    a_sum = jnp.sum(a_parts, axis=0)[:, 0]                    # (K,)
    vlad_kd = V - a_sum[:, None] * centroids                  # (K, D)
    flat = vlad_kd.T.reshape(1, K * D)                        # flat index = d*K + k
    norm = jnp.sqrt(jnp.sum(flat * flat, axis=1, keepdims=True))
    return flat / jnp.maximum(norm, 1e-12)


def netvlad2_reference(x, fc_w, fc_b, centroids):
    """Pure-JAX reference mirroring the PyTorch forward()."""
    x_n = x / jnp.maximum(jnp.linalg.norm(x, axis=1, keepdims=True), 1e-12)
    logits = x_n @ fc_w.T + fc_b
    s = jax.nn.softmax(logits, axis=1)                        # (N, K)
    a_sum = jnp.sum(s, axis=0)                                # (K,)
    a = a_sum[None, :] * centroids.T                          # (D, K)
    vlad = (s.T @ x_n).T - a                                  # (D, K)
    flat = vlad.reshape(1, -1)                                # (1, D*K)
    return flat / jnp.maximum(jnp.linalg.norm(flat, axis=1, keepdims=True), 1e-12)


if __name__ == "__main__":
    # Module defaults: num_clusters=8, dim=128.  N gives multiple x tiles plus
    # a ragged tail (exercises cross-step accumulation + padded-row masking)
    # while staying small (~1.2 MB of input).
    N, D, K = 2500, 128, 8

    key = jax.random.PRNGKey(0)
    kx, kw, kc = jax.random.split(key, 3)

    x = jax.random.normal(kx, (N, D), dtype=jnp.float32)

    # Deterministic parameter init matching __init__ / _init_params:
    #   fc.weight: xavier_normal_ ; fc.bias: 0 ; centroids: uniform [0,1)
    xavier_std = (2.0 / (D + K)) ** 0.5
    fc_w = xavier_std * jax.random.normal(kw, (K, D), dtype=jnp.float32)
    fc_b = jnp.zeros((K,), dtype=jnp.float32)
    centroids = jax.random.uniform(kc, (K, D), dtype=jnp.float32)

    out = jax.block_until_ready(netvlad2_forward(x, fc_w, fc_b, centroids))

    # The kernel streams x as bf16 (HBM-bound => ~2x); validate against the
    # reference evaluated on the same bf16-quantized input so the check stays
    # meaningful (layout / mask / flatten-order bugs would still blow past the
    # tolerance).  Tolerance also absorbs MXU f32-matmul precision modes.
    x_q = x.astype(jnp.bfloat16).astype(jnp.float32)
    ref = netvlad2_reference(x_q, fc_w, fc_b, centroids)

    assert out.shape == (1, K * D)
    assert jnp.allclose(out, ref, atol=1e-3, rtol=1e-3), "mismatch vs reference"

    print("KERNEL_OK")
</pallas_src>

<mosaic_0001>
module attributes {stable_mosaic.version = 11 : i64} {
  func.func @_netvlad2_kernel(%arg0: i32, %arg1: i32, %arg2: memref<2048x128xbf16, #tpu.memory_space<vmem>>, %arg3: memref<8x128xf32, #tpu.memory_space<vmem>>, %arg4: memref<8x1xf32, #tpu.memory_space<vmem>>, %arg5: memref<1x8x128xf32, #tpu.memory_space<vmem>>, %arg6: memref<1x8x1xf32, #tpu.memory_space<vmem>>, %arg7: memref<8x128xf32, #tpu.memory_space<vmem>>, %arg8: memref<8x1xf32, #tpu.memory_space<vmem>>) attributes {dimension_semantics = [#tpu.dimension_semantics<arbitrary>, #tpu.dimension_semantics<arbitrary>], iteration_bounds = array<i64: 1, 2>, scalar_prefetch = 0 : i64, scratch_operands = 2 : i64, tpu.core_type = #tpu.core_type<tc>, window_params = [{transform_indices = @transform_0, window_bounds = array<i64: 2048, 128>}, {pipeline_mode = #tpu.pipeline_mode<synchronous>, transform_indices = @transform_1, window_bounds = array<i64: 8, 128>}, {pipeline_mode = #tpu.pipeline_mode<synchronous>, transform_indices = @transform_2, window_bounds = array<i64: 8, 1>}, {transform_indices = @transform_3, window_bounds = array<i64: 1, 8, 128>}, {transform_indices = @transform_4, window_bounds = array<i64: 1, 8, 1>}]} {
    %c0_i32 = arith.constant 0 : i32
    %0 = arith.cmpi eq, %arg1, %c0_i32 : i32
    %1 = arith.extui %0 : i1 to i32
    %c0_i32_0 = arith.constant 0 : i32
    %2 = arith.cmpi ne, %1, %c0_i32_0 : i32
    scf.if %2 {
      %cst_17 = arith.constant 0.000000e+00 : f32
      %42 = vector.broadcast %cst_17 : f32 to vector<8x128xf32>
      %c0_18 = arith.constant 0 : index
      %c0_19 = arith.constant 0 : index
      %43 = vector.load %arg7[%c0_18, %c0_19] : memref<8x128xf32, #tpu.memory_space<vmem>>, vector<8x128xf32>
      tpu.vector_store %arg7[%c0_18, %c0_19], %42 {strides = array<i32>} : memref<8x128xf32, #tpu.memory_space<vmem>>, vector<8x128xf32>,
      %cst_20 = arith.constant 0.000000e+00 : f32
      %44 = vector.broadcast %cst_20 : f32 to vector<8x1xf32>
      %c0_21 = arith.constant 0 : index
      %c0_22 = arith.constant 0 : index
      %45 = vector.load %arg8[%c0_21, %c0_22] : memref<8x1xf32, #tpu.memory_space<vmem>>, vector<8x1xf32>
      tpu.vector_store %arg8[%c0_21, %c0_22], %44 {strides = array<i32>} : memref<8x1xf32, #tpu.memory_space<vmem>>, vector<8x1xf32>,
    } else {
    }
    %c0 = arith.constant 0 : index
    %c0_1 = arith.constant 0 : index
    %3 = vector.load %arg2[%c0, %c0_1] : memref<2048x128xbf16, #tpu.memory_space<vmem>>, vector<2048x128xbf16>
    %4 = arith.extf %3 : vector<2048x128xbf16> to vector<2048x128xf32>
    %c0_2 = arith.constant 0 : index
    %c0_3 = arith.constant 0 : index
    %5 = vector.load %arg3[%c0_2, %c0_3] : memref<8x128xf32, #tpu.memory_space<vmem>>, vector<8x128xf32>
    %c0_4 = arith.constant 0 : index
    %c0_5 = arith.constant 0 : index
    %6 = vector.load %arg4[%c0_4, %c0_5] : memref<8x1xf32, #tpu.memory_space<vmem>>, vector<8x1xf32>
    %cst = arith.constant dense<0.000000e+00> : vector<8x2048xf32>
    %7 = tpu.matmul %5, %4, %cst {dimension_numbers = #tpu.dot_dimension_numbers<[1], [1], [0], [0], [0, 0, 1, 0], [], []>} : vector<8x128xf32>, vector<2048x128xf32>, vector<8x2048xf32> -> vector<8x2048xf32>
    %cst_6 = arith.constant 1.000000e+00 : f32
    %8 = vector.broadcast %cst_6 : f32 to vector<8x128xf32>
    %9 = arith.mulf %4, %4 : vector<2048x128xf32>
    %cst_7 = arith.constant dense<0.000000e+00> : vector<8x2048xf32>
    %10 = tpu.matmul %8, %9, %cst_7 {dimension_numbers = #tpu.dot_dimension_numbers<[1], [1], [0], [0], [0, 0, 1, 0], [], []>} : vector<8x128xf32>, vector<2048x128xf32>, vector<8x2048xf32> -> vector<8x2048xf32>
    %cst_8 = arith.constant 1.000000e-24 : f32
    %11 = vector.broadcast %cst_8 : f32 to vector<8x2048xf32>
    %12 = arith.maximumf %10, %11 : vector<8x2048xf32>
    %13 = math.rsqrt %12 : vector<8x2048xf32>
    %14 = arith.mulf %7, %13 : vector<8x2048xf32>
    %15 = vector.broadcast %6 : vector<8x1xf32> to vector<8x2048xf32>
    %16 = arith.addf %14, %15 : vector<8x2048xf32>
    %cst_9 = arith.constant dense<0xFF800000> : vector<2048xf32>
    %17 = vector.multi_reduction <maximumf>, %16, %cst_9 [0] : vector<8x2048xf32> to vector<2048xf32>
    %18 = vector.shape_cast %17 : vector<2048xf32> to vector<1x2048xf32>
    %19 = vector.broadcast %18 : vector<1x2048xf32> to vector<8x2048xf32>
    %20 = arith.subf %16, %19 : vector<8x2048xf32>
    %21 = math.exp %20 : vector<8x2048xf32>
    %cst_10 = arith.constant dense<0.000000e+00> : vector<2048xf32>
    %22 = vector.multi_reduction <add>, %21, %cst_10 [0] : vector<8x2048xf32> to vector<2048xf32>
    %23 = vector.shape_cast %22 : vector<2048xf32> to vector<1x2048xf32>
    %cst_11 = arith.constant 1.000000e+00 : f32
    %24 = vector.broadcast %cst_11 : f32 to vector<1x2048xf32>
    %25 = arith.divf %24, %23 : vector<1x2048xf32>
    %26 = vector.broadcast %25 : vector<1x2048xf32> to vector<8x2048xf32>
    %27 = arith.mulf %21, %26 : vector<8x2048xf32>
    %28 = arith.mulf %27, %13 : vector<8x2048xf32>
    %c2_i32 = arith.constant 2 : i32
    %29 = arith.muli %arg0, %c2_i32 : i32
    %30 = arith.addi %29, %arg1 : i32
    %c2048_i32 = arith.constant 2048 : i32
    %31 = arith.muli %30, %c2048_i32 : i32
    %c2048_i32_12 = arith.constant 2048 : i32
    %32 = arith.addi %31, %c2048_i32_12 : i32
    %c2500_i32 = arith.constant 2500 : i32
    %33 = arith.cmpi sle, %32, %c2500_i32 : i32
    %34 = arith.extui %33 : i1 to i32
    %c0_i32_13 = arith.constant 0 : i32
    %35 = arith.cmpi ne, %34, %c0_i32_13 : i32
    scf.if %35 {
      %c0_17 = arith.constant 0 : index
      %c0_18 = arith.constant 0 : index
      %42 = vector.load %arg7[%c0_17, %c0_18] : memref<8x128xf32, #tpu.memory_space<vmem>>, vector<8x128xf32>
      %cst_19 = arith.constant dense<0.000000e+00> : vector<8x128xf32>
      %43 = tpu.matmul %28, %4, %cst_19 {dimension_numbers = #tpu.dot_dimension_numbers<[1], [0], [0], [1], [0, 0, 1, 1], [], []>} : vector<8x2048xf32>, vector<2048x128xf32>, vector<8x128xf32> -> vector<8x128xf32>
      %44 = arith.addf %42, %43 : vector<8x128xf32>
      %c0_20 = arith.constant 0 : index
      %c0_21 = arith.constant 0 : index
      %45 = vector.load %arg7[%c0_20, %c0_21] : memref<8x128xf32, #tpu.memory_space<vmem>>, vector<8x128xf32>
      tpu.vector_store %arg7[%c0_20, %c0_21], %44 {strides = array<i32>} : memref<8x128xf32, #tpu.memory_space<vmem>>, vector<8x128xf32>,
      %c0_22 = arith.constant 0 : index
      %c0_23 = arith.constant 0 : index
      %46 = vector.load %arg8[%c0_22, %c0_23] : memref<8x1xf32, #tpu.memory_space<vmem>>, vector<8x1xf32>
      %cst_24 = arith.constant dense<0.000000e+00> : vector<8xf32>
      %47 = vector.multi_reduction <add>, %27, %cst_24 [1] : vector<8x2048xf32> to vector<8xf32>
      %48 = vector.shape_cast %47 : vector<8xf32> to vector<8x1xf32>
      %49 = arith.addf %46, %48 : vector<8x1xf32>
      %c0_25 = arith.constant 0 : index
      %c0_26 = arith.constant 0 : index
      %50 = vector.load %arg8[%c0_25, %c0_26] : memref<8x1xf32, #tpu.memory_space<vmem>>, vector<8x1xf32>
      tpu.vector_store %arg8[%c0_25, %c0_26], %49 {strides = array<i32>} : memref<8x1xf32, #tpu.memory_space<vmem>>, vector<8x1xf32>,
    } else {
    }
    %c2500_i32_14 = arith.constant 2500 : i32
    %36 = arith.cmpi sgt, %32, %c2500_i32_14 : i32
    %37 = arith.extui %36 : i1 to i32
    %c0_i32_15 = arith.constant 0 : i32
    %38 = arith.cmpi ne, %37, %c0_i32_15 : i32
    scf.if %38 {
      %42 = tpu.iota {dimensions = array<i32: 1>} : vector<1x2048xi32>
      %43 = vector.broadcast %31 : i32 to vector<1x2048xi32>
      %44 = arith.addi %43, %42 : vector<1x2048xi32>
      %c2500_i32_17 = arith.constant 2500 : i32
      %45 = vector.broadcast %c2500_i32_17 : i32 to vector<1x2048xi32>
      %46 = arith.cmpi slt, %44, %45 : vector<1x2048xi32>
      %cst_18 = arith.constant 0.000000e+00 : f32
      %47 = vector.shape_cast %46 : vector<1x2048xi1> to vector<1x2048xi1>
      %48 = vector.broadcast %47 : vector<1x2048xi1> to vector<8x2048xi1>
      %49 = vector.broadcast %cst_18 : f32 to vector<8x2048xf32>
      %50 = arith.select %48, %27, %49 : vector<8x2048xi1>, vector<8x2048xf32>
      %cst_19 = arith.constant 0.000000e+00 : f32
      %51 = vector.shape_cast %46 : vector<1x2048xi1> to vector<1x2048xi1>
      %52 = vector.broadcast %51 : vector<1x2048xi1> to vector<8x2048xi1>
      %53 = vector.broadcast %cst_19 : f32 to vector<8x2048xf32>
      %54 = arith.select %52, %28, %53 : vector<8x2048xi1>, vector<8x2048xf32>
      %c0_20 = arith.constant 0 : index
      %c0_21 = arith.constant 0 : index
      %55 = vector.load %arg7[%c0_20, %c0_21] : memref<8x128xf32, #tpu.memory_space<vmem>>, vector<8x128xf32>
      %cst_22 = arith.constant dense<0.000000e+00> : vector<8x128xf32>
      %56 = tpu.matmul %54, %4, %cst_22 {dimension_numbers = #tpu.dot_dimension_numbers<[1], [0], [0], [1], [0, 0, 1, 1], [], []>} : vector<8x2048xf32>, vector<2048x128xf32>, vector<8x128xf32> -> vector<8x128xf32>
      %57 = arith.addf %55, %56 : vector<8x128xf32>
      %c0_23 = arith.constant 0 : index
      %c0_24 = arith.constant 0 : index
      %58 = vector.load %arg7[%c0_23, %c0_24] : memref<8x128xf32, #tpu.memory_space<vmem>>, vector<8x128xf32>
      tpu.vector_store %arg7[%c0_23, %c0_24], %57 {strides = array<i32>} : memref<8x128xf32, #tpu.memory_space<vmem>>, vector<8x128xf32>,
      %c0_25 = arith.constant 0 : index
      %c0_26 = arith.constant 0 : index
      %59 = vector.load %arg8[%c0_25, %c0_26] : memref<8x1xf32, #tpu.memory_space<vmem>>, vector<8x1xf32>
      %cst_27 = arith.constant dense<0.000000e+00> : vector<8xf32>
      %60 = vector.multi_reduction <add>, %50, %cst_27 [1] : vector<8x2048xf32> to vector<8xf32>
      %61 = vector.shape_cast %60 : vector<8xf32> to vector<8x1xf32>
      %62 = arith.addf %59, %61 : vector<8x1xf32>
      %c0_28 = arith.constant 0 : index
      %c0_29 = arith.constant 0 : index
      %63 = vector.load %arg8[%c0_28, %c0_29] : memref<8x1xf32, #tpu.memory_space<vmem>>, vector<8x1xf32>
      tpu.vector_store %arg8[%c0_28, %c0_29], %62 {strides = array<i32>} : memref<8x1xf32, #tpu.memory_space<vmem>>, vector<8x1xf32>,
    } else {
    }
    %c1_i32 = arith.constant 1 : i32
    %39 = arith.cmpi eq, %arg1, %c1_i32 : i32
    %40 = arith.extui %39 : i1 to i32
    %c0_i32_16 = arith.constant 0 : i32
    %41 = arith.cmpi ne, %40, %c0_i32_16 : i32
    scf.if %41 {
      %c0_17 = arith.constant 0 : index
      %c0_18 = arith.constant 0 : index
      %42 = vector.load %arg7[%c0_17, %c0_18] : memref<8x128xf32, #tpu.memory_space<vmem>>, vector<8x128xf32>
      %c0_19 = arith.constant 0 : index
      %c0_20 = arith.constant 0 : index
      %c0_21 = arith.constant 0 : index
      %43 = vector.load %arg5[%c0_19, %c0_20, %c0_21] : memref<1x8x128xf32, #tpu.memory_space<vmem>>, vector<1x8x128xf32>
      %44 = vector.shape_cast %43 : vector<1x8x128xf32> to vector<8x128xf32>
      %45 = vector.shape_cast %42 : vector<8x128xf32> to vector<1x8x128xf32>
      tpu.vector_store %arg5[%c0_19, %c0_20, %c0_21], %45 {strides = array<i32>} : memref<1x8x128xf32, #tpu.memory_space<vmem>>, vector<1x8x128xf32>,
      %c0_22 = arith.constant 0 : index
      %c0_23 = arith.constant 0 : index
      %46 = vector.load %arg8[%c0_22, %c0_23] : memref<8x1xf32, #tpu.memory_space<vmem>>, vector<8x1xf32>
      %c0_24 = arith.constant 0 : index
      %c0_25 = arith.constant 0 : index
      %c0_26 = arith.constant 0 : index
      %47 = vector.load %arg6[%c0_24, %c0_25, %c0_26] : memref<1x8x1xf32, #tpu.memory_space<vmem>>, vector<1x8x1xf32>
      %48 = vector.shape_cast %47 : vector<1x8x1xf32> to vector<8x1xf32>
      %49 = vector.shape_cast %46 : vector<8x1xf32> to vector<1x8x1xf32>
      tpu.vector_store %arg6[%c0_24, %c0_25, %c0_26], %49 {strides = array<i32>} : memref<1x8x1xf32, #tpu.memory_space<vmem>>, vector<1x8x1xf32>,
    } else {
    }
    return
  }
  func.func @transform_0(%arg0: i32, %arg1: i32) -> (i32, i32) {
    %c2_i32 = arith.constant 2 : i32
    %0 = arith.muli %arg0, %c2_i32 : i32
    %1 = arith.addi %0, %arg1 : i32
    %c0_i32 = arith.constant 0 : i32
    %c0_i32_0 = arith.constant 0 : i32
    return %1, %c0_i32 : i32, i32
  }
  func.func @transform_1(%arg0: i32, %arg1: i32) -> (i32, i32) {
    %c0_i32 = arith.constant 0 : i32
    %c0_i32_0 = arith.constant 0 : i32
    %c0_i32_1 = arith.constant 0 : i32
    return %c0_i32, %c0_i32_0 : i32, i32
  }
  func.func @transform_2(%arg0: i32, %arg1: i32) -> (i32, i32) {
    %c0_i32 = arith.constant 0 : i32
    %c0_i32_0 = arith.constant 0 : i32
    %c0_i32_1 = arith.constant 0 : i32
    return %c0_i32, %c0_i32_0 : i32, i32
  }
  func.func @transform_3(%arg0: i32, %arg1: i32) -> (i32, i32, i32) {
    %c0_i32 = arith.constant 0 : i32
    %c0_i32_0 = arith.constant 0 : i32
    %c0_i32_1 = arith.constant 0 : i32
    return %arg0, %c0_i32, %c0_i32_0 : i32, i32, i32
  }
  func.func @transform_4(%arg0: i32, %arg1: i32) -> (i32, i32, i32) {
    %c0_i32 = arith.constant 0 : i32
    %c0_i32_0 = arith.constant 0 : i32
    %c0_i32_1 = arith.constant 0 : i32
    return %arg0, %c0_i32, %c0_i32_0 : i32, i32, i32
  }
}

</mosaic_0001>

<llo_original>
// kernel: tpu_custom_call.1
$region0: #{tpu_custom_call.1}
  #allocation0 [shape = 'u32[]', space=smem, size = 0x4, offset = 0x4, fixed_abs, tag = 'smem constant byte address 0x4 - core index']
  #allocation1 [shape = 'u32[72,128]{1,0:T(1,128)}', space=vmem, size = 0x9000, scoped, tag = 'internal scratch']
  #allocation2 [shape = 'f32[8,128]{1,0:T(8,128)}', space=vmem, size = 0x1000, scoped, tag = 'scratch operand']
  #allocation3 [shape = 'f32[8,1]{1,0:T(8,128)}', space=vmem, size = 0x1000, scoped, tag = 'scratch operand']
  %s0 = inlined_call_operand.hbm [shape: bf16[4096,128], index: 0, kind: input, shape index: {}]
  %s1 = inlined_call_operand.vmem [shape: f32[8,128], index: 1, kind: input, shape index: {}]
  %s2 = inlined_call_operand.vmem [shape: f32[8,1], index: 2, kind: input, shape index: {}]
  %s3 = inlined_call_operand.hbm [shape: f32[1,8,128], index: 3, kind: output, shape index: {0}]
  %s4 = inlined_call_operand.vmem [shape: f32[1,8,1], index: 4, kind: output, shape index: {1}]
  %5 = xla_tuple %s3, %s4
  %s6 = sld [smem:[#allocation0]]
  $region73: #{tpu_custom_call.1} parent=0
    _
  %s8 = ssub.s32 1, %s6
  %s9 = scalar_select 0, %s8, %s6
  $region1: #{tpu_custom_call.1} parent=0
    #allocation4 [shape = 'u8[1048576]{0}', space=vmem, size = 0x100000, scoped, tag = 'input window, operand 0']
    #allocation5 [shape = 's32[2]{0}', space=sflag, size = 0x8, scoped, tag = 'scoped memory for tpu_custom_call.1']
    #allocation6 [shape = 's32[2]{0}', space=sflag, size = 0x8, scoped, tag = 'scoped memory for tpu_custom_call.1']
    #allocation7 [shape = 'u8[4096]{0}', space=vmem, size = 0x1000, scoped, tag = 'output window, operand 0, single buffered']
    %10 = vsyncpa [#allocation5], 0
    %s11 = scalar_lea.sflag [#allocation5], 1
    %12 = vsyncpa %s11, 0
    %13 = vsyncpa [#allocation6], 0
    loop: start=0, step=1, limit=4
    $region2: #{tpu_custom_call.1} parent=1 // loop_pre_header
      _
    $region3: #{tpu_custom_call.1} parent=1 // loop_header
      %s15 = sphi 0, %s19
      %p16 = scmp.ge.s32.totalorder %s15, 4
      %s22 = sphi 0, %s34
      %s23 = sphi 0, %s30
      %s24 = sphi 0, %s22
      %s25 = sphi 0, %s23
      %s26 = sphi 0, %s24
      %s27 = sphi 0, %s25
      %s41 = sphi 0, %s43
      %s44 = sphi 0, %s41
      %s45 = sphi 0, %s44
      %s61 = sphi 0, %s45
      %s65 = sphi 0, %s65
      %s67 = sphi 0, %s65
      %s68 = sphi 0, %s67
      %s82 = sphi 0, %s68
      %s86 = sphi 0, %s86
      %s88 = sphi 0, %s86
      %s89 = sphi 0, %s88
      %s103 = sphi 0, %s89
      %s109 = sphi 0, %s111
      %s112 = sphi 0, %s109
      %s113 = sphi 0, %s112
      %s129 = sphi 0, %s113
      %s135 = sphi 0, %s137
      %s138 = sphi 0, %s135
      %s139 = sphi 0, %s138
      %s155 = sphi 0, %s139
    $region4: #{tpu_custom_call.1} parent=1 // loop_header_branch
      %18 = sbr.rel (%p16) target = $region8
    $region5: #{tpu_custom_call.1} parent=1 // loop_body
      %s20 = ssub.s32 %s15, 1
      %s21 = ssub.s32 %s15, 2
      %s28 = sadd.s32 1, %s23
      %p29 = scmp.ge.s32.totalorder %s28, 2
      %s30 = scalar_select %p29, 0, %s28
      %s31 = sadd.s32 1, %s22
      %s32 = scalar_select %p29, %s31, %s22
      %p33 = scmp.ge.s32.totalorder %s32, 1
      %s34 = scalar_select %p33, 0, %s32
      %s35 = smul.u32 %s22, 2
      %s36 = sadd.s32 %s35, %s23
      %s37 = smul.u32 %s34, 2
      %s38 = sadd.s32 %s37, %s30
      %s39 = ssub.s32 %s36, %s38
      %p40 = scmp.eq.s32.totalorder %s39, 0
      %s42 = sadd.s32 %s41, 1
      %s43 = scalar_select %p40, %s41, %s42
      %p46 = pneg %p40
      %p47 = scmp.eq.s32.totalorder %s15, 1
      %p48 = por %p46, %p47
      %p49 = scmp.ne.s32.totalorder %s41, %s44
      %p50 = scmp.eq.s32.totalorder %s15, 0
      %p51 = por %p49, %p50
      %p52 = scmp.ne.s32.totalorder %s41, %s44
      %p53 = scmp.eq.s32.totalorder %s20, 1
      %p54 = por %p52, %p53
      %p55 = scmp.ne.s32.totalorder %s44, %s45
      %p56 = scmp.eq.s32.totalorder %s20, 0
      %p57 = por %p55, %p56
      %p58 = scmp.ne.s32.totalorder %s44, %s45
      %p59 = scmp.eq.s32.totalorder %s21, 1
      %p60 = por %p58, %p59
      %p62 = scmp.ne.s32.totalorder %s45, %s61
      %p63 = scmp.eq.s32.totalorder %s21, 0
      %p64 = por %p62, %p63
      %s66 = sadd.s32 %s65, 1
      %p69 = scmp.eq.s32.totalorder %s15, 1
      %p70 = scmp.ne.s32.totalorder %s65, %s67
      %p71 = scmp.eq.s32.totalorder %s15, 0
      %p72 = por %p70, %p71
      %p73 = scmp.ne.s32.totalorder %s65, %s67
      %p74 = scmp.eq.s32.totalorder %s20, 1
      %p75 = por %p73, %p74
      %p76 = scmp.ne.s32.totalorder %s67, %s68
      %p77 = scmp.eq.s32.totalorder %s20, 0
      %p78 = por %p76, %p77
      %p79 = scmp.ne.s32.totalorder %s67, %s68
      %p80 = scmp.eq.s32.totalorder %s21, 1
      %p81 = por %p79, %p80
      %p83 = scmp.ne.s32.totalorder %s68, %s82
      %p84 = scmp.eq.s32.totalorder %s21, 0
      %p85 = por %p83, %p84
      %s87 = sadd.s32 %s86, 1
      %p90 = scmp.eq.s32.totalorder %s15, 1
      %p91 = scmp.ne.s32.totalorder %s86, %s88
      %p92 = scmp.eq.s32.totalorder %s15, 0
      %p93 = por %p91, %p92
      %p94 = scmp.ne.s32.totalorder %s86, %s88
      %p95 = scmp.eq.s32.totalorder %s20, 1
      %p96 = por %p94, %p95
      %p97 = scmp.ne.s32.totalorder %s88, %s89
      %p98 = scmp.eq.s32.totalorder %s20, 0
      %p99 = por %p97, %p98
      %p100 = scmp.ne.s32.totalorder %s88, %s89
      %p101 = scmp.eq.s32.totalorder %s21, 1
      %p102 = por %p100, %p101
      %p104 = scmp.ne.s32.totalorder %s89, %s103
      %p105 = scmp.eq.s32.totalorder %s21, 0
      %p106 = por %p104, %p105
      %s107 = ssub.s32 %s22, %s34
      %p108 = scmp.eq.s32.totalorder %s107, 0
      %s110 = sadd.s32 %s109, 1
      %s111 = scalar_select %p108, %s109, %s110
      %p114 = pneg %p108
      %p115 = scmp.eq.s32.totalorder %s15, 1
      %p116 = por %p114, %p115
      %p117 = scmp.ne.s32.totalorder %s109, %s112
      %p118 = scmp.eq.s32.totalorder %s15, 0
      %p119 = por %p117, %p118
      %p120 = scmp.ne.s32.totalorder %s109, %s112
      %p121 = scmp.eq.s32.totalorder %s20, 1
      %p122 = por %p120, %p121
      %p123 = scmp.ne.s32.totalorder %s112, %s113
      %p124 = scmp.eq.s32.totalorder %s20, 0
      %p125 = por %p123, %p124
      %p126 = scmp.ne.s32.totalorder %s112, %s113
      %p127 = scmp.eq.s32.totalorder %s21, 1
      %p128 = por %p126, %p127
      %p130 = scmp.ne.s32.totalorder %s113, %s129
      %p131 = scmp.eq.s32.totalorder %s21, 0
      %p132 = por %p130, %p131
      %s133 = ssub.s32 %s22, %s34
      %p134 = scmp.eq.s32.totalorder %s133, 0
      %s136 = sadd.s32 %s135, 1
      %s137 = scalar_select %p134, %s135, %s136
      %p140 = pneg %p134
      %p141 = scmp.eq.s32.totalorder %s15, 1
      %p142 = por %p140, %p141
      %p143 = scmp.ne.s32.totalorder %s135, %s138
      %p144 = scmp.eq.s32.totalorder %s15, 0
      %p145 = por %p143, %p144
      %p146 = scmp.ne.s32.totalorder %s135, %s138
      %p147 = scmp.eq.s32.totalorder %s20, 1
      %p148 = por %p146, %p147
      %p149 = scmp.ne.s32.totalorder %s138, %s139
      %p150 = scmp.eq.s32.totalorder %s20, 0
      %p151 = por %p149, %p150
      %p152 = scmp.ne.s32.totalorder %s138, %s139
      %p153 = scmp.eq.s32.totalorder %s21, 1
      %p154 = por %p152, %p153
      %p156 = scmp.ne.s32.totalorder %s139, %s155
      %p157 = scmp.eq.s32.totalorder %s21, 0
      %p158 = por %p156, %p157
      %p159 = scmp.le.s32.totalorder 1, %s15
      %p160 = scmp.lt.s32.totalorder %s15, 3
      %p161 = pnand %p159, %p160
      %p162 = pneg %p161
      // Predicated region
      $region9: #{tpu_custom_call.1} parent=5 // pred_check
        _
      $region10: #{tpu_custom_call.1} parent=5 // pred_check_branch
        %164 = sbr.rel (%p161) target = $region12
      $region11: #{tpu_custom_call.1} parent=5 // pred_region
        %s165 = ssub.s32 %s15, 1
        // Predicated region
        $region13: #{tpu_custom_call.1} parent=11 // pred_check
          %p166 = pneg %p78
        $region14: #{tpu_custom_call.1} parent=11 // pred_check_branch
          %168 = sbr.rel (%p166) target = $region16
        $region15: #{tpu_custom_call.1} parent=11 // pred_region
          _
        $region16: #{tpu_custom_call.1} parent=11 // pred_fallthru
          _
        // Predicated region
        $region17: #{tpu_custom_call.1} parent=11 // pred_check
          %p169 = pneg %p99
        $region18: #{tpu_custom_call.1} parent=11 // pred_check_branch
          %171 = sbr.rel (%p169) target = $region20
        $region19: #{tpu_custom_call.1} parent=11 // pred_region
          _
        $region20: #{tpu_custom_call.1} parent=11 // pred_fallthru
          _
      $region12: #{tpu_custom_call.1} parent=5 // pred_fallthru
        _
      %p172 = scmp.lt.s32.totalorder %s15, 2
      // Predicated region
      $region21: #{tpu_custom_call.1} parent=5 // pred_check
        %p173 = pneg %p172
      $region22: #{tpu_custom_call.1} parent=5 // pred_check_branch
        %175 = sbr.rel (%p173) target = $region24
      $region23: #{tpu_custom_call.1} parent=5 // pred_region
        // Predicated region
        $region25: #{tpu_custom_call.1} parent=23 // pred_check
          %p176 = pneg %p51
        $region26: #{tpu_custom_call.1} parent=23 // pred_check_branch
          %178 = sbr.rel (%p176) target = $region28
        $region27: #{tpu_custom_call.1} parent=23 // pred_region
          %s179 = sand.u32 %s41, 1
          %s180 = scalar_lea.sflag [#allocation5], %s179
          %s181 = sand.u32 %s41, 1
          %s182 = smul.addr %s181, 1024
          %s183 = scalar_lea.vmem [#allocation4], %s182
          %s184 = smul.u32 %s22, 2
          %s185 = sadd.s32 %s184, %s23
          %s186 = smul.u32 256, %s185
          %188 = vsyncadd %s180, 0
          %s189 = smul.addr %s186, 4
          %s190 = scalar_lea.hbm %s0, %s189
          %s191 = sshll.u32 %s190, 4
          %s192 = int_to_ptr.hbm [resolvable:$true] %s191
          %s193 = sshll.u32 %s183, 4
          %s194 = int_to_ptr.vmem [resolvable:$true] %s193
          %199 = dma.hbm_to_vmem [thread:$0]  %s192, 16384, %s194, %s180, 64, 64, 4
        $region28: #{tpu_custom_call.1} parent=23 // pred_fallthru
          _
      $region24: #{tpu_custom_call.1} parent=5 // pred_fallthru
        _
      %p200 = scmp.le.s32.totalorder 1, %s15
      %p201 = scmp.lt.s32.totalorder %s15, 3
      %p202 = pnand %p200, %p201
      %p203 = pneg %p202
      // Predicated region
      $region29: #{tpu_custom_call.1} parent=5 // pred_check
        _
      $region30: #{tpu_custom_call.1} parent=5 // pred_check_branch
        %205 = sbr.rel (%p202) target = $region32
      $region31: #{tpu_custom_call.1} parent=5 // pred_region
        %s206 = ssub.s32 %s15, 1
        %s207 = sand.u32 %s44, 1
        %s208 = scalar_lea.sflag [#allocation5], %s207
        %s209 = sand.u32 %s44, 1
        %s210 = smul.addr %s209, 1024
        %s211 = scalar_lea.vmem [#allocation4], %s210
        // Predicated region
        $region33: #{tpu_custom_call.1} parent=31 // pred_check
          %p212 = pneg %p57
        $region34: #{tpu_custom_call.1} parent=31 // pred_check_branch
          %214 = sbr.rel (%p212) target = $region36
        $region35: #{tpu_custom_call.1} parent=31 // pred_region
          %216 = dma.done %s208, 16384
        $region36: #{tpu_custom_call.1} parent=31 // pred_fallthru
          _
        %s217 = sand.u32 %s44, 1
        %s218 = scalar_lea.sflag [#allocation5], %s217
        %s219 = sand.u32 %s44, 1
        %s220 = smul.addr %s219, 1024
        %s221 = scalar_lea.vmem [#allocation4], %s220
        %p222 = pneg %p57
        %p223 = pneg %p54
        %p224 = pneg %p78
        %p225 = pneg %p75
        %p226 = pneg %p99
        %p227 = pneg %p96
        %p228 = pneg %p125
        %p229 = pneg %p122
        %p230 = pneg %p151
        %p231 = pneg %p148
        %p232 = scmp.lt.s32.totalorder %s24, 0
        %s233 = scalar_select %p232, %s24, 0
        %s234 = smul.addr %s233, 8
        %s235 = scalar_lea.vmem %s4, %s234
        %s236 = smul.u32 %s24, 2
        %s237 = sadd.s32 %s236, %s25
        %s238 = smul.u32 256, %s237
        %p239 = scmp.lt.s32.totalorder %s24, 0
        %s240 = scalar_select %p239, %s24, 0
        %s241 = smul.addr %s240, 8
        %s242 = scalar_lea.vmem %s4, %s241
        %p243 = scmp.eq.s32.totalorder %s25, 0
        // Predicated region
        $region37: #{tpu_custom_call.1} parent=31 // pred_check
          %p244 = pneg %p243
        $region38: #{tpu_custom_call.1} parent=31 // pred_check_branch
          %246 = sbr.rel (%p244) target = $region40
        $region39: #{tpu_custom_call.1} parent=31 // pred_region
          %247 = vst [vmem:[#allocation2] sm:$0xff] 0.0
          %vm248 = vcmask 7168
          %249 = vst.msk [vmem:[#allocation3] sm:$0xff] %vm248, 0.0
        $region40: #{tpu_custom_call.1} parent=31 // pred_fallthru
          _
        %v250 = vld [vmem:[%s211] sm:$0xf]
        %v251 = vld [vmem:[%s211 + $0x4] sm:$0xf]
        %v252 = vld [vmem:[%s211 + $0x8] sm:$0xf]
        %v253 = vld [vmem:[%s211 + $0xc] sm:$0xf]
        %v254 = vld [vmem:[%s211 + $0x10] sm:$0xf]
        %v255 = vld [vmem:[%s211 + $0x14] sm:$0xf]
        %v256 = vld [vmem:[%s211 + $0x18] sm:$0xf]
        %v257 = vld [vmem:[%s211 + $0x1c] sm:$0xf]
        %v258 = vld [vmem:[%s211 + $0x20] sm:$0xf]
        %v259 = vld [vmem:[%s211 + $0x24] sm:$0xf]
        %v260 = vld [vmem:[%s211 + $0x28] sm:$0xf]
        %v261 = vld [vmem:[%s211 + $0x2c] sm:$0xf]
        %v262 = vld [vmem:[%s211 + $0x30] sm:$0xf]
        %v263 = vld [vmem:[%s211 + $0x34] sm:$0xf]
        %v264 = vld [vmem:[%s211 + $0x38] sm:$0xf]
        %v265 = vld [vmem:[%s211 + $0x3c] sm:$0xf]
        %v266 = vld [vmem:[%s211 + $0x40] sm:$0xf]
        %v267 = vld [vmem:[%s211 + $0x44] sm:$0xf]
        %v268 = vld [vmem:[%s211 + $0x48] sm:$0xf]
        %v269 = vld [vmem:[%s211 + $0x4c] sm:$0xf]
        %v270 = vld [vmem:[%s211 + $0x50] sm:$0xf]
        %v271 = vld [vmem:[%s211 + $0x54] sm:$0xf]
        %v272 = vld [vmem:[%s211 + $0x58] sm:$0xf]
        %v273 = vld [vmem:[%s211 + $0x5c] sm:$0xf]
        %v274 = vld [vmem:[%s211 + $0x60] sm:$0xf]
        %v275 = vld [vmem:[%s211 + $0x64] sm:$0xf]
        %v276 = vld [vmem:[%s211 + $0x68] sm:$0xf]
        %v277 = vld [vmem:[%s211 + $0x6c] sm:$0xf]
        %v278 = vld [vmem:[%s211 + $0x70] sm:$0xf]
        %v279 = vld [vmem:[%s211 + $0x74] sm:$0xf]
        %v280 = vld [vmem:[%s211 + $0x78] sm:$0xf]
        %v281 = vld [vmem:[%s211 + $0x7c] sm:$0xf]
        %v282 = vld [vmem:[%s211 + $0x80] sm:$0xf]
        %v283 = vld [vmem:[%s211 + $0x84] sm:$0xf]
        %v284 = vld [vmem:[%s211 + $0x88] sm:$0xf]
        %v285 = vld [vmem:[%s211 + $0x8c] sm:$0xf]
        %v286 = vld [vmem:[%s211 + $0x90] sm:$0xf]
        %v287 = vld [vmem:[%s211 + $0x94] sm:$0xf]
        %v288 = vld [vmem:[%s211 + $0x98] sm:$0xf]
        %v289 = vld [vmem:[%s211 + $0x9c] sm:$0xf]
        %v290 = vld [vmem:[%s211 + $0xa0] sm:$0xf]
        %v291 = vld [vmem:[%s211 + $0xa4] sm:$0xf]
        %v292 = vld [vmem:[%s211 + $0xa8] sm:$0xf]
        %v293 = vld [vmem:[%s211 + $0xac] sm:$0xf]
        %v294 = vld [vmem:[%s211 + $0xb0] sm:$0xf]
        %v295 = vld [vmem:[%s211 + $0xb4] sm:$0xf]
        %v296 = vld [vmem:[%s211 + $0xb8] sm:$0xf]
        %v297 = vld [vmem:[%s211 + $0xbc] sm:$0xf]
        %v298 = vld [vmem:[%s211 + $0xc0] sm:$0xf]
        %v299 = vld [vmem:[%s211 + $0xc4] sm:$0xf]
        %v300 = vld [vmem:[%s211 + $0xc8] sm:$0xf]
        %v301 = vld [vmem:[%s211 + $0xcc] sm:$0xf]
        %v302 = vld [vmem:[%s211 + $0xd0] sm:$0xf]
        %v303 = vld [vmem:[%s211 + $0xd4] sm:$0xf]
        %v304 = vld [vmem:[%s211 + $0xd8] sm:$0xf]
        %v305 = vld [vmem:[%s211 + $0xdc] sm:$0xf]
        %v306 = vld [vmem:[%s211 + $0xe0] sm:$0xf]
        %v307 = vld [vmem:[%s211 + $0xe4] sm:$0xf]
        %v308 = vld [vmem:[%s211 + $0xe8] sm:$0xf]
        %v309 = vld [vmem:[%s211 + $0xec] sm:$0xf]
        %v310 = vld [vmem:[%s211 + $0xf0] sm:$0xf]
        %v311 = vld [vmem:[%s211 + $0xf4] sm:$0xf]
        %v312 = vld [vmem:[%s211 + $0xf8] sm:$0xf]
        %v313 = vld [vmem:[%s211 + $0xfc] sm:$0xf]
        %v314 = vld [vmem:[%s211 + $0x100] sm:$0xf]
        %v315 = vld [vmem:[%s211 + $0x104] sm:$0xf]
        %v316 = vld [vmem:[%s211 + $0x108] sm:$0xf]
        %v317 = vld [vmem:[%s211 + $0x10c] sm:$0xf]
        %v318 = vld [vmem:[%s211 + $0x110] sm:$0xf]
        %v319 = vld [vmem:[%s211 + $0x114] sm:$0xf]
        %v320 = vld [vmem:[%s211 + $0x118] sm:$0xf]
        %v321 = vld [vmem:[%s211 + $0x11c] sm:$0xf]
        %v322 = vld [vmem:[%s211 + $0x120] sm:$0xf]
        %v323 = vld [vmem:[%s211 + $0x124] sm:$0xf]
        %v324 = vld [vmem:[%s211 + $0x128] sm:$0xf]
        %v325 = vld [vmem:[%s211 + $0x12c] sm:$0xf]
        %v326 = vld [vmem:[%s211 + $0x130] sm:$0xf]
        %v327 = vld [vmem:[%s211 + $0x134] sm:$0xf]
        %v328 = vld [vmem:[%s211 + $0x138] sm:$0xf]
        %v329 = vld [vmem:[%s211 + $0x13c] sm:$0xf]
        %v330 = vld [vmem:[%s211 + $0x140] sm:$0xf]
        %v331 = vld [vmem:[%s211 + $0x144] sm:$0xf]
        %v332 = vld [vmem:[%s211 + $0x148] sm:$0xf]
        %v333 = vld [vmem:[%s211 + $0x14c] sm:$0xf]
        %v334 = vld [vmem:[%s211 + $0x150] sm:$0xf]
        %v335 = vld [vmem:[%s211 + $0x154] sm:$0xf]
        %v336 = vld [vmem:[%s211 + $0x158] sm:$0xf]
        %v337 = vld [vmem:[%s211 + $0x15c] sm:$0xf]
        %v338 = vld [vmem:[%s211 + $0x160] sm:$0xf]
        %v339 = vld [vmem:[%s211 + $0x164] sm:$0xf]
        %v340 = vld [vmem:[%s211 + $0x168] sm:$0xf]
        %v341 = vld [vmem:[%s211 + $0x16c] sm:$0xf]
        %v342 = vld [vmem:[%s211 + $0x170] sm:$0xf]
        %v343 = vld [vmem:[%s211 + $0x174] sm:$0xf]
        %v344 = vld [vmem:[%s211 + $0x178] sm:$0xf]
        %v345 = vld [vmem:[%s211 + $0x17c] sm:$0xf]
        %v346 = vld [vmem:[%s211 + $0x180] sm:$0xf]
        %v347 = vld [vmem:[%s211 + $0x184] sm:$0xf]
        %v348 = vld [vmem:[%s211 + $0x188] sm:$0xf]
        %v349 = vld [vmem:[%s211 + $0x18c] sm:$0xf]
        %v350 = vld [vmem:[%s211 + $0x190] sm:$0xf]
        %v351 = vld [vmem:[%s211 + $0x194] sm:$0xf]
        %v352 = vld [vmem:[%s211 + $0x198] sm:$0xf]
        %v353 = vld [vmem:[%s211 + $0x19c] sm:$0xf]
        %v354 = vld [vmem:[%s211 + $0x1a0] sm:$0xf]
        %v355 = vld [vmem:[%s211 + $0x1a4] sm:$0xf]
        %v356 = vld [vmem:[%s211 + $0x1a8] sm:$0xf]
        %v357 = vld [vmem:[%s211 + $0x1ac] sm:$0xf]
        %v358 = vld [vmem:[%s211 + $0x1b0] sm:$0xf]
        %v359 = vld [vmem:[%s211 + $0x1b4] sm:$0xf]
        %v360 = vld [vmem:[%s211 + $0x1b8] sm:$0xf]
        %v361 = vld [vmem:[%s211 + $0x1bc] sm:$0xf]
        %v362 = vld [vmem:[%s211 + $0x1c0] sm:$0xf]
        %v363 = vld [vmem:[%s211 + $0x1c4] sm:$0xf]
        %v364 = vld [vmem:[%s211 + $0x1c8] sm:$0xf]
        %v365 = vld [vmem:[%s211 + $0x1cc] sm:$0xf]
        %v366 = vld [vmem:[%s211 + $0x1d0] sm:$0xf]
        %v367 = vld [vmem:[%s211 + $0x1d4] sm:$0xf]
        %v368 = vld [vmem:[%s211 + $0x1d8] sm:$0xf]
        %v369 = vld [vmem:[%s211 + $0x1dc] sm:$0xf]
        %v370 = vld [vmem:[%s211 + $0x1e0] sm:$0xf]
        %v371 = vld [vmem:[%s211 + $0x1e4] sm:$0xf]
        %v372 = vld [vmem:[%s211 + $0x1e8] sm:$0xf]
        %v373 = vld [vmem:[%s211 + $0x1ec] sm:$0xf]
        %v374 = vld [vmem:[%s211 + $0x1f0] sm:$0xf]
        %v375 = vld [vmem:[%s211 + $0x1f4] sm:$0xf]
        %v376 = vld [vmem:[%s211 + $0x1f8] sm:$0xf]
        %v377 = vld [vmem:[%s211 + $0x1fc] sm:$0xf]
        %v378 = vld [vmem:[%s211 + $0x200] sm:$0xf]
        %v379 = vld [vmem:[%s211 + $0x204] sm:$0xf]
        %v380 = vld [vmem:[%s211 + $0x208] sm:$0xf]
        %v381 = vld [vmem:[%s211 + $0x20c] sm:$0xf]
        %v382 = vld [vmem:[%s211 + $0x210] sm:$0xf]
        %v383 = vld [vmem:[%s211 + $0x214] sm:$0xf]
        %v384 = vld [vmem:[%s211 + $0x218] sm:$0xf]
        %v385 = vld [vmem:[%s211 + $0x21c] sm:$0xf]
        %v386 = vld [vmem:[%s211 + $0x220] sm:$0xf]
        %v387 = vld [vmem:[%s211 + $0x224] sm:$0xf]
        %v388 = vld [vmem:[%s211 + $0x228] sm:$0xf]
        %v389 = vld [vmem:[%s211 + $0x22c] sm:$0xf]
        %v390 = vld [vmem:[%s211 + $0x230] sm:$0xf]
        %v391 = vld [vmem:[%s211 + $0x234] sm:$0xf]
        %v392 = vld [vmem:[%s211 + $0x238] sm:$0xf]
        %v393 = vld [vmem:[%s211 + $0x23c] sm:$0xf]
        %v394 = vld [vmem:[%s211 + $0x240] sm:$0xf]
        %v395 = vld [vmem:[%s211 + $0x244] sm:$0xf]
        %v396 = vld [vmem:[%s211 + $0x248] sm:$0xf]
        %v397 = vld [vmem:[%s211 + $0x24c] sm:$0xf]
        %v398 = vld [vmem:[%s211 + $0x250] sm:$0xf]
        %v399 = vld [vmem:[%s211 + $0x254] sm:$0xf]
        %v400 = vld [vmem:[%s211 + $0x258] sm:$0xf]
        %v401 = vld [vmem:[%s211 + $0x25c] sm:$0xf]
        %v402 = vld [vmem:[%s211 + $0x260] sm:$0xf]
        %v403 = vld [vmem:[%s211 + $0x264] sm:$0xf]
        %v404 = vld [vmem:[%s211 + $0x268] sm:$0xf]
        %v405 = vld [vmem:[%s211 + $0x26c] sm:$0xf]
        %v406 = vld [vmem:[%s211 + $0x270] sm:$0xf]
        %v407 = vld [vmem:[%s211 + $0x274] sm:$0xf]
        %v408 = vld [vmem:[%s211 + $0x278] sm:$0xf]
        %v409 = vld [vmem:[%s211 + $0x27c] sm:$0xf]
        %v410 = vld [vmem:[%s211 + $0x280] sm:$0xf]
        %v411 = vld [vmem:[%s211 + $0x284] sm:$0xf]
        %v412 = vld [vmem:[%s211 + $0x288] sm:$0xf]
        %v413 = vld [vmem:[%s211 + $0x28c] sm:$0xf]
        %v414 = vld [vmem:[%s211 + $0x290] sm:$0xf]
        %v415 = vld [vmem:[%s211 + $0x294] sm:$0xf]
        %v416 = vld [vmem:[%s211 + $0x298] sm:$0xf]
        %v417 = vld [vmem:[%s211 + $0x29c] sm:$0xf]
        %v418 = vld [vmem:[%s211 + $0x2a0] sm:$0xf]
        %v419 = vld [vmem:[%s211 + $0x2a4] sm:$0xf]
        %v420 = vld [vmem:[%s211 + $0x2a8] sm:$0xf]
        %v421 = vld [vmem:[%s211 + $0x2ac] sm:$0xf]
        %v422 = vld [vmem:[%s211 + $0x2b0] sm:$0xf]
        %v423 = vld [vmem:[%s211 + $0x2b4] sm:$0xf]
        %v424 = vld [vmem:[%s211 + $0x2b8] sm:$0xf]
        %v425 = vld [vmem:[%s211 + $0x2bc] sm:$0xf]
        %v426 = vld [vmem:[%s211 + $0x2c0] sm:$0xf]
        %v427 = vld [vmem:[%s211 + $0x2c4] sm:$0xf]
        %v428 = vld [vmem:[%s211 + $0x2c8] sm:$0xf]
        %v429 = vld [vmem:[%s211 + $0x2cc] sm:$0xf]
        %v430 = vld [vmem:[%s211 + $0x2d0] sm:$0xf]
        %v431 = vld [vmem:[%s211 + $0x2d4] sm:$0xf]
        %v432 = vld [vmem:[%s211 + $0x2d8] sm:$0xf]
        %v433 = vld [vmem:[%s211 + $0x2dc] sm:$0xf]
        %v434 = vld [vmem:[%s211 + $0x2e0] sm:$0xf]
        %v435 = vld [vmem:[%s211 + $0x2e4] sm:$0xf]
        %v436 = vld [vmem:[%s211 + $0x2e8] sm:$0xf]
        %v437 = vld [vmem:[%s211 + $0x2ec] sm:$0xf]
        %v438 = vld [vmem:[%s211 + $0x2f0] sm:$0xf]
        %v439 = vld [vmem:[%s211 + $0x2f4] sm:$0xf]
        %v440 = vld [vmem:[%s211 + $0x2f8] sm:$0xf]
        %v441 = vld [vmem:[%s211 + $0x2fc] sm:$0xf]
        %v442 = vld [vmem:[%s211 + $0x300] sm:$0xf]
        %v443 = vld [vmem:[%s211 + $0x304] sm:$0xf]
        %v444 = vld [vmem:[%s211 + $0x308] sm:$0xf]
        %v445 = vld [vmem:[%s211 + $0x30c] sm:$0xf]
        %v446 = vld [vmem:[%s211 + $0x310] sm:$0xf]
        %v447 = vld [vmem:[%s211 + $0x314] sm:$0xf]
        %v448 = vld [vmem:[%s211 + $0x318] sm:$0xf]
        %v449 = vld [vmem:[%s211 + $0x31c] sm:$0xf]
        %v450 = vld [vmem:[%s211 + $0x320] sm:$0xf]
        %v451 = vld [vmem:[%s211 + $0x324] sm:$0xf]
        %v452 = vld [vmem:[%s211 + $0x328] sm:$0xf]
        %v453 = vld [vmem:[%s211 + $0x32c] sm:$0xf]
        %v454 = vld [vmem:[%s211 + $0x330] sm:$0xf]
        %v455 = vld [vmem:[%s211 + $0x334] sm:$0xf]
        %v456 = vld [vmem:[%s211 + $0x338] sm:$0xf]
        %v457 = vld [vmem:[%s211 + $0x33c] sm:$0xf]
        %v458 = vld [vmem:[%s211 + $0x340] sm:$0xf]
        %v459 = vld [vmem:[%s211 + $0x344] sm:$0xf]
        %v460 = vld [vmem:[%s211 + $0x348] sm:$0xf]
        %v461 = vld [vmem:[%s211 + $0x34c] sm:$0xf]
        %v462 = vld [vmem:[%s211 + $0x350] sm:$0xf]
        %v463 = vld [vmem:[%s211 + $0x354] sm:$0xf]
        %v464 = vld [vmem:[%s211 + $0x358] sm:$0xf]
        %v465 = vld [vmem:[%s211 + $0x35c] sm:$0xf]
        %v466 = vld [vmem:[%s211 + $0x360] sm:$0xf]
        %v467 = vld [vmem:[%s211 + $0x364] sm:$0xf]
        %v468 = vld [vmem:[%s211 + $0x368] sm:$0xf]
        %v469 = vld [vmem:[%s211 + $0x36c] sm:$0xf]
        %v470 = vld [vmem:[%s211 + $0x370] sm:$0xf]
        %v471 = vld [vmem:[%s211 + $0x374] sm:$0xf]
        %v472 = vld [vmem:[%s211 + $0x378] sm:$0xf]
        %v473 = vld [vmem:[%s211 + $0x37c] sm:$0xf]
        %v474 = vld [vmem:[%s211 + $0x380] sm:$0xf]
        %v475 = vld [vmem:[%s211 + $0x384] sm:$0xf]
        %v476 = vld [vmem:[%s211 + $0x388] sm:$0xf]
        %v477 = vld [vmem:[%s211 + $0x38c] sm:$0xf]
        %v478 = vld [vmem:[%s211 + $0x390] sm:$0xf]
        %v479 = vld [vmem:[%s211 + $0x394] sm:$0xf]
        %v480 = vld [vmem:[%s211 + $0x398] sm:$0xf]
        %v481 = vld [vmem:[%s211 + $0x39c] sm:$0xf]
        %v482 = vld [vmem:[%s211 + $0x3a0] sm:$0xf]
        %v483 = vld [vmem:[%s211 + $0x3a4] sm:$0xf]
        %v484 = vld [vmem:[%s211 + $0x3a8] sm:$0xf]
        %v485 = vld [vmem:[%s211 + $0x3ac] sm:$0xf]
        %v486 = vld [vmem:[%s211 + $0x3b0] sm:$0xf]
        %v487 = vld [vmem:[%s211 + $0x3b4] sm:$0xf]
        %v488 = vld [vmem:[%s211 + $0x3b8] sm:$0xf]
        %v489 = vld [vmem:[%s211 + $0x3bc] sm:$0xf]
        %v490 = vld [vmem:[%s211 + $0x3c0] sm:$0xf]
        %v491 = vld [vmem:[%s211 + $0x3c4] sm:$0xf]
        %v492 = vld [vmem:[%s211 + $0x3c8] sm:$0xf]
        %v493 = vld [vmem:[%s211 + $0x3cc] sm:$0xf]
        %v494 = vld [vmem:[%s211 + $0x3d0] sm:$0xf]
        %v495 = vld [vmem:[%s211 + $0x3d4] sm:$0xf]
        %v496 = vld [vmem:[%s211 + $0x3d8] sm:$0xf]
        %v497 = vld [vmem:[%s211 + $0x3dc] sm:$0xf]
        %v498 = vld [vmem:[%s211 + $0x3e0] sm:$0xf]
        %v499 = vld [vmem:[%s211 + $0x3e4] sm:$0xf]
        %v500 = vld [vmem:[%s211 + $0x3e8] sm:$0xf]
        %v501 = vld [vmem:[%s211 + $0x3ec] sm:$0xf]
        %v502 = vld [vmem:[%s211 + $0x3f0] sm:$0xf]
        %v503 = vld [vmem:[%s211 + $0x3f4] sm:$0xf]
        %v504 = vld [vmem:[%s211 + $0x3f8] sm:$0xf]
        %v505 = vld [vmem:[%s211 + $0x3fc] sm:$0xf]
        %v506 = vunpack.c.l.bf16 %v250
        %v507 = vunpack.c.l.bf16 %v251
        %v508 = vunpack.c.l.bf16 %v252
        %v509 = vunpack.c.l.bf16 %v253
        %v510 = vunpack.c.l.bf16 %v254
        %v511 = vunpack.c.l.bf16 %v255
        %v512 = vunpack.c.l.bf16 %v256
        %v513 = vunpack.c.l.bf16 %v257
        %v514 = vunpack.c.l.bf16 %v258
        %v515 = vunpack.c.l.bf16 %v259
        %v516 = vunpack.c.l.bf16 %v260
        %v517 = vunpack.c.l.bf16 %v261
        %v518 = vunpack.c.l.bf16 %v262
        %v519 = vunpack.c.l.bf16 %v263
        %v520 = vunpack.c.l.bf16 %v264
        %v521 = vunpack.c.l.bf16 %v265
        %v522 = vunpack.c.l.bf16 %v266
        %v523 = vunpack.c.l.bf16 %v267
        %v524 = vunpack.c.l.bf16 %v268
        %v525 = vunpack.c.l.bf16 %v269
        %v526 = vunpack.c.l.bf16 %v270
        %v527 = vunpack.c.l.bf16 %v271
        %v528 = vunpack.c.l.bf16 %v272
        %v529 = vunpack.c.l.bf16 %v273
        %v530 = vunpack.c.l.bf16 %v274
        %v531 = vunpack.c.l.bf16 %v275
        %v532 = vunpack.c.l.bf16 %v276
        %v533 = vunpack.c.l.bf16 %v277
        %v534 = vunpack.c.l.bf16 %v278
        %v535 = vunpack.c.l.bf16 %v279
        %v536 = vunpack.c.l.bf16 %v280
        %v537 = vunpack.c.l.bf16 %v281
        %v538 = vunpack.c.l.bf16 %v282
        %v539 = vunpack.c.l.bf16 %v283
        %v540 = vunpack.c.l.bf16 %v284
        %v541 = vunpack.c.l.bf16 %v285
        %v542 = vunpack.c.l.bf16 %v286
        %v543 = vunpack.c.l.bf16 %v287
        %v544 = vunpack.c.l.bf16 %v288
        %v545 = vunpack.c.l.bf16 %v289
        %v546 = vunpack.c.l.bf16 %v290
        %v547 = vunpack.c.l.bf16 %v291
        %v548 = vunpack.c.l.bf16 %v292
        %v549 = vunpack.c.l.bf16 %v293
        %v550 = vunpack.c.l.bf16 %v294
        %v551 = vunpack.c.l.bf16 %v295
        %v552 = vunpack.c.l.bf16 %v296
        %v553 = vunpack.c.l.bf16 %v297
        %v554 = vunpack.c.l.bf16 %v298
        %v555 = vunpack.c.l.bf16 %v299
        %v556 = vunpack.c.l.bf16 %v300
        %v557 = vunpack.c.l.bf16 %v301
        %v558 = vunpack.c.l.bf16 %v302
        %v559 = vunpack.c.l.bf16 %v303
        %v560 = vunpack.c.l.bf16 %v304
        %v561 = vunpack.c.l.bf16 %v305
        %v562 = vunpack.c.l.bf16 %v306
        %v563 = vunpack.c.l.bf16 %v307
        %v564 = vunpack.c.l.bf16 %v308
        %v565 = vunpack.c.l.bf16 %v309
        %v566 = vunpack.c.l.bf16 %v310
        %v567 = vunpack.c.l.bf16 %v311
        %v568 = vunpack.c.l.bf16 %v312
        %v569 = vunpack.c.l.bf16 %v313
        %v570 = vunpack.c.l.bf16 %v314
        %v571 = vunpack.c.l.bf16 %v315
        %v572 = vunpack.c.l.bf16 %v316
        %v573 = vunpack.c.l.bf16 %v317
        %v574 = vunpack.c.l.bf16 %v318
        %v575 = vunpack.c.l.bf16 %v319
        %v576 = vunpack.c.l.bf16 %v320
        %v577 = vunpack.c.l.bf16 %v321
        %v578 = vunpack.c.l.bf16 %v322
        %v579 = vunpack.c.l.bf16 %v323
        %v580 = vunpack.c.l.bf16 %v324
        %v581 = vunpack.c.l.bf16 %v325
        %v582 = vunpack.c.l.bf16 %v326
        %v583 = vunpack.c.l.bf16 %v327
        %v584 = vunpack.c.l.bf16 %v328
        %v585 = vunpack.c.l.bf16 %v329
        %v586 = vunpack.c.l.bf16 %v330
        %v587 = vunpack.c.l.bf16 %v331
        %v588 = vunpack.c.l.bf16 %v332
        %v589 = vunpack.c.l.bf16 %v333
        %v590 = vunpack.c.l.bf16 %v334
        %v591 = vunpack.c.l.bf16 %v335
        %v592 = vunpack.c.l.bf16 %v336
        %v593 = vunpack.c.l.bf16 %v337
        %v594 = vunpack.c.l.bf16 %v338
        %v595 = vunpack.c.l.bf16 %v339
        %v596 = vunpack.c.l.bf16 %v340
        %v597 = vunpack.c.l.bf16 %v341
        %v598 = vunpack.c.l.bf16 %v342
        %v599 = vunpack.c.l.bf16 %v343
        %v600 = vunpack.c.l.bf16 %v344
        %v601 = vunpack.c.l.bf16 %v345
        %v602 = vunpack.c.l.bf16 %v346
        %v603 = vunpack.c.l.bf16 %v347
        %v604 = vunpack.c.l.bf16 %v348
        %v605 = vunpack.c.l.bf16 %v349
        %v606 = vunpack.c.l.bf16 %v350
        %v607 = vunpack.c.l.bf16 %v351
        %v608 = vunpack.c.l.bf16 %v352
        %v609 = vunpack.c.l.bf16 %v353
        %v610 = vunpack.c.l.bf16 %v354
        %v611 = vunpack.c.l.bf16 %v355
        %v612 = vunpack.c.l.bf16 %v356
        %v613 = vunpack.c.l.bf16 %v357
        %v614 = vunpack.c.l.bf16 %v358
        %v615 = vunpack.c.l.bf16 %v359
        %v616 = vunpack.c.l.bf16 %v360
        %v617 = vunpack.c.l.bf16 %v361
        %v618 = vunpack.c.l.bf16 %v362
        %v619 = vunpack.c.l.bf16 %v363
        %v620 = vunpack.c.l.bf16 %v364
        %v621 = vunpack.c.l.bf16 %v365
        %v622 = vunpack.c.l.bf16 %v366
        %v623 = vunpack.c.l.bf16 %v367
        %v624 = vunpack.c.l.bf16 %v368
        %v625 = vunpack.c.l.bf16 %v369
        %v626 = vunpack.c.l.bf16 %v370
        %v627 = vunpack.c.l.bf16 %v371
        %v628 = vunpack.c.l.bf16 %v372
        %v629 = vunpack.c.l.bf16 %v373
        %v630 = vunpack.c.l.bf16 %v374
        %v631 = vunpack.c.l.bf16 %v375
        %v632 = vunpack.c.l.bf16 %v376
        %v633 = vunpack.c.l.bf16 %v377
        %v634 = vunpack.c.l.bf16 %v378
        %v635 = vunpack.c.l.bf16 %v379
        %v636 = vunpack.c.l.bf16 %v380
        %v637 = vunpack.c.l.bf16 %v381
        %v638 = vunpack.c.l.bf16 %v382
        %v639 = vunpack.c.l.bf16 %v383
        %v640 = vunpack.c.l.bf16 %v384
        %v641 = vunpack.c.l.bf16 %v385
        %v642 = vunpack.c.l.bf16 %v386
        %v643 = vunpack.c.l.bf16 %v387
        %v644 = vunpack.c.l.bf16 %v388
        %v645 = vunpack.c.l.bf16 %v389
        %v646 = vunpack.c.l.bf16 %v390
        %v647 = vunpack.c.l.bf16 %v391
        %v648 = vunpack.c.l.bf16 %v392
        %v649 = vunpack.c.l.bf16 %v393
        %v650 = vunpack.c.l.bf16 %v394
        %v651 = vunpack.c.l.bf16 %v395
        %v652 = vunpack.c.l.bf16 %v396
        %v653 = vunpack.c.l.bf16 %v397
        %v654 = vunpack.c.l.bf16 %v398
        %v655 = vunpack.c.l.bf16 %v399
        %v656 = vunpack.c.l.bf16 %v400
        %v657 = vunpack.c.l.bf16 %v401
        %v658 = vunpack.c.l.bf16 %v402
        %v659 = vunpack.c.l.bf16 %v403
        %v660 = vunpack.c.l.bf16 %v404
        %v661 = vunpack.c.l.bf16 %v405
        %v662 = vunpack.c.l.bf16 %v406
        %v663 = vunpack.c.l.bf16 %v407
        %v664 = vunpack.c.l.bf16 %v408
        %v665 = vunpack.c.l.bf16 %v409
        %v666 = vunpack.c.l.bf16 %v410
        %v667 = vunpack.c.l.bf16 %v411
        %v668 = vunpack.c.l.bf16 %v412
        %v669 = vunpack.c.l.bf16 %v413
        %v670 = vunpack.c.l.bf16 %v414
        %v671 = vunpack.c.l.bf16 %v415
        %v672 = vunpack.c.l.bf16 %v416
        %v673 = vunpack.c.l.bf16 %v417
        %v674 = vunpack.c.l.bf16 %v418
        %v675 = vunpack.c.l.bf16 %v419
        %v676 = vunpack.c.l.bf16 %v420
        %v677 = vunpack.c.l.bf16 %v421
        %v678 = vunpack.c.l.bf16 %v422
        %v679 = vunpack.c.l.bf16 %v423
        %v680 = vunpack.c.l.bf16 %v424
        %v681 = vunpack.c.l.bf16 %v425
        %v682 = vunpack.c.l.bf16 %v426
        %v683 = vunpack.c.l.bf16 %v427
        %v684 = vunpack.c.l.bf16 %v428
        %v685 = vunpack.c.l.bf16 %v429
        %v686 = vunpack.c.l.bf16 %v430
        %v687 = vunpack.c.l.bf16 %v431
        %v688 = vunpack.c.l.bf16 %v432
        %v689 = vunpack.c.l.bf16 %v433
        %v690 = vunpack.c.l.bf16 %v434
        %v691 = vunpack.c.l.bf16 %v435
        %v692 = vunpack.c.l.bf16 %v436
        %v693 = vunpack.c.l.bf16 %v437
        %v694 = vunpack.c.l.bf16 %v438
        %v695 = vunpack.c.l.bf16 %v439
        %v696 = vunpack.c.l.bf16 %v440
        %v697 = vunpack.c.l.bf16 %v441
        %v698 = vunpack.c.l.bf16 %v442
        %v699 = vunpack.c.l.bf16 %v443
        %v700 = vunpack.c.l.bf16 %v444
        %v701 = vunpack.c.l.bf16 %v445
        %v702 = vunpack.c.l.bf16 %v446
        %v703 = vunpack.c.l.bf16 %v447
        %v704 = vunpack.c.l.bf16 %v448
        %v705 = vunpack.c.l.bf16 %v449
        %v706 = vunpack.c.l.bf16 %v450
        %v707 = vunpack.c.l.bf16 %v451
        %v708 = vunpack.c.l.bf16 %v452
        %v709 = vunpack.c.l.bf16 %v453
        %v710 = vunpack.c.l.bf16 %v454
        %v711 = vunpack.c.l.bf16 %v455
        %v712 = vunpack.c.l.bf16 %v456
        %v713 = vunpack.c.l.bf16 %v457
        %v714 = vunpack.c.l.bf16 %v458
        %v715 = vunpack.c.l.bf16 %v459
        %v716 = vunpack.c.l.bf16 %v460
        %v717 = vunpack.c.l.bf16 %v461
        %v718 = vunpack.c.l.bf16 %v462
        %v719 = vunpack.c.l.bf16 %v463
        %v720 = vunpack.c.l.bf16 %v464
        %v721 = vunpack.c.l.bf16 %v465
        %v722 = vunpack.c.l.bf16 %v466
        %v723 = vunpack.c.l.bf16 %v467
        %v724 = vunpack.c.l.bf16 %v468
        %v725 = vunpack.c.l.bf16 %v469
        %v726 = vunpack.c.l.bf16 %v470
        %v727 = vunpack.c.l.bf16 %v471
        %v728 = vunpack.c.l.bf16 %v472
        %v729 = vunpack.c.l.bf16 %v473
        %v730 = vunpack.c.l.bf16 %v474
        %v731 = vunpack.c.l.bf16 %v475
        %v732 = vunpack.c.l.bf16 %v476
        %v733 = vunpack.c.l.bf16 %v477
        %v734 = vunpack.c.l.bf16 %v478
        %v735 = vunpack.c.l.bf16 %v479
        %v736 = vunpack.c.l.bf16 %v480
        %v737 = vunpack.c.l.bf16 %v481
        %v738 = vunpack.c.l.bf16 %v482
        %v739 = vunpack.c.l.bf16 %v483
        %v740 = vunpack.c.l.bf16 %v484
        %v741 = vunpack.c.l.bf16 %v485
        %v742 = vunpack.c.l.bf16 %v486
        %v743 = vunpack.c.l.bf16 %v487
        %v744 = vunpack.c.l.bf16 %v488
        %v745 = vunpack.c.l.bf16 %v489
        %v746 = vunpack.c.l.bf16 %v490
        %v747 = vunpack.c.l.bf16 %v491
        %v748 = vunpack.c.l.bf16 %v492
        %v749 = vunpack.c.l.bf16 %v493
        %v750 = vunpack.c.l.bf16 %v494
        %v751 = vunpack.c.l.bf16 %v495
        %v752 = vunpack.c.l.bf16 %v496
        %v753 = vunpack.c.l.bf16 %v497
        %v754 = vunpack.c.l.bf16 %v498
        %v755 = vunpack.c.l.bf16 %v499
        %v756 = vunpack.c.l.bf16 %v500
        %v757 = vunpack.c.l.bf16 %v501
        %v758 = vunpack.c.l.bf16 %v502
        %v759 = vunpack.c.l.bf16 %v503
        %v760 = vunpack.c.l.bf16 %v504
        %v761 = vunpack.c.l.bf16 %v505
        %v762 = vld [vmem:[%s1] sm:$0xff]
        %v763 = vld [vmem:[%s2] sm:$0xff]
        %764 = vmatpush.xpose.msra.mxu0 %v521
        %765 = vmatpush.xpose.msra.mxu0 %v520
        %766 = vmatpush.xpose.msra.mxu0 %v519
        %767 = vmatpush.xpose.msra.mxu0 %v518
        %768 = vmatpush.xpose.msra.mxu0 %v517
        %769 = vmatpush.xpose.msra.mxu0 %v516
        %770 = vmatpush.xpose.msra.mxu0 %v515
        %771 = vmatpush.xpose.msra.mxu0 %v514
        %772 = vmatpush.xpose.msra.mxu0 %v513
        %773 = vmatpush.xpose.msra.mxu0 %v512
        %774 = vmatpush.xpose.msra.mxu0 %v511
        %775 = vmatpush.xpose.msra.mxu0 %v510
        %776 = vmatpush.xpose.msra.mxu0 %v509
        %777 = vmatpush.xpose.msra.mxu0 %v508
        %778 = vmatpush.xpose.msra.mxu0 %v507
        %779 = vmatpush.xpose.msra.mxu0 %v506
        %780 = vmatmul.f32.gmra.mxu0 %v762
        %v781 = vpop.f32.mrf.mxu0
        %v782 = vadd.f32 0.0, %v781
        %783 = vdwg.mxu0
        %784 = vmatpush.xpose.msra.mxu0 %v537
        %785 = vmatpush.xpose.msra.mxu0 %v536
        %786 = vmatpush.xpose.msra.mxu0 %v535
        %787 = vmatpush.xpose.msra.mxu0 %v534
        %788 = vmatpush.xpose.msra.mxu0 %v533
        %789 = vmatpush.xpose.msra.mxu0 %v532
        %790 = vmatpush.xpose.msra.mxu0 %v531
        %791 = vmatpush.xpose.msra.mxu0 %v530
        %792 = vmatpush.xpose.msra.mxu0 %v529
        %793 = vmatpush.xpose.msra.mxu0 %v528
        %794 = vmatpush.xpose.msra.mxu0 %v527
        %795 = vmatpush.xpose.msra.mxu0 %v526
        %796 = vmatpush.xpose.msra.mxu0 %v525
        %797 = vmatpush.xpose.msra.mxu0 %v524
        %798 = vmatpush.xpose.msra.mxu0 %v523
        %799 = vmatpush.xpose.msra.mxu0 %v522
        %800 = vmatmul.f32.gmra.mxu0 %v762
        %v801 = vpop.f32.mrf.mxu0
        %v802 = vadd.f32 0.0, %v801
        %803 = vdwg.mxu0
        %804 = vmatpush.xpose.msra.mxu0 %v553
        %805 = vmatpush.xpose.msra.mxu0 %v552
        %806 = vmatpush.xpose.msra.mxu0 %v551
        %807 = vmatpush.xpose.msra.mxu0 %v550
        %808 = vmatpush.xpose.msra.mxu0 %v549
        %809 = vmatpush.xpose.msra.mxu0 %v548
        %810 = vmatpush.xpose.msra.mxu0 %v547
        %811 = vmatpush.xpose.msra.mxu0 %v546
        %812 = vmatpush.xpose.msra.mxu0 %v545
        %813 = vmatpush.xpose.msra.mxu0 %v544
        %814 = vmatpush.xpose.msra.mxu0 %v543
        %815 = vmatpush.xpose.msra.mxu0 %v542
        %816 = vmatpush.xpose.msra.mxu0 %v541
        %817 = vmatpush.xpose.msra.mxu0 %v540
        %818 = vmatpush.xpose.msra.mxu0 %v539
        %819 = vmatpush.xpose.msra.mxu0 %v538
        %820 = vmatmul.f32.gmra.mxu0 %v762
        %v821 = vpop.f32.mrf.mxu0
        %v822 = vadd.f32 0.0, %v821
        %823 = vdwg.mxu0
        %824 = vmatpush.xpose.msra.mxu0 %v569
        %825 = vmatpush.xpose.msra.mxu0 %v568
        %826 = vmatpush.xpose.msra.mxu0 %v567
        %827 = vmatpush.xpose.msra.mxu0 %v566
        %828 = vmatpush.xpose.msra.mxu0 %v565
        %829 = vmatpush.xpose.msra.mxu0 %v564
        %830 = vmatpush.xpose.msra.mxu0 %v563
        %831 = vmatpush.xpose.msra.mxu0 %v562
        %832 = vmatpush.xpose.msra.mxu0 %v561
        %833 = vmatpush.xpose.msra.mxu0 %v560
        %834 = vmatpush.xpose.msra.mxu0 %v559
        %835 = vmatpush.xpose.msra.mxu0 %v558
        %836 = vmatpush.xpose.msra.mxu0 %v557
        %837 = vmatpush.xpose.msra.mxu0 %v556
        %838 = vmatpush.xpose.msra.mxu0 %v555
        %839 = vmatpush.xpose.msra.mxu0 %v554
        %840 = vmatmul.f32.gmra.mxu0 %v762
        %v841 = vpop.f32.mrf.mxu0
        %v842 = vadd.f32 0.0, %v841
        %843 = vdwg.mxu0
        %844 = vmatpush.xpose.msra.mxu0 %v585
        %845 = vmatpush.xpose.msra.mxu0 %v584
        %846 = vmatpush.xpose.msra.mxu0 %v583
        %847 = vmatpush.xpose.msra.mxu0 %v582
        %848 = vmatpush.xpose.msra.mxu0 %v581
        %849 = vmatpush.xpose.msra.mxu0 %v580
        %850 = vmatpush.xpose.msra.mxu0 %v579
        %851 = vmatpush.xpose.msra.mxu0 %v578
        %852 = vmatpush.xpose.msra.mxu0 %v577
        %853 = vmatpush.xpose.msra.mxu0 %v576
        %854 = vmatpush.xpose.msra.mxu0 %v575
        %855 = vmatpush.xpose.msra.mxu0 %v574
        %856 = vmatpush.xpose.msra.mxu0 %v573
        %857 = vmatpush.xpose.msra.mxu0 %v572
        %858 = vmatpush.xpose.msra.mxu0 %v571
        %859 = vmatpush.xpose.msra.mxu0 %v570
        %860 = vmatmul.f32.gmra.mxu0 %v762
        %v861 = vpop.f32.mrf.mxu0
        %v862 = vadd.f32 0.0, %v861
        %863 = vdwg.mxu0
        %864 = vmatpush.xpose.msra.mxu0 %v601
        %865 = vmatpush.xpose.msra.mxu0 %v600
        %866 = vmatpush.xpose.msra.mxu0 %v599
        %867 = vmatpush.xpose.msra.mxu0 %v598
        %868 = vmatpush.xpose.msra.mxu0 %v597
        %869 = vmatpush.xpose.msra.mxu0 %v596
        %870 = vmatpush.xpose.msra.mxu0 %v595
        %871 = vmatpush.xpose.msra.mxu0 %v594
        %872 = vmatpush.xpose.msra.mxu0 %v593
        %873 = vmatpush.xpose.msra.mxu0 %v592
        %874 = vmatpush.xpose.msra.mxu0 %v591
        %875 = vmatpush.xpose.msra.mxu0 %v590
        %876 = vmatpush.xpose.msra.mxu0 %v589
        %877 = vmatpush.xpose.msra.mxu0 %v588
        %878 = vmatpush.xpose.msra.mxu0 %v587
        %879 = vmatpush.xpose.msra.mxu0 %v586
        %880 = vmatmul.f32.gmra.mxu0 %v762
        %v881 = vpop.f32.mrf.mxu0
        %v882 = vadd.f32 0.0, %v881
        %883 = vdwg.mxu0
        %884 = vmatpush.xpose.msra.mxu0 %v617
        %885 = vmatpush.xpose.msra.mxu0 %v616
        %886 = vmatpush.xpose.msra.mxu0 %v615
        %887 = vmatpush.xpose.msra.mxu0 %v614
        %888 = vmatpush.xpose.msra.mxu0 %v613
        %889 = vmatpush.xpose.msra.mxu0 %v612
        %890 = vmatpush.xpose.msra.mxu0 %v611
        %891 = vmatpush.xpose.msra.mxu0 %v610
        %892 = vmatpush.xpose.msra.mxu0 %v609
        %893 = vmatpush.xpose.msra.mxu0 %v608
        %894 = vmatpush.xpose.msra.mxu0 %v607
        %895 = vmatpush.xpose.msra.mxu0 %v606
        %896 = vmatpush.xpose.msra.mxu0 %v605
        %897 = vmatpush.xpose.msra.mxu0 %v604
        %898 = vmatpush.xpose.msra.mxu0 %v603
        %899 = vmatpush.xpose.msra.mxu0 %v602
        %900 = vmatmul.f32.gmra.mxu0 %v762
        %v901 = vpop.f32.mrf.mxu0
        %v902 = vadd.f32 0.0, %v901
        %903 = vdwg.mxu0
        %904 = vmatpush.xpose.msra.mxu0 %v633
        %905 = vmatpush.xpose.msra.mxu0 %v632
        %906 = vmatpush.xpose.msra.mxu0 %v631
        %907 = vmatpush.xpose.msra.mxu0 %v630
        %908 = vmatpush.xpose.msra.mxu0 %v629
        %909 = vmatpush.xpose.msra.mxu0 %v628
        %910 = vmatpush.xpose.msra.mxu0 %v627
        %911 = vmatpush.xpose.msra.mxu0 %v626
        %912 = vmatpush.xpose.msra.mxu0 %v625
        %913 = vmatpush.xpose.msra.mxu0 %v624
        %914 = vmatpush.xpose.msra.mxu0 %v623
        %915 = vmatpush.xpose.msra.mxu0 %v622
        %916 = vmatpush.xpose.msra.mxu0 %v621
        %917 = vmatpush.xpose.msra.mxu0 %v620
        %918 = vmatpush.xpose.msra.mxu0 %v619
        %919 = vmatpush.xpose.msra.mxu0 %v618
        %920 = vmatmul.f32.gmra.mxu0 %v762
        %v921 = vpop.f32.mrf.mxu0
        %v922 = vadd.f32 0.0, %v921
        %923 = vdwg.mxu0
        %924 = vmatpush.xpose.msra.mxu0 %v649
        %925 = vmatpush.xpose.msra.mxu0 %v648
        %926 = vmatpush.xpose.msra.mxu0 %v647
        %927 = vmatpush.xpose.msra.mxu0 %v646
        %928 = vmatpush.xpose.msra.mxu0 %v645
        %929 = vmatpush.xpose.msra.mxu0 %v644
        %930 = vmatpush.xpose.msra.mxu0 %v643
        %931 = vmatpush.xpose.msra.mxu0 %v642
        %932 = vmatpush.xpose.msra.mxu0 %v641
        %933 = vmatpush.xpose.msra.mxu0 %v640
        %934 = vmatpush.xpose.msra.mxu0 %v639
        %935 = vmatpush.xpose.msra.mxu0 %v638
        %936 = vmatpush.xpose.msra.mxu0 %v637
        %937 = vmatpush.xpose.msra.mxu0 %v636
        %938 = vmatpush.xpose.msra.mxu0 %v635
        %939 = vmatpush.xpose.msra.mxu0 %v634
        %940 = vmatmul.f32.gmra.mxu0 %v762
        %v941 = vpop.f32.mrf.mxu0
        %v942 = vadd.f32 0.0, %v941
        %943 = vdwg.mxu0
        %944 = vmatpush.xpose.msra.mxu0 %v665
        %945 = vmatpush.xpose.msra.mxu0 %v664
        %946 = vmatpush.xpose.msra.mxu0 %v663
        %947 = vmatpush.xpose.msra.mxu0 %v662
        %948 = vmatpush.xpose.msra.mxu0 %v661
        %949 = vmatpush.xpose.msra.mxu0 %v660
        %950 = vmatpush.xpose.msra.mxu0 %v659
        %951 = vmatpush.xpose.msra.mxu0 %v658
        %952 = vmatpush.xpose.msra.mxu0 %v657
        %953 = vmatpush.xpose.msra.mxu0 %v656
        %954 = vmatpush.xpose.msra.mxu0 %v655
        %955 = vmatpush.xpose.msra.mxu0 %v654
        %956 = vmatpush.xpose.msra.mxu0 %v653
        %957 = vmatpush.xpose.msra.mxu0 %v652
        %958 = vmatpush.xpose.msra.mxu0 %v651
        %959 = vmatpush.xpose.msra.mxu0 %v650
        %960 = vmatmul.f32.gmra.mxu0 %v762
        %v961 = vpop.f32.mrf.mxu0
        %v962 = vadd.f32 0.0, %v961
        %963 = vdwg.mxu0
        %964 = vmatpush.xpose.msra.mxu0 %v681
        %965 = vmatpush.xpose.msra.mxu0 %v680
        %966 = vmatpush.xpose.msra.mxu0 %v679
        %967 = vmatpush.xpose.msra.mxu0 %v678
        %968 = vmatpush.xpose.msra.mxu0 %v677
        %969 = vmatpush.xpose.msra.mxu0 %v676
        %970 = vmatpush.xpose.msra.mxu0 %v675
        %971 = vmatpush.xpose.msra.mxu0 %v674
        %972 = vmatpush.xpose.msra.mxu0 %v673
        %973 = vmatpush.xpose.msra.mxu0 %v672
        %974 = vmatpush.xpose.msra.mxu0 %v671
        %975 = vmatpush.xpose.msra.mxu0 %v670
        %976 = vmatpush.xpose.msra.mxu0 %v669
        %977 = vmatpush.xpose.msra.mxu0 %v668
        %978 = vmatpush.xpose.msra.mxu0 %v667
        %979 = vmatpush.xpose.msra.mxu0 %v666
        %980 = vmatmul.f32.gmra.mxu0 %v762
        %v981 = vpop.f32.mrf.mxu0
        %v982 = vadd.f32 0.0, %v981
        %983 = vdwg.mxu0
        %984 = vmatpush.xpose.msra.mxu0 %v697
        %985 = vmatpush.xpose.msra.mxu0 %v696
        %986 = vmatpush.xpose.msra.mxu0 %v695
        %987 = vmatpush.xpose.msra.mxu0 %v694
        %988 = vmatpush.xpose.msra.mxu0 %v693
        %989 = vmatpush.xpose.msra.mxu0 %v692
        %990 = vmatpush.xpose.msra.mxu0 %v691
        %991 = vmatpush.xpose.msra.mxu0 %v690
        %992 = vmatpush.xpose.msra.mxu0 %v689
        %993 = vmatpush.xpose.msra.mxu0 %v688
        %994 = vmatpush.xpose.msra.mxu0 %v687
        %995 = vmatpush.xpose.msra.mxu0 %v686
        %996 = vmatpush.xpose.msra.mxu0 %v685
        %997 = vmatpush.xpose.msra.mxu0 %v684
        %998 = vmatpush.xpose.msra.mxu0 %v683
        %999 = vmatpush.xpose.msra.mxu0 %v682
        %1000 = vmatmul.f32.gmra.mxu0 %v762
        %v1001 = vpop.f32.mrf.mxu0
        %v1002 = vadd.f32 0.0, %v1001
        %1003 = vdwg.mxu0
        %1004 = vmatpush.xpose.msra.mxu0 %v713
        %1005 = vmatpush.xpose.msra.mxu0 %v712
        %1006 = vmatpush.xpose.msra.mxu0 %v711
        %1007 = vmatpush.xpose.msra.mxu0 %v710
        %1008 = vmatpush.xpose.msra.mxu0 %v709
        %1009 = vmatpush.xpose.msra.mxu0 %v708
        %1010 = vmatpush.xpose.msra.mxu0 %v707
        %1011 = vmatpush.xpose.msra.mxu0 %v706
        %1012 = vmatpush.xpose.msra.mxu0 %v705
        %1013 = vmatpush.xpose.msra.mxu0 %v704
        %1014 = vmatpush.xpose.msra.mxu0 %v703
        %1015 = vmatpush.xpose.msra.mxu0 %v702
        %1016 = vmatpush.xpose.msra.mxu0 %v701
        %1017 = vmatpush.xpose.msra.mxu0 %v700
        %1018 = vmatpush.xpose.msra.mxu0 %v699
        %1019 = vmatpush.xpose.msra.mxu0 %v698
        %1020 = vmatmul.f32.gmra.mxu0 %v762
        %v1021 = vpop.f32.mrf.mxu0
        %v1022 = vadd.f32 0.0, %v1021
        %1023 = vdwg.mxu0
        %1024 = vmatpush.xpose.msra.mxu0 %v729
        %1025 = vmatpush.xpose.msra.mxu0 %v728
        %1026 = vmatpush.xpose.msra.mxu0 %v727
        %1027 = vmatpush.xpose.msra.mxu0 %v726
        %1028 = vmatpush.xpose.msra.mxu0 %v725
        %1029 = vmatpush.xpose.msra.mxu0 %v724
        %1030 = vmatpush.xpose.msra.mxu0 %v723
        %1031 = vmatpush.xpose.msra.mxu0 %v722
        %1032 = vmatpush.xpose.msra.mxu0 %v721
        %1033 = vmatpush.xpose.msra.mxu0 %v720
        %1034 = vmatpush.xpose.msra.mxu0 %v719
        %1035 = vmatpush.xpose.msra.mxu0 %v718
        %1036 = vmatpush.xpose.msra.mxu0 %v717
        %1037 = vmatpush.xpose.msra.mxu0 %v716
        %1038 = vmatpush.xpose.msra.mxu0 %v715
        %1039 = vmatpush.xpose.msra.mxu0 %v714
        %1040 = vmatmul.f32.gmra.mxu0 %v762
        %v1041 = vpop.f32.mrf.mxu0
        %v1042 = vadd.f32 0.0, %v1041
        %1043 = vdwg.mxu0
        %1044 = vmatpush.xpose.msra.mxu0 %v745
        %1045 = vmatpush.xpose.msra.mxu0 %v744
        %1046 = vmatpush.xpose.msra.mxu0 %v743
        %1047 = vmatpush.xpose.msra.mxu0 %v742
        %1048 = vmatpush.xpose.msra.mxu0 %v741
        %1049 = vmatpush.xpose.msra.mxu0 %v740
        %1050 = vmatpush.xpose.msra.mxu0 %v739
        %1051 = vmatpush.xpose.msra.mxu0 %v738
        %1052 = vmatpush.xpose.msra.mxu0 %v737
        %1053 = vmatpush.xpose.msra.mxu0 %v736
        %1054 = vmatpush.xpose.msra.mxu0 %v735
        %1055 = vmatpush.xpose.msra.mxu0 %v734
        %1056 = vmatpush.xpose.msra.mxu0 %v733
        %1057 = vmatpush.xpose.msra.mxu0 %v732
        %1058 = vmatpush.xpose.msra.mxu0 %v731
        %1059 = vmatpush.xpose.msra.mxu0 %v730
        %1060 = vmatmul.f32.gmra.mxu0 %v762
        %v1061 = vpop.f32.mrf.mxu0
        %v1062 = vadd.f32 0.0, %v1061
        %1063 = vdwg.mxu0
        %1064 = vmatpush.xpose.msra.mxu0 %v761
        %1065 = vmatpush.xpose.msra.mxu0 %v760
        %1066 = vmatpush.xpose.msra.mxu0 %v759
        %1067 = vmatpush.xpose.msra.mxu0 %v758
        %1068 = vmatpush.xpose.msra.mxu0 %v757
        %1069 = vmatpush.xpose.msra.mxu0 %v756
        %1070 = vmatpush.xpose.msra.mxu0 %v755
        %1071 = vmatpush.xpose.msra.mxu0 %v754
        %1072 = vmatpush.xpose.msra.mxu0 %v753
        %1073 = vmatpush.xpose.msra.mxu0 %v752
        %1074 = vmatpush.xpose.msra.mxu0 %v751
        %1075 = vmatpush.xpose.msra.mxu0 %v750
        %1076 = vmatpush.xpose.msra.mxu0 %v749
        %1077 = vmatpush.xpose.msra.mxu0 %v748
        %1078 = vmatpush.xpose.msra.mxu0 %v747
        %1079 = vmatpush.xpose.msra.mxu0 %v746
        %1080 = vmatmul.f32.gmra.mxu0 %v762
        %v1081 = vpop.f32.mrf.mxu0
        %v1082 = vadd.f32 0.0, %v1081
        %1083 = vdwg.mxu0
        %v1084 = vmul.f32 %v506, %v506
        %v1085 = vmul.f32 %v507, %v507
        %v1086 = vmul.f32 %v508, %v508
        %v1087 = vmul.f32 %v509, %v509
        %v1088 = vmul.f32 %v510, %v510
        %v1089 = vmul.f32 %v511, %v511
        %v1090 = vmul.f32 %v512, %v512
        %v1091 = vmul.f32 %v513, %v513
        %v1092 = vmul.f32 %v514, %v514
        %v1093 = vmul.f32 %v515, %v515
        %v1094 = vmul.f32 %v516, %v516
        %v1095 = vmul.f32 %v517, %v517
        %v1096 = vmul.f32 %v518, %v518
        %v1097 = vmul.f32 %v519, %v519
        %v1098 = vmul.f32 %v520, %v520
        %v1099 = vmul.f32 %v521, %v521
        %v1100 = vmul.f32 %v522, %v522
        %v1101 = vmul.f32 %v523, %v523
        %v1102 = vmul.f32 %v524, %v524
        %v1103 = vmul.f32 %v525, %v525
        %v1104 = vmul.f32 %v526, %v526
        %v1105 = vmul.f32 %v527, %v527
        %v1106 = vmul.f32 %v528, %v528
        %v1107 = vmul.f32 %v529, %v529
        %v1108 = vmul.f32 %v530, %v530
        %v1109 = vmul.f32 %v531, %v531
        %v1110 = vmul.f32 %v532, %v532
        %v1111 = vmul.f32 %v533, %v533
        %v1112 = vmul.f32 %v534, %v534
        %v1113 = vmul.f32 %v535, %v535
        %v1114 = vmul.f32 %v536, %v536
        %v1115 = vmul.f32 %v537, %v537
        %v1116 = vmul.f32 %v538, %v538
        %v1117 = vmul.f32 %v539, %v539
        %v1118 = vmul.f32 %v540, %v540
        %v1119 = vmul.f32 %v541, %v541
        %v1120 = vmul.f32 %v542, %v542
        %v1121 = vmul.f32 %v543, %v543
        %v1122 = vmul.f32 %v544, %v544
        %v1123 = vmul.f32 %v545, %v545
        %v1124 = vmul.f32 %v546, %v546
        %v1125 = vmul.f32 %v547, %v547
        %v1126 = vmul.f32 %v548, %v548
        %v1127 = vmul.f32 %v549, %v549
        %v1128 = vmul.f32 %v550, %v550
        %v1129 = vmul.f32 %v551, %v551
        %v1130 = vmul.f32 %v552, %v552
        %v1131 = vmul.f32 %v553, %v553
        %v1132 = vmul.f32 %v554, %v554
        %v1133 = vmul.f32 %v555, %v555
        %v1134 = vmul.f32 %v556, %v556
        %v1135 = vmul.f32 %v557, %v557
        %v1136 = vmul.f32 %v558, %v558
        %v1137 = vmul.f32 %v559, %v559
        %v1138 = vmul.f32 %v560, %v560
        %v1139 = vmul.f32 %v561, %v561
        %v1140 = vmul.f32 %v562, %v562
        %v1141 = vmul.f32 %v563, %v563
        %v1142 = vmul.f32 %v564, %v564
        %v1143 = vmul.f32 %v565, %v565
        %v1144 = vmul.f32 %v566, %v566
        %v1145 = vmul.f32 %v567, %v567
        %v1146 = vmul.f32 %v568, %v568
        %v1147 = vmul.f32 %v569, %v569
        %v1148 = vmul.f32 %v570, %v570
        %v1149 = vmul.f32 %v571, %v571
        %v1150 = vmul.f32 %v572, %v572
        %v1151 = vmul.f32 %v573, %v573
        %v1152 = vmul.f32 %v574, %v574
        %v1153 = vmul.f32 %v575, %v575
        %v1154 = vmul.f32 %v576, %v576
        %v1155 = vmul.f32 %v577, %v577
        %v1156 = vmul.f32 %v578, %v578
        %v1157 = vmul.f32 %v579, %v579
        %v1158 = vmul.f32 %v580, %v580
        %v1159 = vmul.f32 %v581, %v581
        %v1160 = vmul.f32 %v582, %v582
        %v1161 = vmul.f32 %v583, %v583
        %v1162 = vmul.f32 %v584, %v584
        %v1163 = vmul.f32 %v585, %v585
        %v1164 = vmul.f32 %v586, %v586
        %v1165 = vmul.f32 %v587, %v587
        %v1166 = vmul.f32 %v588, %v588
        %v1167 = vmul.f32 %v589, %v589
        %v1168 = vmul.f32 %v590, %v590
        %v1169 = vmul.f32 %v591, %v591
        %v1170 = vmul.f32 %v592, %v592
        %v1171 = vmul.f32 %v593, %v593
        %v1172 = vmul.f32 %v594, %v594
        %v1173 = vmul.f32 %v595, %v595
        %v1174 = vmul.f32 %v596, %v596
        %v1175 = vmul.f32 %v597, %v597
        %v1176 = vmul.f32 %v598, %v598
        %v1177 = vmul.f32 %v599, %v599
        %v1178 = vmul.f32 %v600, %v600
        %v1179 = vmul.f32 %v601, %v601
        %v1180 = vmul.f32 %v602, %v602
        %v1181 = vmul.f32 %v603, %v603
        %v1182 = vmul.f32 %v604, %v604
        %v1183 = vmul.f32 %v605, %v605
        %v1184 = vmul.f32 %v606, %v606
        %v1185 = vmul.f32 %v607, %v607
        %v1186 = vmul.f32 %v608, %v608
        %v1187 = vmul.f32 %v609, %v609
        %v1188 = vmul.f32 %v610, %v610
        %v1189 = vmul.f32 %v611, %v611
        %v1190 = vmul.f32 %v612, %v612
        %v1191 = vmul.f32 %v613, %v613
        %v1192 = vmul.f32 %v614, %v614
        %v1193 = vmul.f32 %v615, %v615
        %v1194 = vmul.f32 %v616, %v616
        %v1195 = vmul.f32 %v617, %v617
        %v1196 = vmul.f32 %v618, %v618
        %v1197 = vmul.f32 %v619, %v619
        %v1198 = vmul.f32 %v620, %v620
        %v1199 = vmul.f32 %v621, %v621
        %v1200 = vmul.f32 %v622, %v622
        %v1201 = vmul.f32 %v623, %v623
        %v1202 = vmul.f32 %v624, %v624
        %v1203 = vmul.f32 %v625, %v625
        %v1204 = vmul.f32 %v626, %v626
        %v1205 = vmul.f32 %v627, %v627
        %v1206 = vmul.f32 %v628, %v628
        %v1207 = vmul.f32 %v629, %v629
        %v1208 = vmul.f32 %v630, %v630
        %v1209 = vmul.f32 %v631, %v631
        %v1210 = vmul.f32 %v632, %v632
        %v1211 = vmul.f32 %v633, %v633
        %v1212 = vmul.f32 %v634, %v634
        %v1213 = vmul.f32 %v635, %v635
        %v1214 = vmul.f32 %v636, %v636
        %v1215 = vmul.f32 %v637, %v637
        %v1216 = vmul.f32 %v638, %v638
        %v1217 = vmul.f32 %v639, %v639
        %v1218 = vmul.f32 %v640, %v640
        %v1219 = vmul.f32 %v641, %v641
        %v1220 = vmul.f32 %v642, %v642
        %v1221 = vmul.f32 %v643, %v643
        %v1222 = vmul.f32 %v644, %v644
        %v1223 = vmul.f32 %v645, %v645
        %v1224 = vmul.f32 %v646, %v646
        %v1225 = vmul.f32 %v647, %v647
        %v1226 = vmul.f32 %v648, %v648
        %v1227 = vmul.f32 %v649, %v649
        %v1228 = vmul.f32 %v650, %v650
        %v1229 = vmul.f32 %v651, %v651
        %v1230 = vmul.f32 %v652, %v652
        %v1231 = vmul.f32 %v653, %v653
        %v1232 = vmul.f32 %v654, %v654
        %v1233 = vmul.f32 %v655, %v655
        %v1234 = vmul.f32 %v656, %v656
        %v1235 = vmul.f32 %v657, %v657
        %v1236 = vmul.f32 %v658, %v658
        %v1237 = vmul.f32 %v659, %v659
        %v1238 = vmul.f32 %v660, %v660
        %v1239 = vmul.f32 %v661, %v661
        %v1240 = vmul.f32 %v662, %v662
        %v1241 = vmul.f32 %v663, %v663
        %v1242 = vmul.f32 %v664, %v664
        %v1243 = vmul.f32 %v665, %v665
        %v1244 = vmul.f32 %v666, %v666
        %v1245 = vmul.f32 %v667, %v667
        %v1246 = vmul.f32 %v668, %v668
        %v1247 = vmul.f32 %v669, %v669
        %v1248 = vmul.f32 %v670, %v670
        %v1249 = vmul.f32 %v671, %v671
        %v1250 = vmul.f32 %v672, %v672
        %v1251 = vmul.f32 %v673, %v673
        %v1252 = vmul.f32 %v674, %v674
        %v1253 = vmul.f32 %v675, %v675
        %v1254 = vmul.f32 %v676, %v676
        %v1255 = vmul.f32 %v677, %v677
        %v1256 = vmul.f32 %v678, %v678
        %v1257 = vmul.f32 %v679, %v679
        %v1258 = vmul.f32 %v680, %v680
        %v1259 = vmul.f32 %v681, %v681
        %v1260 = vmul.f32 %v682, %v682
        %v1261 = vmul.f32 %v683, %v683
        %v1262 = vmul.f32 %v684, %v684
        %v1263 = vmul.f32 %v685, %v685
        %v1264 = vmul.f32 %v686, %v686
        %v1265 = vmul.f32 %v687, %v687
        %v1266 = vmul.f32 %v688, %v688
        %v1267 = vmul.f32 %v689, %v689
        %v1268 = vmul.f32 %v690, %v690
        %v1269 = vmul.f32 %v691, %v691
        %v1270 = vmul.f32 %v692, %v692
        %v1271 = vmul.f32 %v693, %v693
        %v1272 = vmul.f32 %v694, %v694
        %v1273 = vmul.f32 %v695, %v695
        %v1274 = vmul.f32 %v696, %v696
        %v1275 = vmul.f32 %v697, %v697
        %v1276 = vmul.f32 %v698, %v698
        %v1277 = vmul.f32 %v699, %v699
        %v1278 = vmul.f32 %v700, %v700
        %v1279 = vmul.f32 %v701, %v701
        %v1280 = vmul.f32 %v702, %v702
        %v1281 = vmul.f32 %v703, %v703
        %v1282 = vmul.f32 %v704, %v704
        %v1283 = vmul.f32 %v705, %v705
        %v1284 = vmul.f32 %v706, %v706
        %v1285 = vmul.f32 %v707, %v707
        %v1286 = vmul.f32 %v708, %v708
        %v1287 = vmul.f32 %v709, %v709
        %v1288 = vmul.f32 %v710, %v710
        %v1289 = vmul.f32 %v711, %v711
        %v1290 = vmul.f32 %v712, %v712
        %v1291 = vmul.f32 %v713, %v713
        %v1292 = vmul.f32 %v714, %v714
        %v1293 = vmul.f32 %v715, %v715
        %v1294 = vmul.f32 %v716, %v716
        %v1295 = vmul.f32 %v717, %v717
        %v1296 = vmul.f32 %v718, %v718
        %v1297 = vmul.f32 %v719, %v719
        %v1298 = vmul.f32 %v720, %v720
        %v1299 = vmul.f32 %v721, %v721
        %v1300 = vmul.f32 %v722, %v722
        %v1301 = vmul.f32 %v723, %v723
        %v1302 = vmul.f32 %v724, %v724
        %v1303 = vmul.f32 %v725, %v725
        %v1304 = vmul.f32 %v726, %v726
        %v1305 = vmul.f32 %v727, %v727
        %v1306 = vmul.f32 %v728, %v728
        %v1307 = vmul.f32 %v729, %v729
        %v1308 = vmul.f32 %v730, %v730
        %v1309 = vmul.f32 %v731, %v731
        %v1310 = vmul.f32 %v732, %v732
        %v1311 = vmul.f32 %v733, %v733
        %v1312 = vmul.f32 %v734, %v734
        %v1313 = vmul.f32 %v735, %v735
        %v1314 = vmul.f32 %v736, %v736
        %v1315 = vmul.f32 %v737, %v737
        %v1316 = vmul.f32 %v738, %v738
        %v1317 = vmul.f32 %v739, %v739
        %v1318 = vmul.f32 %v740, %v740
        %v1319 = vmul.f32 %v741, %v741
        %v1320 = vmul.f32 %v742, %v742
        %v1321 = vmul.f32 %v743, %v743
        %v1322 = vmul.f32 %v744, %v744
        %v1323 = vmul.f32 %v745, %v745
        %v1324 = vmul.f32 %v746, %v746
        %v1325 = vmul.f32 %v747, %v747
        %v1326 = vmul.f32 %v748, %v748
        %v1327 = vmul.f32 %v749, %v749
        %v1328 = vmul.f32 %v750, %v750
        %v1329 = vmul.f32 %v751, %v751
        %v1330 = vmul.f32 %v752, %v752
        %v1331 = vmul.f32 %v753, %v753
        %v1332 = vmul.f32 %v754, %v754
        %v1333 = vmul.f32 %v755, %v755
        %v1334 = vmul.f32 %v756, %v756
        %v1335 = vmul.f32 %v757, %v757
        %v1336 = vmul.f32 %v758, %v758
        %v1337 = vmul.f32 %v759, %v759
        %v1338 = vmul.f32 %v760, %v760
        %v1339 = vmul.f32 %v761, %v761
        %1340 = vmatpush.xpose.msra.mxu0 %v1099
        %1341 = vmatpush.xpose.msra.mxu0 %v1098
        %1342 = vmatpush.xpose.msra.mxu0 %v1097
        %1343 = vmatpush.xpose.msra.mxu0 %v1096
        %1344 = vmatpush.xpose.msra.mxu0 %v1095
        %1345 = vmatpush.xpose.msra.mxu0 %v1094
        %1346 = vmatpush.xpose.msra.mxu0 %v1093
        %1347 = vmatpush.xpose.msra.mxu0 %v1092
        %1348 = vmatpush.xpose.msra.mxu0 %v1091
        %1349 = vmatpush.xpose.msra.mxu0 %v1090
        %1350 = vmatpush.xpose.msra.mxu0 %v1089
        %1351 = vmatpush.xpose.msra.mxu0 %v1088
        %1352 = vmatpush.xpose.msra.mxu0 %v1087
        %1353 = vmatpush.xpose.msra.mxu0 %v1086
        %1354 = vmatpush.xpose.msra.mxu0 %v1085
        %1355 = vmatpush.xpose.msra.mxu0 %v1084
        %1356 = vmatmul.f32.gmra.mxu0 1.0
        %v1357 = vpop.f32.mrf.mxu0
        %v1358 = vadd.f32 0.0, %v1357
        %1359 = vdwg.mxu0
        %1360 = vmatpush.xpose.msra.mxu0 %v1115
        %1361 = vmatpush.xpose.msra.mxu0 %v1114
        %1362 = vmatpush.xpose.msra.mxu0 %v1113
        %1363 = vmatpush.xpose.msra.mxu0 %v1112
        %1364 = vmatpush.xpose.msra.mxu0 %v1111
        %1365 = vmatpush.xpose.msra.mxu0 %v1110
        %1366 = vmatpush.xpose.msra.mxu0 %v1109
        %1367 = vmatpush.xpose.msra.mxu0 %v1108
        %1368 = vmatpush.xpose.msra.mxu0 %v1107
        %1369 = vmatpush.xpose.msra.mxu0 %v1106
        %1370 = vmatpush.xpose.msra.mxu0 %v1105
        %1371 = vmatpush.xpose.msra.mxu0 %v1104
        %1372 = vmatpush.xpose.msra.mxu0 %v1103
        %1373 = vmatpush.xpose.msra.mxu0 %v1102
        %1374 = vmatpush.xpose.msra.mxu0 %v1101
        %1375 = vmatpush.xpose.msra.mxu0 %v1100
        %1376 = vmatmul.f32.gmra.mxu0 1.0
        %v1377 = vpop.f32.mrf.mxu0
        %v1378 = vadd.f32 0.0, %v1377
        %1379 = vdwg.mxu0
        %1380 = vmatpush.xpose.msra.mxu0 %v1131
        %1381 = vmatpush.xpose.msra.mxu0 %v1130
        %1382 = vmatpush.xpose.msra.mxu0 %v1129
        %1383 = vmatpush.xpose.msra.mxu0 %v1128
        %1384 = vmatpush.xpose.msra.mxu0 %v1127
        %1385 = vmatpush.xpose.msra.mxu0 %v1126
        %1386 = vmatpush.xpose.msra.mxu0 %v1125
        %1387 = vmatpush.xpose.msra.mxu0 %v1124
        %1388 = vmatpush.xpose.msra.mxu0 %v1123
        %1389 = vmatpush.xpose.msra.mxu0 %v1122
        %1390 = vmatpush.xpose.msra.mxu0 %v1121
        %1391 = vmatpush.xpose.msra.mxu0 %v1120
        %1392 = vmatpush.xpose.msra.mxu0 %v1119
        %1393 = vmatpush.xpose.msra.mxu0 %v1118
        %1394 = vmatpush.xpose.msra.mxu0 %v1117
        %1395 = vmatpush.xpose.msra.mxu0 %v1116
        %1396 = vmatmul.f32.gmra.mxu0 1.0
        %v1397 = vpop.f32.mrf.mxu0
        %v1398 = vadd.f32 0.0, %v1397
        %1399 = vdwg.mxu0
        %1400 = vmatpush.xpose.msra.mxu0 %v1147
        %1401 = vmatpush.xpose.msra.mxu0 %v1146
        %1402 = vmatpush.xpose.msra.mxu0 %v1145
        %1403 = vmatpush.xpose.msra.mxu0 %v1144
        %1404 = vmatpush.xpose.msra.mxu0 %v1143
        %1405 = vmatpush.xpose.msra.mxu0 %v1142
        %1406 = vmatpush.xpose.msra.mxu0 %v1141
        %1407 = vmatpush.xpose.msra.mxu0 %v1140
        %1408 = vmatpush.xpose.msra.mxu0 %v1139
        %1409 = vmatpush.xpose.msra.mxu0 %v1138
        %1410 = vmatpush.xpose.msra.mxu0 %v1137
        %1411 = vmatpush.xpose.msra.mxu0 %v1136
        %1412 = vmatpush.xpose.msra.mxu0 %v1135
        %1413 = vmatpush.xpose.msra.mxu0 %v1134
        %1414 = vmatpush.xpose.msra.mxu0 %v1133
        %1415 = vmatpush.xpose.msra.mxu0 %v1132
        %1416 = vmatmul.f32.gmra.mxu0 1.0
        %v1417 = vpop.f32.mrf.mxu0
        %v1418 = vadd.f32 0.0, %v1417
        %1419 = vdwg.mxu0
        %1420 = vmatpush.xpose.msra.mxu0 %v1163
        %1421 = vmatpush.xpose.msra.mxu0 %v1162
        %1422 = vmatpush.xpose.msra.mxu0 %v1161
        %1423 = vmatpush.xpose.msra.mxu0 %v1160
        %1424 = vmatpush.xpose.msra.mxu0 %v1159
        %1425 = vmatpush.xpose.msra.mxu0 %v1158
        %1426 = vmatpush.xpose.msra.mxu0 %v1157
        %1427 = vmatpush.xpose.msra.mxu0 %v1156
        %1428 = vmatpush.xpose.msra.mxu0 %v1155
        %1429 = vmatpush.xpose.msra.mxu0 %v1154
        %1430 = vmatpush.xpose.msra.mxu0 %v1153
        %1431 = vmatpush.xpose.msra.mxu0 %v1152
        %1432 = vmatpush.xpose.msra.mxu0 %v1151
        %1433 = vmatpush.xpose.msra.mxu0 %v1150
        %1434 = vmatpush.xpose.msra.mxu0 %v1149
        %1435 = vmatpush.xpose.msra.mxu0 %v1148
        %1436 = vmatmul.f32.gmra.mxu0 1.0
        %v1437 = vpop.f32.mrf.mxu0
        %v1438 = vadd.f32 0.0, %v1437
        %1439 = vdwg.mxu0
        %1440 = vmatpush.xpose.msra.mxu0 %v1179
        %1441 = vmatpush.xpose.msra.mxu0 %v1178
        %1442 = vmatpush.xpose.msra.mxu0 %v1177
        %1443 = vmatpush.xpose.msra.mxu0 %v1176
        %1444 = vmatpush.xpose.msra.mxu0 %v1175
        %1445 = vmatpush.xpose.msra.mxu0 %v1174
        %1446 = vmatpush.xpose.msra.mxu0 %v1173
        %1447 = vmatpush.xpose.msra.mxu0 %v1172
        %1448 = vmatpush.xpose.msra.mxu0 %v1171
        %1449 = vmatpush.xpose.msra.mxu0 %v1170
        %1450 = vmatpush.xpose.msra.mxu0 %v1169
        %1451 = vmatpush.xpose.msra.mxu0 %v1168
        %1452 = vmatpush.xpose.msra.mxu0 %v1167
        %1453 = vmatpush.xpose.msra.mxu0 %v1166
        %1454 = vmatpush.xpose.msra.mxu0 %v1165
        %1455 = vmatpush.xpose.msra.mxu0 %v1164
        %1456 = vmatmul.f32.gmra.mxu0 1.0
        %v1457 = vpop.f32.mrf.mxu0
        %v1458 = vadd.f32 0.0, %v1457
        %1459 = vdwg.mxu0
        %1460 = vmatpush.xpose.msra.mxu0 %v1195
        %1461 = vmatpush.xpose.msra.mxu0 %v1194
        %1462 = vmatpush.xpose.msra.mxu0 %v1193
        %1463 = vmatpush.xpose.msra.mxu0 %v1192
        %1464 = vmatpush.xpose.msra.mxu0 %v1191
        %1465 = vmatpush.xpose.msra.mxu0 %v1190
        %1466 = vmatpush.xpose.msra.mxu0 %v1189
        %1467 = vmatpush.xpose.msra.mxu0 %v1188
        %1468 = vmatpush.xpose.msra.mxu0 %v1187
        %1469 = vmatpush.xpose.msra.mxu0 %v1186
        %1470 = vmatpush.xpose.msra.mxu0 %v1185
        %1471 = vmatpush.xpose.msra.mxu0 %v1184
        %1472 = vmatpush.xpose.msra.mxu0 %v1183
        %1473 = vmatpush.xpose.msra.mxu0 %v1182
        %1474 = vmatpush.xpose.msra.mxu0 %v1181
        %1475 = vmatpush.xpose.msra.mxu0 %v1180
        %1476 = vmatmul.f32.gmra.mxu0 1.0
        %v1477 = vpop.f32.mrf.mxu0
        %v1478 = vadd.f32 0.0, %v1477
        %1479 = vdwg.mxu0
        %1480 = vmatpush.xpose.msra.mxu0 %v1211
        %1481 = vmatpush.xpose.msra.mxu0 %v1210
        %1482 = vmatpush.xpose.msra.mxu0 %v1209
        %1483 = vmatpush.xpose.msra.mxu0 %v1208
        %1484 = vmatpush.xpose.msra.mxu0 %v1207
        %1485 = vmatpush.xpose.msra.mxu0 %v1206
        %1486 = vmatpush.xpose.msra.mxu0 %v1205
        %1487 = vmatpush.xpose.msra.mxu0 %v1204
        %1488 = vmatpush.xpose.msra.mxu0 %v1203
        %1489 = vmatpush.xpose.msra.mxu0 %v1202
        %1490 = vmatpush.xpose.msra.mxu0 %v1201
        %1491 = vmatpush.xpose.msra.mxu0 %v1200
        %1492 = vmatpush.xpose.msra.mxu0 %v1199
        %1493 = vmatpush.xpose.msra.mxu0 %v1198
        %1494 = vmatpush.xpose.msra.mxu0 %v1197
        %1495 = vmatpush.xpose.msra.mxu0 %v1196
        %1496 = vmatmul.f32.gmra.mxu0 1.0
        %v1497 = vpop.f32.mrf.mxu0
        %v1498 = vadd.f32 0.0, %v1497
        %1499 = vdwg.mxu0
        %1500 = vmatpush.xpose.msra.mxu0 %v1227
        %1501 = vmatpush.xpose.msra.mxu0 %v1226
        %1502 = vmatpush.xpose.msra.mxu0 %v1225
        %1503 = vmatpush.xpose.msra.mxu0 %v1224
        %1504 = vmatpush.xpose.msra.mxu0 %v1223
        %1505 = vmatpush.xpose.msra.mxu0 %v1222
        %1506 = vmatpush.xpose.msra.mxu0 %v1221
        %1507 = vmatpush.xpose.msra.mxu0 %v1220
        %1508 = vmatpush.xpose.msra.mxu0 %v1219
        %1509 = vmatpush.xpose.msra.mxu0 %v1218
        %1510 = vmatpush.xpose.msra.mxu0 %v1217
        %1511 = vmatpush.xpose.msra.mxu0 %v1216
        %1512 = vmatpush.xpose.msra.mxu0 %v1215
        %1513 = vmatpush.xpose.msra.mxu0 %v1214
        %1514 = vmatpush.xpose.msra.mxu0 %v1213
        %1515 = vmatpush.xpose.msra.mxu0 %v1212
        %1516 = vmatmul.f32.gmra.mxu0 1.0
        %v1517 = vpop.f32.mrf.mxu0
        %v1518 = vadd.f32 0.0, %v1517
        %1519 = vdwg.mxu0
        %1520 = vmatpush.xpose.msra.mxu0 %v1243
        %1521 = vmatpush.xpose.msra.mxu0 %v1242
        %1522 = vmatpush.xpose.msra.mxu0 %v1241
        %1523 = vmatpush.xpose.msra.mxu0 %v1240
        %1524 = vmatpush.xpose.msra.mxu0 %v1239
        %1525 = vmatpush.xpose.msra.mxu0 %v1238
        %1526 = vmatpush.xpose.msra.mxu0 %v1237
        %1527 = vmatpush.xpose.msra.mxu0 %v1236
        %1528 = vmatpush.xpose.msra.mxu0 %v1235
        %1529 = vmatpush.xpose.msra.mxu0 %v1234
        %1530 = vmatpush.xpose.msra.mxu0 %v1233
        %1531 = vmatpush.xpose.msra.mxu0 %v1232
        %1532 = vmatpush.xpose.msra.mxu0 %v1231
        %1533 = vmatpush.xpose.msra.mxu0 %v1230
        %1534 = vmatpush.xpose.msra.mxu0 %v1229
        %1535 = vmatpush.xpose.msra.mxu0 %v1228
        %1536 = vmatmul.f32.gmra.mxu0 1.0
        %v1537 = vpop.f32.mrf.mxu0
        %v1538 = vadd.f32 0.0, %v1537
        %1539 = vdwg.mxu0
        %1540 = vmatpush.xpose.msra.mxu0 %v1259
        %1541 = vmatpush.xpose.msra.mxu0 %v1258
        %1542 = vmatpush.xpose.msra.mxu0 %v1257
        %1543 = vmatpush.xpose.msra.mxu0 %v1256
        %1544 = vmatpush.xpose.msra.mxu0 %v1255
        %1545 = vmatpush.xpose.msra.mxu0 %v1254
        %1546 = vmatpush.xpose.msra.mxu0 %v1253
        %1547 = vmatpush.xpose.msra.mxu0 %v1252
        %1548 = vmatpush.xpose.msra.mxu0 %v1251
        %1549 = vmatpush.xpose.msra.mxu0 %v1250
        %1550 = vmatpush.xpose.msra.mxu0 %v1249
        %1551 = vmatpush.xpose.msra.mxu0 %v1248
        %1552 = vmatpush.xpose.msra.mxu0 %v1247
        %1553 = vmatpush.xpose.msra.mxu0 %v1246
        %1554 = vmatpush.xpose.msra.mxu0 %v1245
        %1555 = vmatpush.xpose.msra.mxu0 %v1244
        %1556 = vmatmul.f32.gmra.mxu0 1.0
        %v1557 = vpop.f32.mrf.mxu0
        %v1558 = vadd.f32 0.0, %v1557
        %1559 = vdwg.mxu0
        %1560 = vmatpush.xpose.msra.mxu0 %v1275
        %1561 = vmatpush.xpose.msra.mxu0 %v1274
        %1562 = vmatpush.xpose.msra.mxu0 %v1273
        %1563 = vmatpush.xpose.msra.mxu0 %v1272
        %1564 = vmatpush.xpose.msra.mxu0 %v1271
        %1565 = vmatpush.xpose.msra.mxu0 %v1270
        %1566 = vmatpush.xpose.msra.mxu0 %v1269
        %1567 = vmatpush.xpose.msra.mxu0 %v1268
        %1568 = vmatpush.xpose.msra.mxu0 %v1267
        %1569 = vmatpush.xpose.msra.mxu0 %v1266
        %1570 = vmatpush.xpose.msra.mxu0 %v1265
        %1571 = vmatpush.xpose.msra.mxu0 %v1264
        %1572 = vmatpush.xpose.msra.mxu0 %v1263
        %1573 = vmatpush.xpose.msra.mxu0 %v1262
        %1574 = vmatpush.xpose.msra.mxu0 %v1261
        %1575 = vmatpush.xpose.msra.mxu0 %v1260
        %1576 = vmatmul.f32.gmra.mxu0 1.0
        %v1577 = vpop.f32.mrf.mxu0
        %v1578 = vadd.f32 0.0, %v1577
        %1579 = vdwg.mxu0
        %1580 = vmatpush.xpose.msra.mxu0 %v1291
        %1581 = vmatpush.xpose.msra.mxu0 %v1290
        %1582 = vmatpush.xpose.msra.mxu0 %v1289
        %1583 = vmatpush.xpose.msra.mxu0 %v1288
        %1584 = vmatpush.xpose.msra.mxu0 %v1287
        %1585 = vmatpush.xpose.msra.mxu0 %v1286
        %1586 = vmatpush.xpose.msra.mxu0 %v1285
        %1587 = vmatpush.xpose.msra.mxu0 %v1284
        %1588 = vmatpush.xpose.msra.mxu0 %v1283
        %1589 = vmatpush.xpose.msra.mxu0 %v1282
        %1590 = vmatpush.xpose.msra.mxu0 %v1281
        %1591 = vmatpush.xpose.msra.mxu0 %v1280
        %1592 = vmatpush.xpose.msra.mxu0 %v1279
        %1593 = vmatpush.xpose.msra.mxu0 %v1278
        %1594 = vmatpush.xpose.msra.mxu0 %v1277
        %1595 = vmatpush.xpose.msra.mxu0 %v1276
        %1596 = vmatmul.f32.gmra.mxu0 1.0
        %v1597 = vpop.f32.mrf.mxu0
        %v1598 = vadd.f32 0.0, %v1597
        %1599 = vdwg.mxu0
        %1600 = vmatpush.xpose.msra.mxu0 %v1307
        %1601 = vmatpush.xpose.msra.mxu0 %v1306
        %1602 = vmatpush.xpose.msra.mxu0 %v1305
        %1603 = vmatpush.xpose.msra.mxu0 %v1304
        %1604 = vmatpush.xpose.msra.mxu0 %v1303
        %1605 = vmatpush.xpose.msra.mxu0 %v1302
        %1606 = vmatpush.xpose.msra.mxu0 %v1301
        %1607 = vmatpush.xpose.msra.mxu0 %v1300
        %1608 = vmatpush.xpose.msra.mxu0 %v1299
        %1609 = vmatpush.xpose.msra.mxu0 %v1298
        %1610 = vmatpush.xpose.msra.mxu0 %v1297
        %1611 = vmatpush.xpose.msra.mxu0 %v1296
        %1612 = vmatpush.xpose.msra.mxu0 %v1295
        %1613 = vmatpush.xpose.msra.mxu0 %v1294
        %1614 = vmatpush.xpose.msra.mxu0 %v1293
        %1615 = vmatpush.xpose.msra.mxu0 %v1292
        %1616 = vmatmul.f32.gmra.mxu0 1.0
        %v1617 = vpop.f32.mrf.mxu0
        %v1618 = vadd.f32 0.0, %v1617
        %1619 = vdwg.mxu0
        %1620 = vmatpush.xpose.msra.mxu0 %v1323
        %1621 = vmatpush.xpose.msra.mxu0 %v1322
        %1622 = vmatpush.xpose.msra.mxu0 %v1321
        %1623 = vmatpush.xpose.msra.mxu0 %v1320
        %1624 = vmatpush.xpose.msra.mxu0 %v1319
        %1625 = vmatpush.xpose.msra.mxu0 %v1318
        %1626 = vmatpush.xpose.msra.mxu0 %v1317
        %1627 = vmatpush.xpose.msra.mxu0 %v1316
        %1628 = vmatpush.xpose.msra.mxu0 %v1315
        %1629 = vmatpush.xpose.msra.mxu0 %v1314
        %1630 = vmatpush.xpose.msra.mxu0 %v1313
        %1631 = vmatpush.xpose.msra.mxu0 %v1312
        %1632 = vmatpush.xpose.msra.mxu0 %v1311
        %1633 = vmatpush.xpose.msra.mxu0 %v1310
        %1634 = vmatpush.xpose.msra.mxu0 %v1309
        %1635 = vmatpush.xpose.msra.mxu0 %v1308
        %1636 = vmatmul.f32.gmra.mxu0 1.0
        %v1637 = vpop.f32.mrf.mxu0
        %v1638 = vadd.f32 0.0, %v1637
        %1639 = vdwg.mxu0
        %1640 = vmatpush.xpose.msra.mxu0 %v1339
        %1641 = vmatpush.xpose.msra.mxu0 %v1338
        %1642 = vmatpush.xpose.msra.mxu0 %v1337
        %1643 = vmatpush.xpose.msra.mxu0 %v1336
        %1644 = vmatpush.xpose.msra.mxu0 %v1335
        %1645 = vmatpush.xpose.msra.mxu0 %v1334
        %1646 = vmatpush.xpose.msra.mxu0 %v1333
        %1647 = vmatpush.xpose.msra.mxu0 %v1332
        %1648 = vmatpush.xpose.msra.mxu0 %v1331
        %1649 = vmatpush.xpose.msra.mxu0 %v1330
        %1650 = vmatpush.xpose.msra.mxu0 %v1329
        %1651 = vmatpush.xpose.msra.mxu0 %v1328
        %1652 = vmatpush.xpose.msra.mxu0 %v1327
        %1653 = vmatpush.xpose.msra.mxu0 %v1326
        %1654 = vmatpush.xpose.msra.mxu0 %v1325
        %1655 = vmatpush.xpose.msra.mxu0 %v1324
        %1656 = vmatmul.f32.gmra.mxu0 1.0
        %v1657 = vpop.f32.mrf.mxu0
        %v1658 = vadd.f32 0.0, %v1657
        %1659 = vdwg.mxu0
        %v1660 = vmax.f32 %v1358, 1e-24
        %v1661 = vmax.f32 %v1378, 1e-24
        %v1662 = vmax.f32 %v1398, 1e-24
        %v1663 = vmax.f32 %v1418, 1e-24
        %v1664 = vmax.f32 %v1438, 1e-24
        %v1665 = vmax.f32 %v1458, 1e-24
        %v1666 = vmax.f32 %v1478, 1e-24
        %v1667 = vmax.f32 %v1498, 1e-24
        %v1668 = vmax.f32 %v1518, 1e-24
        %v1669 = vmax.f32 %v1538, 1e-24
        %v1670 = vmax.f32 %v1558, 1e-24
        %v1671 = vmax.f32 %v1578, 1e-24
        %v1672 = vmax.f32 %v1598, 1e-24
        %v1673 = vmax.f32 %v1618, 1e-24
        %v1674 = vmax.f32 %v1638, 1e-24
        %v1675 = vmax.f32 %v1658, 1e-24
        %v1676 = vrsqrt.pop %v1660
        %v1677 = vmul.f32 %v1676, %v1660
        %v1678 = vmul.f32 %v1677, %v1676
        %v1679 = vmul.f32 0.5, %v1678
        %v1680 = vsub.f32 1.5, %v1679
        %v1681 = vmul.f32 %v1676, %v1680
        %vm1682 = vweird.f32 %v1660
        %vm1683 = vweird.f32 %v1676
        %vm1684 = vmor %vm1682, %vm1683
        %v1685 = vsel %vm1684, %v1676, %v1681
        %v1686 = vrsqrt.pop %v1661
        %v1687 = vmul.f32 %v1686, %v1661
        %v1688 = vmul.f32 %v1687, %v1686
        %v1689 = vmul.f32 0.5, %v1688
        %v1690 = vsub.f32 1.5, %v1689
        %v1691 = vmul.f32 %v1686, %v1690
        %vm1692 = vweird.f32 %v1661
        %vm1693 = vweird.f32 %v1686
        %vm1694 = vmor %vm1692, %vm1693
        %v1695 = vsel %vm1694, %v1686, %v1691
        %v1696 = vrsqrt.pop %v1662
        %v1697 = vmul.f32 %v1696, %v1662
        %v1698 = vmul.f32 %v1697, %v1696
        %v1699 = vmul.f32 0.5, %v1698
        %v1700 = vsub.f32 1.5, %v1699
        %v1701 = vmul.f32 %v1696, %v1700
        %vm1702 = vweird.f32 %v1662
        %vm1703 = vweird.f32 %v1696
        %vm1704 = vmor %vm1702, %vm1703
        %v1705 = vsel %vm1704, %v1696, %v1701
        %v1706 = vrsqrt.pop %v1663
        %v1707 = vmul.f32 %v1706, %v1663
        %v1708 = vmul.f32 %v1707, %v1706
        %v1709 = vmul.f32 0.5, %v1708
        %v1710 = vsub.f32 1.5, %v1709
        %v1711 = vmul.f32 %v1706, %v1710
        %vm1712 = vweird.f32 %v1663
        %vm1713 = vweird.f32 %v1706
        %vm1714 = vmor %vm1712, %vm1713
        %v1715 = vsel %vm1714, %v1706, %v1711
        %v1716 = vrsqrt.pop %v1664
        %v1717 = vmul.f32 %v1716, %v1664
        %v1718 = vmul.f32 %v1717, %v1716
        %v1719 = vmul.f32 0.5, %v1718
        %v1720 = vsub.f32 1.5, %v1719
        %v1721 = vmul.f32 %v1716, %v1720
        %vm1722 = vweird.f32 %v1664
        %vm1723 = vweird.f32 %v1716
        %vm1724 = vmor %vm1722, %vm1723
        %v1725 = vsel %vm1724, %v1716, %v1721
        %v1726 = vrsqrt.pop %v1665
        %v1727 = vmul.f32 %v1726, %v1665
        %v1728 = vmul.f32 %v1727, %v1726
        %v1729 = vmul.f32 0.5, %v1728
        %v1730 = vsub.f32 1.5, %v1729
        %v1731 = vmul.f32 %v1726, %v1730
        %vm1732 = vweird.f32 %v1665
        %vm1733 = vweird.f32 %v1726
        %vm1734 = vmor %vm1732, %vm1733
        %v1735 = vsel %vm1734, %v1726, %v1731
        %v1736 = vrsqrt.pop %v1666
        %v1737 = vmul.f32 %v1736, %v1666
        %v1738 = vmul.f32 %v1737, %v1736
        %v1739 = vmul.f32 0.5, %v1738
        %v1740 = vsub.f32 1.5, %v1739
        %v1741 = vmul.f32 %v1736, %v1740
        %vm1742 = vweird.f32 %v1666
        %vm1743 = vweird.f32 %v1736
        %vm1744 = vmor %vm1742, %vm1743
        %v1745 = vsel %vm1744, %v1736, %v1741
        %v1746 = vrsqrt.pop %v1667
        %v1747 = vmul.f32 %v1746, %v1667
        %v1748 = vmul.f32 %v1747, %v1746
        %v1749 = vmul.f32 0.5, %v1748
        %v1750 = vsub.f32 1.5, %v1749
        %v1751 = vmul.f32 %v1746, %v1750
        %vm1752 = vweird.f32 %v1667
        %vm1753 = vweird.f32 %v1746
        %vm1754 = vmor %vm1752, %vm1753
        %v1755 = vsel %vm1754, %v1746, %v1751
        %v1756 = vrsqrt.pop %v1668
        %v1757 = vmul.f32 %v1756, %v1668
        %v1758 = vmul.f32 %v1757, %v1756
        %v1759 = vmul.f32 0.5, %v1758
        %v1760 = vsub.f32 1.5, %v1759
        %v1761 = vmul.f32 %v1756, %v1760
        %vm1762 = vweird.f32 %v1668
        %vm1763 = vweird.f32 %v1756
        %vm1764 = vmor %vm1762, %vm1763
        %v1765 = vsel %vm1764, %v1756, %v1761
        %v1766 = vrsqrt.pop %v1669
        %v1767 = vmul.f32 %v1766, %v1669
        %v1768 = vmul.f32 %v1767, %v1766
        %v1769 = vmul.f32 0.5, %v1768
        %v1770 = vsub.f32 1.5, %v1769
        %v1771 = vmul.f32 %v1766, %v1770
        %vm1772 = vweird.f32 %v1669
        %vm1773 = vweird.f32 %v1766
        %vm1774 = vmor %vm1772, %vm1773
        %v1775 = vsel %vm1774, %v1766, %v1771
        %v1776 = vrsqrt.pop %v1670
        %v1777 = vmul.f32 %v1776, %v1670
        %v1778 = vmul.f32 %v1777, %v1776
        %v1779 = vmul.f32 0.5, %v1778
        %v1780 = vsub.f32 1.5, %v1779
        %v1781 = vmul.f32 %v1776, %v1780
        %vm1782 = vweird.f32 %v1670
        %vm1783 = vweird.f32 %v1776
        %vm1784 = vmor %vm1782, %vm1783
        %v1785 = vsel %vm1784, %v1776, %v1781
        %v1786 = vrsqrt.pop %v1671
        %v1787 = vmul.f32 %v1786, %v1671
        %v1788 = vmul.f32 %v1787, %v1786
        %v1789 = vmul.f32 0.5, %v1788
        %v1790 = vsub.f32 1.5, %v1789
        %v1791 = vmul.f32 %v1786, %v1790
        %vm1792 = vweird.f32 %v1671
        %vm1793 = vweird.f32 %v1786
        %vm1794 = vmor %vm1792, %vm1793
        %v1795 = vsel %vm1794, %v1786, %v1791
        %v1796 = vrsqrt.pop %v1672
        %v1797 = vmul.f32 %v1796, %v1672
        %v1798 = vmul.f32 %v1797, %v1796
        %v1799 = vmul.f32 0.5, %v1798
        %v1800 = vsub.f32 1.5, %v1799
        %v1801 = vmul.f32 %v1796, %v1800
        %vm1802 = vweird.f32 %v1672
        %vm1803 = vweird.f32 %v1796
        %vm1804 = vmor %vm1802, %vm1803
        %v1805 = vsel %vm1804, %v1796, %v1801
        %v1806 = vrsqrt.pop %v1673
        %v1807 = vmul.f32 %v1806, %v1673
        %v1808 = vmul.f32 %v1807, %v1806
        %v1809 = vmul.f32 0.5, %v1808
        %v1810 = vsub.f32 1.5, %v1809
        %v1811 = vmul.f32 %v1806, %v1810
        %vm1812 = vweird.f32 %v1673
        %vm1813 = vweird.f32 %v1806
        %vm1814 = vmor %vm1812, %vm1813
        %v1815 = vsel %vm1814, %v1806, %v1811
        %v1816 = vrsqrt.pop %v1674
        %v1817 = vmul.f32 %v1816, %v1674
        %v1818 = vmul.f32 %v1817, %v1816
        %v1819 = vmul.f32 0.5, %v1818
        %v1820 = vsub.f32 1.5, %v1819
        %v1821 = vmul.f32 %v1816, %v1820
        %vm1822 = vweird.f32 %v1674
        %vm1823 = vweird.f32 %v1816
        %vm1824 = vmor %vm1822, %vm1823
        %v1825 = vsel %vm1824, %v1816, %v1821
        %v1826 = vrsqrt.pop %v1675
        %v1827 = vmul.f32 %v1826, %v1675
        %v1828 = vmul.f32 %v1827, %v1826
        %v1829 = vmul.f32 0.5, %v1828
        %v1830 = vsub.f32 1.5, %v1829
        %v1831 = vmul.f32 %v1826, %v1830
        %vm1832 = vweird.f32 %v1675
        %vm1833 = vweird.f32 %v1826
        %vm1834 = vmor %vm1832, %vm1833
        %v1835 = vsel %vm1834, %v1826, %v1831
        %v1836 = vmul.f32 %v782, %v1685
        %v1837 = vmul.f32 %v802, %v1695
        %v1838 = vmul.f32 %v822, %v1705
        %v1839 = vmul.f32 %v842, %v1715
        %v1840 = vmul.f32 %v862, %v1725
        %v1841 = vmul.f32 %v882, %v1735
        %v1842 = vmul.f32 %v902, %v1745
        %v1843 = vmul.f32 %v922, %v1755
        %v1844 = vmul.f32 %v942, %v1765
        %v1845 = vmul.f32 %v962, %v1775
        %v1846 = vmul.f32 %v982, %v1785
        %v1847 = vmul.f32 %v1002, %v1795
        %v1848 = vmul.f32 %v1022, %v1805
        %v1849 = vmul.f32 %v1042, %v1815
        %v1850 = vmul.f32 %v1062, %v1825
        %v1851 = vmul.f32 %v1082, %v1835
        %1853 = vset.pattern.permute.xlu0 0
        %1854 = vperm.xlu0 %1853, %v763
        %v1855 = vpop.permute.xlu0 %1854
        %v1857 = vadd.f32 %v1836, %v1855
        %v1858 = vadd.f32 %v1837, %v1855
        %v1859 = vadd.f32 %v1838, %v1855
        %v1860 = vadd.f32 %v1839, %v1855
        %v1861 = vadd.f32 %v1840, %v1855
        %v1862 = vadd.f32 %v1841, %v1855
        %v1863 = vadd.f32 %v1842, %v1855
        %v1864 = vadd.f32 %v1843, %v1855
        %v1865 = vadd.f32 %v1844, %v1855
        %v1866 = vadd.f32 %v1845, %v1855
        %v1867 = vadd.f32 %v1846, %v1855
        %v1868 = vadd.f32 %v1847, %v1855
        %v1869 = vadd.f32 %v1848, %v1855
        %v1870 = vadd.f32 %v1849, %v1855
        %v1871 = vadd.f32 %v1850, %v1855
        %v1872 = vadd.f32 %v1851, %v1855
        %v1873 = vrot.slane %v1857, 4
        %v1874 = vmax.f32 %v1857, %v1873
        %v1875 = vrot.slane %v1874, 2
        %v1876 = vmax.f32 %v1874, %v1875
        %v1877 = vrot.slane %v1876, 1
        %v1878 = vmax.f32 %v1876, %v1877
        %v1879 = vrot.slane %v1858, 4
        %v1880 = vmax.f32 %v1858, %v1879
        %v1881 = vrot.slane %v1880, 2
        %v1882 = vmax.f32 %v1880, %v1881
        %v1883 = vrot.slane %v1882, 1
        %v1884 = vmax.f32 %v1882, %v1883
        %v1885 = vrot.slane %v1859, 4
        %v1886 = vmax.f32 %v1859, %v1885
        %v1887 = vrot.slane %v1886, 2
        %v1888 = vmax.f32 %v1886, %v1887
        %v1889 = vrot.slane %v1888, 1
        %v1890 = vmax.f32 %v1888, %v1889
        %v1891 = vrot.slane %v1860, 4
        %v1892 = vmax.f32 %v1860, %v1891
        %v1893 = vrot.slane %v1892, 2
        %v1894 = vmax.f32 %v1892, %v1893
        %v1895 = vrot.slane %v1894, 1
        %v1896 = vmax.f32 %v1894, %v1895
        %v1897 = vrot.slane %v1861, 4
        %v1898 = vmax.f32 %v1861, %v1897
        %v1899 = vrot.slane %v1898, 2
        %v1900 = vmax.f32 %v1898, %v1899
        %v1901 = vrot.slane %v1900, 1
        %v1902 = vmax.f32 %v1900, %v1901
        %v1903 = vrot.slane %v1862, 4
        %v1904 = vmax.f32 %v1862, %v1903
        %v1905 = vrot.slane %v1904, 2
        %v1906 = vmax.f32 %v1904, %v1905
        %v1907 = vrot.slane %v1906, 1
        %v1908 = vmax.f32 %v1906, %v1907
        %v1909 = vrot.slane %v1863, 4
        %v1910 = vmax.f32 %v1863, %v1909
        %v1911 = vrot.slane %v1910, 2
        %v1912 = vmax.f32 %v1910, %v1911
        %v1913 = vrot.slane %v1912, 1
        %v1914 = vmax.f32 %v1912, %v1913
        %v1915 = vrot.slane %v1864, 4
        %v1916 = vmax.f32 %v1864, %v1915
        %v1917 = vrot.slane %v1916, 2
        %v1918 = vmax.f32 %v1916, %v1917
        %v1919 = vrot.slane %v1918, 1
        %v1920 = vmax.f32 %v1918, %v1919
        %v1921 = vrot.slane %v1865, 4
        %v1922 = vmax.f32 %v1865, %v1921
        %v1923 = vrot.slane %v1922, 2
        %v1924 = vmax.f32 %v1922, %v1923
        %v1925 = vrot.slane %v1924, 1
        %v1926 = vmax.f32 %v1924, %v1925
        %v1927 = vrot.slane %v1866, 4
        %v1928 = vmax.f32 %v1866, %v1927
        %v1929 = vrot.slane %v1928, 2
        %v1930 = vmax.f32 %v1928, %v1929
        %v1931 = vrot.slane %v1930, 1
        %v1932 = vmax.f32 %v1930, %v1931
        %v1933 = vrot.slane %v1867, 4
        %v1934 = vmax.f32 %v1867, %v1933
        %v1935 = vrot.slane %v1934, 2
        %v1936 = vmax.f32 %v1934, %v1935
        %v1937 = vrot.slane %v1936, 1
        %v1938 = vmax.f32 %v1936, %v1937
        %v1939 = vrot.slane %v1868, 4
        %v1940 = vmax.f32 %v1868, %v1939
        %v1941 = vrot.slane %v1940, 2
        %v1942 = vmax.f32 %v1940, %v1941
        %v1943 = vrot.slane %v1942, 1
        %v1944 = vmax.f32 %v1942, %v1943
        %v1945 = vrot.slane %v1869, 4
        %v1946 = vmax.f32 %v1869, %v1945
        %v1947 = vrot.slane %v1946, 2
        %v1948 = vmax.f32 %v1946, %v1947
        %v1949 = vrot.slane %v1948, 1
        %v1950 = vmax.f32 %v1948, %v1949
        %v1951 = vrot.slane %v1870, 4
        %v1952 = vmax.f32 %v1870, %v1951
        %v1953 = vrot.slane %v1952, 2
        %v1954 = vmax.f32 %v1952, %v1953
        %v1955 = vrot.slane %v1954, 1
        %v1956 = vmax.f32 %v1954, %v1955
        %v1957 = vrot.slane %v1871, 4
        %v1958 = vmax.f32 %v1871, %v1957
        %v1959 = vrot.slane %v1958, 2
        %v1960 = vmax.f32 %v1958, %v1959
        %v1961 = vrot.slane %v1960, 1
        %v1962 = vmax.f32 %v1960, %v1961
        %v1963 = vrot.slane %v1872, 4
        %v1964 = vmax.f32 %v1872, %v1963
        %v1965 = vrot.slane %v1964, 2
        %v1966 = vmax.f32 %v1964, %v1965
        %v1967 = vrot.slane %v1966, 1
        %v1968 = vmax.f32 %v1966, %v1967
        %v1969 = vsub.f32 %v1857, %v1878
        %v1970 = vsub.f32 %v1858, %v1884
        %v1971 = vsub.f32 %v1859, %v1890
        %v1972 = vsub.f32 %v1860, %v1896
        %v1973 = vsub.f32 %v1861, %v1902
        %v1974 = vsub.f32 %v1862, %v1908
        %v1975 = vsub.f32 %v1863, %v1914
        %v1976 = vsub.f32 %v1864, %v1920
        %v1977 = vsub.f32 %v1865, %v1926
        %v1978 = vsub.f32 %v1866, %v1932
        %v1979 = vsub.f32 %v1867, %v1938
        %v1980 = vsub.f32 %v1868, %v1944
        %v1981 = vsub.f32 %v1869, %v1950
        %v1982 = vsub.f32 %v1870, %v1956
        %v1983 = vsub.f32 %v1871, %v1962
        %v1984 = vsub.f32 %v1872, %v1968
        %v1985 = vmul.f32 %v1969, 1.442695
        %v1986 = vpow.pop %v1985
        %v1987 = vmul.f32 %v1970, 1.442695
        %v1988 = vpow.pop %v1987
        %v1989 = vmul.f32 %v1971, 1.442695
        %v1990 = vpow.pop %v1989
        %v1991 = vmul.f32 %v1972, 1.442695
        %v1992 = vpow.pop %v1991
        %v1993 = vmul.f32 %v1973, 1.442695
        %v1994 = vpow.pop %v1993
        %v1995 = vmul.f32 %v1974, 1.442695
        %v1996 = vpow.pop %v1995
        %v1997 = vmul.f32 %v1975, 1.442695
        %v1998 = vpow.pop %v1997
        %v1999 = vmul.f32 %v1976, 1.442695
        %v2000 = vpow.pop %v1999
        %v2001 = vmul.f32 %v1977, 1.442695
        %v2002 = vpow.pop %v2001
        %v2003 = vmul.f32 %v1978, 1.442695
        %v2004 = vpow.pop %v2003
        %v2005 = vmul.f32 %v1979, 1.442695
        %v2006 = vpow.pop %v2005
        %v2007 = vmul.f32 %v1980, 1.442695
        %v2008 = vpow.pop %v2007
        %v2009 = vmul.f32 %v1981, 1.442695
        %v2010 = vpow.pop %v2009
        %v2011 = vmul.f32 %v1982, 1.442695
        %v2012 = vpow.pop %v2011
        %v2013 = vmul.f32 %v1983, 1.442695
        %v2014 = vpow.pop %v2013
        %v2015 = vmul.f32 %v1984, 1.442695
        %v2016 = vpow.pop %v2015
        %v2017 = vrot.slane %v1986, 4
        %v2018 = vadd.f32 %v1986, %v2017
        %v2019 = vrot.slane %v2018, 2
        %v2020 = vadd.f32 %v2018, %v2019
        %v2021 = vrot.slane %v2020, 1
        %v2022 = vadd.f32 %v2020, %v2021
        %v2023 = vrot.slane %v1988, 4
        %v2024 = vadd.f32 %v1988, %v2023
        %v2025 = vrot.slane %v2024, 2
        %v2026 = vadd.f32 %v2024, %v2025
        %v2027 = vrot.slane %v2026, 1
        %v2028 = vadd.f32 %v2026, %v2027
        %v2029 = vrot.slane %v1990, 4
        %v2030 = vadd.f32 %v1990, %v2029
        %v2031 = vrot.slane %v2030, 2
        %v2032 = vadd.f32 %v2030, %v2031
        %v2033 = vrot.slane %v2032, 1
        %v2034 = vadd.f32 %v2032, %v2033
        %v2035 = vrot.slane %v1992, 4
        %v2036 = vadd.f32 %v1992, %v2035
        %v2037 = vrot.slane %v2036, 2
        %v2038 = vadd.f32 %v2036, %v2037
        %v2039 = vrot.slane %v2038, 1
        %v2040 = vadd.f32 %v2038, %v2039
        %v2041 = vrot.slane %v1994, 4
        %v2042 = vadd.f32 %v1994, %v2041
        %v2043 = vrot.slane %v2042, 2
        %v2044 = vadd.f32 %v2042, %v2043
        %v2045 = vrot.slane %v2044, 1
        %v2046 = vadd.f32 %v2044, %v2045
        %v2047 = vrot.slane %v1996, 4
        %v2048 = vadd.f32 %v1996, %v2047
        %v2049 = vrot.slane %v2048, 2
        %v2050 = vadd.f32 %v2048, %v2049
        %v2051 = vrot.slane %v2050, 1
        %v2052 = vadd.f32 %v2050, %v2051
        %v2053 = vrot.slane %v1998, 4
        %v2054 = vadd.f32 %v1998, %v2053
        %v2055 = vrot.slane %v2054, 2
        %v2056 = vadd.f32 %v2054, %v2055
        %v2057 = vrot.slane %v2056, 1
        %v2058 = vadd.f32 %v2056, %v2057
        %v2059 = vrot.slane %v2000, 4
        %v2060 = vadd.f32 %v2000, %v2059
        %v2061 = vrot.slane %v2060, 2
        %v2062 = vadd.f32 %v2060, %v2061
        %v2063 = vrot.slane %v2062, 1
        %v2064 = vadd.f32 %v2062, %v2063
        %v2065 = vrot.slane %v2002, 4
        %v2066 = vadd.f32 %v2002, %v2065
        %v2067 = vrot.slane %v2066, 2
        %v2068 = vadd.f32 %v2066, %v2067
        %v2069 = vrot.slane %v2068, 1
        %v2070 = vadd.f32 %v2068, %v2069
        %v2071 = vrot.slane %v2004, 4
        %v2072 = vadd.f32 %v2004, %v2071
        %v2073 = vrot.slane %v2072, 2
        %v2074 = vadd.f32 %v2072, %v2073
        %v2075 = vrot.slane %v2074, 1
        %v2076 = vadd.f32 %v2074, %v2075
        %v2077 = vrot.slane %v2006, 4
        %v2078 = vadd.f32 %v2006, %v2077
        %v2079 = vrot.slane %v2078, 2
        %v2080 = vadd.f32 %v2078, %v2079
        %v2081 = vrot.slane %v2080, 1
        %v2082 = vadd.f32 %v2080, %v2081
        %v2083 = vrot.slane %v2008, 4
        %v2084 = vadd.f32 %v2008, %v2083
        %v2085 = vrot.slane %v2084, 2
        %v2086 = vadd.f32 %v2084, %v2085
        %v2087 = vrot.slane %v2086, 1
        %v2088 = vadd.f32 %v2086, %v2087
        %v2089 = vrot.slane %v2010, 4
        %v2090 = vadd.f32 %v2010, %v2089
        %v2091 = vrot.slane %v2090, 2
        %v2092 = vadd.f32 %v2090, %v2091
        %v2093 = vrot.slane %v2092, 1
        %v2094 = vadd.f32 %v2092, %v2093
        %v2095 = vrot.slane %v2012, 4
        %v2096 = vadd.f32 %v2012, %v2095
        %v2097 = vrot.slane %v2096, 2
        %v2098 = vadd.f32 %v2096, %v2097
        %v2099 = vrot.slane %v2098, 1
        %v2100 = vadd.f32 %v2098, %v2099
        %v2101 = vrot.slane %v2014, 4
        %v2102 = vadd.f32 %v2014, %v2101
        %v2103 = vrot.slane %v2102, 2
        %v2104 = vadd.f32 %v2102, %v2103
        %v2105 = vrot.slane %v2104, 1
        %v2106 = vadd.f32 %v2104, %v2105
        %v2107 = vrot.slane %v2016, 4
        %v2108 = vadd.f32 %v2016, %v2107
        %v2109 = vrot.slane %v2108, 2
        %v2110 = vadd.f32 %v2108, %v2109
        %v2111 = vrot.slane %v2110, 1
        %v2112 = vadd.f32 %v2110, %v2111
        %v2113 = vrcp.pop %v2022
        %v2114 = vmul.f32 %v2022, %v2113
        %v2115 = vsub.f32 1.0, %v2114
        %v2116 = vmul.f32 %v2113, %v2115
        %v2117 = vadd.f32 %v2113, %v2116
        %vm2118 = vweird.f32 %v2022
        %vm2119 = vweird.f32 %v2113
        %vm2120 = vmor %vm2118, %vm2119
        %v2121 = vsel %vm2120, %v2113, %v2117
        %v2122 = vand.u32 2147483647, %v2022
        %vm2123 = vcmp.eq.f32.partialorder %v2122, 8.507059e+37
        %v2124 = vand.u32 %v2022, 2147483648
        %v2125 = vor.u32 1.1754944e-38, %v2124
        %v2126 = vsel %vm2123, %v2125, %v2121
        %v2127 = vmul.f32 1.0, %v2126
        %v2128 = vrcp.pop %v2028
        %v2129 = vmul.f32 %v2028, %v2128
        %v2130 = vsub.f32 1.0, %v2129
        %v2131 = vmul.f32 %v2128, %v2130
        %v2132 = vadd.f32 %v2128, %v2131
        %vm2133 = vweird.f32 %v2028
        %vm2134 = vweird.f32 %v2128
        %vm2135 = vmor %vm2133, %vm2134
        %v2136 = vsel %vm2135, %v2128, %v2132
        %v2137 = vand.u32 2147483647, %v2028
        %vm2138 = vcmp.eq.f32.partialorder %v2137, 8.507059e+37
        %v2139 = vand.u32 %v2028, 2147483648
        %v2140 = vor.u32 1.1754944e-38, %v2139
        %v2141 = vsel %vm2138, %v2140, %v2136
        %v2142 = vmul.f32 1.0, %v2141
        %v2143 = vrcp.pop %v2034
        %v2144 = vmul.f32 %v2034, %v2143
        %v2145 = vsub.f32 1.0, %v2144
        %v2146 = vmul.f32 %v2143, %v2145
        %v2147 = vadd.f32 %v2143, %v2146
        %vm2148 = vweird.f32 %v2034
        %vm2149 = vweird.f32 %v2143
        %vm2150 = vmor %vm2148, %vm2149
        %v2151 = vsel %vm2150, %v2143, %v2147
        %v2152 = vand.u32 2147483647, %v2034
        %vm2153 = vcmp.eq.f32.partialorder %v2152, 8.507059e+37
        %v2154 = vand.u32 %v2034, 2147483648
        %v2155 = vor.u32 1.1754944e-38, %v2154
        %v2156 = vsel %vm2153, %v2155, %v2151
        %v2157 = vmul.f32 1.0, %v2156
        %v2158 = vrcp.pop %v2040
        %v2159 = vmul.f32 %v2040, %v2158
        %v2160 = vsub.f32 1.0, %v2159
        %v2161 = vmul.f32 %v2158, %v2160
        %v2162 = vadd.f32 %v2158, %v2161
        %vm2163 = vweird.f32 %v2040
        %vm2164 = vweird.f32 %v2158
        %vm2165 = vmor %vm2163, %vm2164
        %v2166 = vsel %vm2165, %v2158, %v2162
        %v2167 = vand.u32 2147483647, %v2040
        %vm2168 = vcmp.eq.f32.partialorder %v2167, 8.507059e+37
        %v2169 = vand.u32 %v2040, 2147483648
        %v2170 = vor.u32 1.1754944e-38, %v2169
        %v2171 = vsel %vm2168, %v2170, %v2166
        %v2172 = vmul.f32 1.0, %v2171
        %v2173 = vrcp.pop %v2046
        %v2174 = vmul.f32 %v2046, %v2173
        %v2175 = vsub.f32 1.0, %v2174
        %v2176 = vmul.f32 %v2173, %v2175
        %v2177 = vadd.f32 %v2173, %v2176
        %vm2178 = vweird.f32 %v2046
        %vm2179 = vweird.f32 %v2173
        %vm2180 = vmor %vm2178, %vm2179
        %v2181 = vsel %vm2180, %v2173, %v2177
        %v2182 = vand.u32 2147483647, %v2046
        %vm2183 = vcmp.eq.f32.partialorder %v2182, 8.507059e+37
        %v2184 = vand.u32 %v2046, 2147483648
        %v2185 = vor.u32 1.1754944e-38, %v2184
        %v2186 = vsel %vm2183, %v2185, %v2181
        %v2187 = vmul.f32 1.0, %v2186
        %v2188 = vrcp.pop %v2052
        %v2189 = vmul.f32 %v2052, %v2188
        %v2190 = vsub.f32 1.0, %v2189
        %v2191 = vmul.f32 %v2188, %v2190
        %v2192 = vadd.f32 %v2188, %v2191
        %vm2193 = vweird.f32 %v2052
        %vm2194 = vweird.f32 %v2188
        %vm2195 = vmor %vm2193, %vm2194
        %v2196 = vsel %vm2195, %v2188, %v2192
        %v2197 = vand.u32 2147483647, %v2052
        %vm2198 = vcmp.eq.f32.partialorder %v2197, 8.507059e+37
        %v2199 = vand.u32 %v2052, 2147483648
        %v2200 = vor.u32 1.1754944e-38, %v2199
        %v2201 = vsel %vm2198, %v2200, %v2196
        %v2202 = vmul.f32 1.0, %v2201
        %v2203 = vrcp.pop %v2058
        %v2204 = vmul.f32 %v2058, %v2203
        %v2205 = vsub.f32 1.0, %v2204
        %v2206 = vmul.f32 %v2203, %v2205
        %v2207 = vadd.f32 %v2203, %v2206
        %vm2208 = vweird.f32 %v2058
        %vm2209 = vweird.f32 %v2203
        %vm2210 = vmor %vm2208, %vm2209
        %v2211 = vsel %vm2210, %v2203, %v2207
        %v2212 = vand.u32 2147483647, %v2058
        %vm2213 = vcmp.eq.f32.partialorder %v2212, 8.507059e+37
        %v2214 = vand.u32 %v2058, 2147483648
        %v2215 = vor.u32 1.1754944e-38, %v2214
        %v2216 = vsel %vm2213, %v2215, %v2211
        %v2217 = vmul.f32 1.0, %v2216
        %v2218 = vrcp.pop %v2064
        %v2219 = vmul.f32 %v2064, %v2218
        %v2220 = vsub.f32 1.0, %v2219
        %v2221 = vmul.f32 %v2218, %v2220
        %v2222 = vadd.f32 %v2218, %v2221
        %vm2223 = vweird.f32 %v2064
        %vm2224 = vweird.f32 %v2218
        %vm2225 = vmor %vm2223, %vm2224
        %v2226 = vsel %vm2225, %v2218, %v2222
        %v2227 = vand.u32 2147483647, %v2064
        %vm2228 = vcmp.eq.f32.partialorder %v2227, 8.507059e+37
        %v2229 = vand.u32 %v2064, 2147483648
        %v2230 = vor.u32 1.1754944e-38, %v2229
        %v2231 = vsel %vm2228, %v2230, %v2226
        %v2232 = vmul.f32 1.0, %v2231
        %v2233 = vrcp.pop %v2070
        %v2234 = vmul.f32 %v2070, %v2233
        %v2235 = vsub.f32 1.0, %v2234
        %v2236 = vmul.f32 %v2233, %v2235
        %v2237 = vadd.f32 %v2233, %v2236
        %vm2238 = vweird.f32 %v2070
        %vm2239 = vweird.f32 %v2233
        %vm2240 = vmor %vm2238, %vm2239
        %v2241 = vsel %vm2240, %v2233, %v2237
        %v2242 = vand.u32 2147483647, %v2070
        %vm2243 = vcmp.eq.f32.partialorder %v2242, 8.507059e+37
        %v2244 = vand.u32 %v2070, 2147483648
        %v2245 = vor.u32 1.1754944e-38, %v2244
        %v2246 = vsel %vm2243, %v2245, %v2241
        %v2247 = vmul.f32 1.0, %v2246
        %v2248 = vrcp.pop %v2076
        %v2249 = vmul.f32 %v2076, %v2248
        %v2250 = vsub.f32 1.0, %v2249
        %v2251 = vmul.f32 %v2248, %v2250
        %v2252 = vadd.f32 %v2248, %v2251
        %vm2253 = vweird.f32 %v2076
        %vm2254 = vweird.f32 %v2248
        %vm2255 = vmor %vm2253, %vm2254
        %v2256 = vsel %vm2255, %v2248, %v2252
        %v2257 = vand.u32 2147483647, %v2076
        %vm2258 = vcmp.eq.f32.partialorder %v2257, 8.507059e+37
        %v2259 = vand.u32 %v2076, 2147483648
        %v2260 = vor.u32 1.1754944e-38, %v2259
        %v2261 = vsel %vm2258, %v2260, %v2256
        %v2262 = vmul.f32 1.0, %v2261
        %v2263 = vrcp.pop %v2082
        %v2264 = vmul.f32 %v2082, %v2263
        %v2265 = vsub.f32 1.0, %v2264
        %v2266 = vmul.f32 %v2263, %v2265
        %v2267 = vadd.f32 %v2263, %v2266
        %vm2268 = vweird.f32 %v2082
        %vm2269 = vweird.f32 %v2263
        %vm2270 = vmor %vm2268, %vm2269
        %v2271 = vsel %vm2270, %v2263, %v2267
        %v2272 = vand.u32 2147483647, %v2082
        %vm2273 = vcmp.eq.f32.partialorder %v2272, 8.507059e+37
        %v2274 = vand.u32 %v2082, 2147483648
        %v2275 = vor.u32 1.1754944e-38, %v2274
        %v2276 = vsel %vm2273, %v2275, %v2271
        %v2277 = vmul.f32 1.0, %v2276
        %v2278 = vrcp.pop %v2088
        %v2279 = vmul.f32 %v2088, %v2278
        %v2280 = vsub.f32 1.0, %v2279
        %v2281 = vmul.f32 %v2278, %v2280
        %v2282 = vadd.f32 %v2278, %v2281
        %vm2283 = vweird.f32 %v2088
        %vm2284 = vweird.f32 %v2278
        %vm2285 = vmor %vm2283, %vm2284
        %v2286 = vsel %vm2285, %v2278, %v2282
        %v2287 = vand.u32 2147483647, %v2088
        %vm2288 = vcmp.eq.f32.partialorder %v2287, 8.507059e+37
        %v2289 = vand.u32 %v2088, 2147483648
        %v2290 = vor.u32 1.1754944e-38, %v2289
        %v2291 = vsel %vm2288, %v2290, %v2286
        %v2292 = vmul.f32 1.0, %v2291
        %v2293 = vrcp.pop %v2094
        %v2294 = vmul.f32 %v2094, %v2293
        %v2295 = vsub.f32 1.0, %v2294
        %v2296 = vmul.f32 %v2293, %v2295
        %v2297 = vadd.f32 %v2293, %v2296
        %vm2298 = vweird.f32 %v2094
        %vm2299 = vweird.f32 %v2293
        %vm2300 = vmor %vm2298, %vm2299
        %v2301 = vsel %vm2300, %v2293, %v2297
        %v2302 = vand.u32 2147483647, %v2094
        %vm2303 = vcmp.eq.f32.partialorder %v2302, 8.507059e+37
        %v2304 = vand.u32 %v2094, 2147483648
        %v2305 = vor.u32 1.1754944e-38, %v2304
        %v2306 = vsel %vm2303, %v2305, %v2301
        %v2307 = vmul.f32 1.0, %v2306
        %v2308 = vrcp.pop %v2100
        %v2309 = vmul.f32 %v2100, %v2308
        %v2310 = vsub.f32 1.0, %v2309
        %v2311 = vmul.f32 %v2308, %v2310
        %v2312 = vadd.f32 %v2308, %v2311
        %vm2313 = vweird.f32 %v2100
        %vm2314 = vweird.f32 %v2308
        %vm2315 = vmor %vm2313, %vm2314
        %v2316 = vsel %vm2315, %v2308, %v2312
        %v2317 = vand.u32 2147483647, %v2100
        %vm2318 = vcmp.eq.f32.partialorder %v2317, 8.507059e+37
        %v2319 = vand.u32 %v2100, 2147483648
        %v2320 = vor.u32 1.1754944e-38, %v2319
        %v2321 = vsel %vm2318, %v2320, %v2316
        %v2322 = vmul.f32 1.0, %v2321
        %v2323 = vrcp.pop %v2106
        %v2324 = vmul.f32 %v2106, %v2323
        %v2325 = vsub.f32 1.0, %v2324
        %v2326 = vmul.f32 %v2323, %v2325
        %v2327 = vadd.f32 %v2323, %v2326
        %vm2328 = vweird.f32 %v2106
        %vm2329 = vweird.f32 %v2323
        %vm2330 = vmor %vm2328, %vm2329
        %v2331 = vsel %vm2330, %v2323, %v2327
        %v2332 = vand.u32 2147483647, %v2106
        %vm2333 = vcmp.eq.f32.partialorder %v2332, 8.507059e+37
        %v2334 = vand.u32 %v2106, 2147483648
        %v2335 = vor.u32 1.1754944e-38, %v2334
        %v2336 = vsel %vm2333, %v2335, %v2331
        %v2337 = vmul.f32 1.0, %v2336
        %v2338 = vrcp.pop %v2112
        %v2339 = vmul.f32 %v2112, %v2338
        %v2340 = vsub.f32 1.0, %v2339
        %v2341 = vmul.f32 %v2338, %v2340
        %v2342 = vadd.f32 %v2338, %v2341
        %vm2343 = vweird.f32 %v2112
        %vm2344 = vweird.f32 %v2338
        %vm2345 = vmor %vm2343, %vm2344
        %v2346 = vsel %vm2345, %v2338, %v2342
        %v2347 = vand.u32 2147483647, %v2112
        %vm2348 = vcmp.eq.f32.partialorder %v2347, 8.507059e+37
        %v2349 = vand.u32 %v2112, 2147483648
        %v2350 = vor.u32 1.1754944e-38, %v2349
        %v2351 = vsel %vm2348, %v2350, %v2346
        %v2352 = vmul.f32 1.0, %v2351
        %v2353 = vmul.f32 %v1986, %v2127
        %v2354 = vmul.f32 %v1988, %v2142
        %v2355 = vmul.f32 %v1990, %v2157
        %v2356 = vmul.f32 %v1992, %v2172
        %v2357 = vmul.f32 %v1994, %v2187
        %v2358 = vmul.f32 %v1996, %v2202
        %v2359 = vmul.f32 %v1998, %v2217
        %v2360 = vmul.f32 %v2000, %v2232
        %v2361 = vmul.f32 %v2002, %v2247
        %v2362 = vmul.f32 %v2004, %v2262
        %v2363 = vmul.f32 %v2006, %v2277
        %v2364 = vmul.f32 %v2008, %v2292
        %v2365 = vmul.f32 %v2010, %v2307
        %v2366 = vmul.f32 %v2012, %v2322
        %v2367 = vmul.f32 %v2014, %v2337
        %v2368 = vmul.f32 %v2016, %v2352
        %v2369 = vmul.f32 %v2353, %v1685
        %v2370 = vmul.f32 %v2354, %v1695
        %v2371 = vmul.f32 %v2355, %v1705
        %v2372 = vmul.f32 %v2356, %v1715
        %v2373 = vmul.f32 %v2357, %v1725
        %v2374 = vmul.f32 %v2358, %v1735
        %v2375 = vmul.f32 %v2359, %v1745
        %v2376 = vmul.f32 %v2360, %v1755
        %v2377 = vmul.f32 %v2361, %v1765
        %v2378 = vmul.f32 %v2362, %v1775
        %v2379 = vmul.f32 %v2363, %v1785
        %v2380 = vmul.f32 %v2364, %v1795
        %v2381 = vmul.f32 %v2365, %v1805
        %v2382 = vmul.f32 %v2366, %v1815
        %v2383 = vmul.f32 %v2367, %v1825
        %v2384 = vmul.f32 %v2368, %v1835
        %s2385 = smul.u32 %s24, 2
        %s2386 = sadd.s32 %s2385, %s25
        %s2387 = smul.u32 %s2386, 2048
        %s2388 = sadd.s32 %s2387, 2048
        %p2389 = scmp.le.s32.totalorder %s2388, 2500
        // Predicated region
        $region41: #{tpu_custom_call.1} parent=31 // pred_check
          %p2390 = pneg %p2389
        $region42: #{tpu_custom_call.1} parent=31 // pred_check_branch
          %2392 = sbr.rel (%p2390) target = $region44
        $region43: #{tpu_custom_call.1} parent=31 // pred_region
          %v2393 = vld [vmem:[#allocation2] sm:$0xff]
          %2394 = vmatpush.msra.mxu0 %v521
          %2395 = vmatpush.msra.mxu0 %v520
          %2396 = vmatpush.msra.mxu0 %v519
          %2397 = vmatpush.msra.mxu0 %v518
          %2398 = vmatpush.msra.mxu0 %v517
          %2399 = vmatpush.msra.mxu0 %v516
          %2400 = vmatpush.msra.mxu0 %v515
          %2401 = vmatpush.msra.mxu0 %v514
          %2402 = vmatpush.msra.mxu0 %v513
          %2403 = vmatpush.msra.mxu0 %v512
          %2404 = vmatpush.msra.mxu0 %v511
          %2405 = vmatpush.msra.mxu0 %v510
          %2406 = vmatpush.msra.mxu0 %v509
          %2407 = vmatpush.msra.mxu0 %v508
          %2408 = vmatpush.msra.mxu0 %v507
          %2409 = vmatpush.msra.mxu0 %v506
          %2410 = vmatmul.f32.gmra.mxu0 %v2369
          %v2411 = vpop.f32.mrf.mxu0
          %v2412 = vadd.f32 0.0, %v2411
          %2413 = vdwg.mxu0
          %2414 = vmatpush.msra.mxu0 %v537
          %2415 = vmatpush.msra.mxu0 %v536
          %2416 = vmatpush.msra.mxu0 %v535
          %2417 = vmatpush.msra.mxu0 %v534
          %2418 = vmatpush.msra.mxu0 %v533
          %2419 = vmatpush.msra.mxu0 %v532
          %2420 = vmatpush.msra.mxu0 %v531
          %2421 = vmatpush.msra.mxu0 %v530
          %2422 = vmatpush.msra.mxu0 %v529
          %2423 = vmatpush.msra.mxu0 %v528
          %2424 = vmatpush.msra.mxu0 %v527
          %2425 = vmatpush.msra.mxu0 %v526
          %2426 = vmatpush.msra.mxu0 %v525
          %2427 = vmatpush.msra.mxu0 %v524
          %2428 = vmatpush.msra.mxu0 %v523
          %2429 = vmatpush.msra.mxu0 %v522
          %2430 = vmatmul.f32.gmra.mxu0 %v2370
          %v2431 = vpop.f32.mrf.mxu0
          %v2432 = vadd.f32 %v2412, %v2431
          %2433 = vdwg.mxu0
          %2434 = vmatpush.msra.mxu0 %v553
          %2435 = vmatpush.msra.mxu0 %v552
          %2436 = vmatpush.msra.mxu0 %v551
          %2437 = vmatpush.msra.mxu0 %v550
          %2438 = vmatpush.msra.mxu0 %v549
          %2439 = vmatpush.msra.mxu0 %v548
          %2440 = vmatpush.msra.mxu0 %v547
          %2441 = vmatpush.msra.mxu0 %v546
          %2442 = vmatpush.msra.mxu0 %v545
          %2443 = vmatpush.msra.mxu0 %v544
          %2444 = vmatpush.msra.mxu0 %v543
          %2445 = vmatpush.msra.mxu0 %v542
          %2446 = vmatpush.msra.mxu0 %v541
          %2447 = vmatpush.msra.mxu0 %v540
          %2448 = vmatpush.msra.mxu0 %v539
          %2449 = vmatpush.msra.mxu0 %v538
          %2450 = vmatmul.f32.gmra.mxu0 %v2371
          %v2451 = vpop.f32.mrf.mxu0
          %v2452 = vadd.f32 %v2432, %v2451
          %2453 = vdwg.mxu0
          %2454 = vmatpush.msra.mxu0 %v569
          %2455 = vmatpush.msra.mxu0 %v568
          %2456 = vmatpush.msra.mxu0 %v567
          %2457 = vmatpush.msra.mxu0 %v566
          %2458 = vmatpush.msra.mxu0 %v565
          %2459 = vmatpush.msra.mxu0 %v564
          %2460 = vmatpush.msra.mxu0 %v563
          %2461 = vmatpush.msra.mxu0 %v562
          %2462 = vmatpush.msra.mxu0 %v561
          %2463 = vmatpush.msra.mxu0 %v560
          %2464 = vmatpush.msra.mxu0 %v559
          %2465 = vmatpush.msra.mxu0 %v558
          %2466 = vmatpush.msra.mxu0 %v557
          %2467 = vmatpush.msra.mxu0 %v556
          %2468 = vmatpush.msra.mxu0 %v555
          %2469 = vmatpush.msra.mxu0 %v554
          %2470 = vmatmul.f32.gmra.mxu0 %v2372
          %v2471 = vpop.f32.mrf.mxu0
          %v2472 = vadd.f32 %v2452, %v2471
          %2473 = vdwg.mxu0
          %2474 = vmatpush.msra.mxu0 %v585
          %2475 = vmatpush.msra.mxu0 %v584
          %2476 = vmatpush.msra.mxu0 %v583
          %2477 = vmatpush.msra.mxu0 %v582
          %2478 = vmatpush.msra.mxu0 %v581
          %2479 = vmatpush.msra.mxu0 %v580
          %2480 = vmatpush.msra.mxu0 %v579
          %2481 = vmatpush.msra.mxu0 %v578
          %2482 = vmatpush.msra.mxu0 %v577
          %2483 = vmatpush.msra.mxu0 %v576
          %2484 = vmatpush.msra.mxu0 %v575
          %2485 = vmatpush.msra.mxu0 %v574
          %2486 = vmatpush.msra.mxu0 %v573
          %2487 = vmatpush.msra.mxu0 %v572
          %2488 = vmatpush.msra.mxu0 %v571
          %2489 = vmatpush.msra.mxu0 %v570
          %2490 = vmatmul.f32.gmra.mxu0 %v2373
          %v2491 = vpop.f32.mrf.mxu0
          %v2492 = vadd.f32 %v2472, %v2491
          %2493 = vdwg.mxu0
          %2494 = vmatpush.msra.mxu0 %v601
          %2495 = vmatpush.msra.mxu0 %v600
          %2496 = vmatpush.msra.mxu0 %v599
          %2497 = vmatpush.msra.mxu0 %v598
          %2498 = vmatpush.msra.mxu0 %v597
          %2499 = vmatpush.msra.mxu0 %v596
          %2500 = vmatpush.msra.mxu0 %v595
          %2501 = vmatpush.msra.mxu0 %v594
          %2502 = vmatpush.msra.mxu0 %v593
          %2503 = vmatpush.msra.mxu0 %v592
          %2504 = vmatpush.msra.mxu0 %v591
          %2505 = vmatpush.msra.mxu0 %v590
          %2506 = vmatpush.msra.mxu0 %v589
          %2507 = vmatpush.msra.mxu0 %v588
          %2508 = vmatpush.msra.mxu0 %v587
          %2509 = vmatpush.msra.mxu0 %v586
          %2510 = vmatmul.f32.gmra.mxu0 %v2374
          %v2511 = vpop.f32.mrf.mxu0
          %v2512 = vadd.f32 %v2492, %v2511
          %2513 = vdwg.mxu0
          %2514 = vmatpush.msra.mxu0 %v617
          %2515 = vmatpush.msra.mxu0 %v616
          %2516 = vmatpush.msra.mxu0 %v615
          %2517 = vmatpush.msra.mxu0 %v614
          %2518 = vmatpush.msra.mxu0 %v613
          %2519 = vmatpush.msra.mxu0 %v612
          %2520 = vmatpush.msra.mxu0 %v611
          %2521 = vmatpush.msra.mxu0 %v610
          %2522 = vmatpush.msra.mxu0 %v609
          %2523 = vmatpush.msra.mxu0 %v608
          %2524 = vmatpush.msra.mxu0 %v607
          %2525 = vmatpush.msra.mxu0 %v606
          %2526 = vmatpush.msra.mxu0 %v605
          %2527 = vmatpush.msra.mxu0 %v604
          %2528 = vmatpush.msra.mxu0 %v603
          %2529 = vmatpush.msra.mxu0 %v602
          %2530 = vmatmul.f32.gmra.mxu0 %v2375
          %v2531 = vpop.f32.mrf.mxu0
          %v2532 = vadd.f32 %v2512, %v2531
          %2533 = vdwg.mxu0
          %2534 = vmatpush.msra.mxu0 %v633
          %2535 = vmatpush.msra.mxu0 %v632
          %2536 = vmatpush.msra.mxu0 %v631
          %2537 = vmatpush.msra.mxu0 %v630
          %2538 = vmatpush.msra.mxu0 %v629
          %2539 = vmatpush.msra.mxu0 %v628
          %2540 = vmatpush.msra.mxu0 %v627
          %2541 = vmatpush.msra.mxu0 %v626
          %2542 = vmatpush.msra.mxu0 %v625
          %2543 = vmatpush.msra.mxu0 %v624
          %2544 = vmatpush.msra.mxu0 %v623
          %2545 = vmatpush.msra.mxu0 %v622
          %2546 = vmatpush.msra.mxu0 %v621
          %2547 = vmatpush.msra.mxu0 %v620
          %2548 = vmatpush.msra.mxu0 %v619
          %2549 = vmatpush.msra.mxu0 %v618
          %2550 = vmatmul.f32.gmra.mxu0 %v2376
          %v2551 = vpop.f32.mrf.mxu0
          %v2552 = vadd.f32 %v2532, %v2551
          %2553 = vdwg.mxu0
          %2554 = vmatpush.msra.mxu0 %v649
          %2555 = vmatpush.msra.mxu0 %v648
          %2556 = vmatpush.msra.mxu0 %v647
          %2557 = vmatpush.msra.mxu0 %v646
          %2558 = vmatpush.msra.mxu0 %v645
          %2559 = vmatpush.msra.mxu0 %v644
          %2560 = vmatpush.msra.mxu0 %v643
          %2561 = vmatpush.msra.mxu0 %v642
          %2562 = vmatpush.msra.mxu0 %v641
          %2563 = vmatpush.msra.mxu0 %v640
          %2564 = vmatpush.msra.mxu0 %v639
          %2565 = vmatpush.msra.mxu0 %v638
          %2566 = vmatpush.msra.mxu0 %v637
          %2567 = vmatpush.msra.mxu0 %v636
          %2568 = vmatpush.msra.mxu0 %v635
          %2569 = vmatpush.msra.mxu0 %v634
          %2570 = vmatmul.f32.gmra.mxu0 %v2377
          %v2571 = vpop.f32.mrf.mxu0
          %v2572 = vadd.f32 %v2552, %v2571
          %2573 = vdwg.mxu0
          %2574 = vmatpush.msra.mxu0 %v665
          %2575 = vmatpush.msra.mxu0 %v664
          %2576 = vmatpush.msra.mxu0 %v663
          %2577 = vmatpush.msra.mxu0 %v662
          %2578 = vmatpush.msra.mxu0 %v661
          %2579 = vmatpush.msra.mxu0 %v660
          %2580 = vmatpush.msra.mxu0 %v659
          %2581 = vmatpush.msra.mxu0 %v658
          %2582 = vmatpush.msra.mxu0 %v657
          %2583 = vmatpush.msra.mxu0 %v656
          %2584 = vmatpush.msra.mxu0 %v655
          %2585 = vmatpush.msra.mxu0 %v654
          %2586 = vmatpush.msra.mxu0 %v653
          %2587 = vmatpush.msra.mxu0 %v652
          %2588 = vmatpush.msra.mxu0 %v651
          %2589 = vmatpush.msra.mxu0 %v650
          %2590 = vmatmul.f32.gmra.mxu0 %v2378
          %v2591 = vpop.f32.mrf.mxu0
          %v2592 = vadd.f32 %v2572, %v2591
          %2593 = vdwg.mxu0
          %2594 = vmatpush.msra.mxu0 %v681
          %2595 = vmatpush.msra.mxu0 %v680
          %2596 = vmatpush.msra.mxu0 %v679
          %2597 = vmatpush.msra.mxu0 %v678
          %2598 = vmatpush.msra.mxu0 %v677
          %2599 = vmatpush.msra.mxu0 %v676
          %2600 = vmatpush.msra.mxu0 %v675
          %2601 = vmatpush.msra.mxu0 %v674
          %2602 = vmatpush.msra.mxu0 %v673
          %2603 = vmatpush.msra.mxu0 %v672
          %2604 = vmatpush.msra.mxu0 %v671
          %2605 = vmatpush.msra.mxu0 %v670
          %2606 = vmatpush.msra.mxu0 %v669
          %2607 = vmatpush.msra.mxu0 %v668
          %2608 = vmatpush.msra.mxu0 %v667
          %2609 = vmatpush.msra.mxu0 %v666
          %2610 = vmatmul.f32.gmra.mxu0 %v2379
          %v2611 = vpop.f32.mrf.mxu0
          %v2612 = vadd.f32 %v2592, %v2611
          %2613 = vdwg.mxu0
          %2614 = vmatpush.msra.mxu0 %v697
          %2615 = vmatpush.msra.mxu0 %v696
          %2616 = vmatpush.msra.mxu0 %v695
          %2617 = vmatpush.msra.mxu0 %v694
          %2618 = vmatpush.msra.mxu0 %v693
          %2619 = vmatpush.msra.mxu0 %v692
          %2620 = vmatpush.msra.mxu0 %v691
          %2621 = vmatpush.msra.mxu0 %v690
          %2622 = vmatpush.msra.mxu0 %v689
          %2623 = vmatpush.msra.mxu0 %v688
          %2624 = vmatpush.msra.mxu0 %v687
          %2625 = vmatpush.msra.mxu0 %v686
          %2626 = vmatpush.msra.mxu0 %v685
          %2627 = vmatpush.msra.mxu0 %v684
          %2628 = vmatpush.msra.mxu0 %v683
          %2629 = vmatpush.msra.mxu0 %v682
          %2630 = vmatmul.f32.gmra.mxu0 %v2380
          %v2631 = vpop.f32.mrf.mxu0
          %v2632 = vadd.f32 %v2612, %v2631
          %2633 = vdwg.mxu0
          %2634 = vmatpush.msra.mxu0 %v713
          %2635 = vmatpush.msra.mxu0 %v712
          %2636 = vmatpush.msra.mxu0 %v711
          %2637 = vmatpush.msra.mxu0 %v710
          %2638 = vmatpush.msra.mxu0 %v709
          %2639 = vmatpush.msra.mxu0 %v708
          %2640 = vmatpush.msra.mxu0 %v707
          %2641 = vmatpush.msra.mxu0 %v706
          %2642 = vmatpush.msra.mxu0 %v705
          %2643 = vmatpush.msra.mxu0 %v704
          %2644 = vmatpush.msra.mxu0 %v703
          %2645 = vmatpush.msra.mxu0 %v702
          %2646 = vmatpush.msra.mxu0 %v701
          %2647 = vmatpush.msra.mxu0 %v700
          %2648 = vmatpush.msra.mxu0 %v699
          %2649 = vmatpush.msra.mxu0 %v698
          %2650 = vmatmul.f32.gmra.mxu0 %v2381
          %v2651 = vpop.f32.mrf.mxu0
          %v2652 = vadd.f32 %v2632, %v2651
          %2653 = vdwg.mxu0
          %2654 = vmatpush.msra.mxu0 %v729
          %2655 = vmatpush.msra.mxu0 %v728
          %2656 = vmatpush.msra.mxu0 %v727
          %2657 = vmatpush.msra.mxu0 %v726
          %2658 = vmatpush.msra.mxu0 %v725
          %2659 = vmatpush.msra.mxu0 %v724
          %2660 = vmatpush.msra.mxu0 %v723
          %2661 = vmatpush.msra.mxu0 %v722
          %2662 = vmatpush.msra.mxu0 %v721
          %2663 = vmatpush.msra.mxu0 %v720
          %2664 = vmatpush.msra.mxu0 %v719
          %2665 = vmatpush.msra.mxu0 %v718
          %2666 = vmatpush.msra.mxu0 %v717
          %2667 = vmatpush.msra.mxu0 %v716
          %2668 = vmatpush.msra.mxu0 %v715
          %2669 = vmatpush.msra.mxu0 %v714
          %2670 = vmatmul.f32.gmra.mxu0 %v2382
          %v2671 = vpop.f32.mrf.mxu0
          %v2672 = vadd.f32 %v2652, %v2671
          %2673 = vdwg.mxu0
          %2674 = vmatpush.msra.mxu0 %v745
          %2675 = vmatpush.msra.mxu0 %v744
          %2676 = vmatpush.msra.mxu0 %v743
          %2677 = vmatpush.msra.mxu0 %v742
          %2678 = vmatpush.msra.mxu0 %v741
          %2679 = vmatpush.msra.mxu0 %v740
          %2680 = vmatpush.msra.mxu0 %v739
          %2681 = vmatpush.msra.mxu0 %v738
          %2682 = vmatpush.msra.mxu0 %v737
          %2683 = vmatpush.msra.mxu0 %v736
          %2684 = vmatpush.msra.mxu0 %v735
          %2685 = vmatpush.msra.mxu0 %v734
          %2686 = vmatpush.msra.mxu0 %v733
          %2687 = vmatpush.msra.mxu0 %v732
          %2688 = vmatpush.msra.mxu0 %v731
          %2689 = vmatpush.msra.mxu0 %v730
          %2690 = vmatmul.f32.gmra.mxu0 %v2383
          %v2691 = vpop.f32.mrf.mxu0
          %v2692 = vadd.f32 %v2672, %v2691
          %2693 = vdwg.mxu0
          %2694 = vmatpush.msra.mxu0 %v761
          %2695 = vmatpush.msra.mxu0 %v760
          %2696 = vmatpush.msra.mxu0 %v759
          %2697 = vmatpush.msra.mxu0 %v758
          %2698 = vmatpush.msra.mxu0 %v757
          %2699 = vmatpush.msra.mxu0 %v756
          %2700 = vmatpush.msra.mxu0 %v755
          %2701 = vmatpush.msra.mxu0 %v754
          %2702 = vmatpush.msra.mxu0 %v753
          %2703 = vmatpush.msra.mxu0 %v752
          %2704 = vmatpush.msra.mxu0 %v751
          %2705 = vmatpush.msra.mxu0 %v750
          %2706 = vmatpush.msra.mxu0 %v749
          %2707 = vmatpush.msra.mxu0 %v748
          %2708 = vmatpush.msra.mxu0 %v747
          %2709 = vmatpush.msra.mxu0 %v746
          %2710 = vmatmul.f32.gmra.mxu0 %v2384
          %v2711 = vpop.f32.mrf.mxu0
          %v2712 = vadd.f32 %v2692, %v2711
          %2713 = vdwg.mxu0
          %v2714 = vadd.f32 %v2393, %v2712
          %2715 = vst [vmem:[#allocation2] sm:$0xff] %v2714
          %v2716 = vld [vmem:[#allocation3] sm:$0xff]
          %v2717 = vadd.f32 %v2353, %v2354
          %v2718 = vadd.f32 %v2717, %v2355
          %v2719 = vadd.f32 %v2718, %v2356
          %v2720 = vadd.f32 %v2719, %v2357
          %v2721 = vadd.f32 %v2720, %v2358
          %v2722 = vadd.f32 %v2721, %v2359
          %v2723 = vadd.f32 %v2722, %v2360
          %v2724 = vadd.f32 %v2723, %v2361
          %v2725 = vadd.f32 %v2724, %v2362
          %v2726 = vadd.f32 %v2725, %v2363
          %v2727 = vadd.f32 %v2726, %v2364
          %v2728 = vadd.f32 %v2727, %v2365
          %v2729 = vadd.f32 %v2728, %v2366
          %v2730 = vadd.f32 %v2729, %v2367
          %v2731 = vadd.f32 %v2730, %v2368
          %2732 = vadd.xlane.f32.xlu0 %v2731
          %v2733 = vpop.xlane.xlu0 %2732
          %v2734 = vadd.f32 %v2716, %v2733
          %vm2735 = vcmask 7168
          %2736 = vst.msk [vmem:[#allocation3] sm:$0xff] %vm2735, %v2734
        $region44: #{tpu_custom_call.1} parent=31 // pred_fallthru
          _
        %p2737 = scmp.gt.s32.totalorder %s2388, 2500
        // Predicated region
        $region45: #{tpu_custom_call.1} parent=31 // pred_check
          %p2738 = pneg %p2737
        $region46: #{tpu_custom_call.1} parent=31 // pred_check_branch
          %2740 = sbr.rel (%p2738) target = $region48
        $region47: #{tpu_custom_call.1} parent=31 // pred_region
          %v2741 = vlaneseq
          %v2742 = vand.u32 %v2741, 127
          %v2743 = vadd.s32 %v2742, 128
          %v2744 = vadd.s32 %v2742, 256
          %v2745 = vadd.s32 %v2742, 384
          %v2746 = vadd.s32 %v2742, 512
          %v2747 = vadd.s32 %v2742, 640
          %v2748 = vadd.s32 %v2742, 768
          %v2749 = vadd.s32 %v2742, 896
          %v2750 = vadd.s32 %v2742, 1024
          %v2751 = vadd.s32 %v2742, 1152
          %v2752 = vadd.s32 %v2742, 1280
          %v2753 = vadd.s32 %v2742, 1408
          %v2754 = vadd.s32 %v2742, 1536
          %v2755 = vadd.s32 %v2742, 1664
          %v2756 = vadd.s32 %v2742, 1792
          %v2757 = vadd.s32 %v2742, 1920
          %v2758 = vstv %s2387
          %v2759 = vadd.s32 %v2758, %v2742
          %v2760 = vadd.s32 %v2758, %v2743
          %v2761 = vadd.s32 %v2758, %v2744
          %v2762 = vadd.s32 %v2758, %v2745
          %v2763 = vadd.s32 %v2758, %v2746
          %v2764 = vadd.s32 %v2758, %v2747
          %v2765 = vadd.s32 %v2758, %v2748
          %v2766 = vadd.s32 %v2758, %v2749
          %v2767 = vadd.s32 %v2758, %v2750
          %v2768 = vadd.s32 %v2758, %v2751
          %v2769 = vadd.s32 %v2758, %v2752
          %v2770 = vadd.s32 %v2758, %v2753
          %v2771 = vadd.s32 %v2758, %v2754
          %v2772 = vadd.s32 %v2758, %v2755
          %v2773 = vadd.s32 %v2758, %v2756
          %v2774 = vadd.s32 %v2758, %v2757
          %vm2775 = vcmp.lt.s32.totalorder %v2759, 2500
          %vm2776 = vcmp.lt.s32.totalorder %v2760, 2500
          %vm2777 = vcmp.lt.s32.totalorder %v2761, 2500
          %vm2778 = vcmp.lt.s32.totalorder %v2762, 2500
          %vm2779 = vcmp.lt.s32.totalorder %v2763, 2500
          %vm2780 = vcmp.lt.s32.totalorder %v2764, 2500
          %vm2781 = vcmp.lt.s32.totalorder %v2765, 2500
          %vm2782 = vcmp.lt.s32.totalorder %v2766, 2500
          %vm2783 = vcmp.lt.s32.totalorder %v2767, 2500
          %vm2784 = vcmp.lt.s32.totalorder %v2768, 2500
          %vm2785 = vcmp.lt.s32.totalorder %v2769, 2500
          %vm2786 = vcmp.lt.s32.totalorder %v2770, 2500
          %vm2787 = vcmp.lt.s32.totalorder %v2771, 2500
          %vm2788 = vcmp.lt.s32.totalorder %v2772, 2500
          %vm2789 = vcmp.lt.s32.totalorder %v2773, 2500
          %vm2790 = vcmp.lt.s32.totalorder %v2774, 2500
          %v2791 = vsel %vm2775, 1, 0
          %v2792 = vsel %vm2776, 1, 0
          %v2793 = vsel %vm2777, 1, 0
          %v2794 = vsel %vm2778, 1, 0
          %v2795 = vsel %vm2779, 1, 0
          %v2796 = vsel %vm2780, 1, 0
          %v2797 = vsel %vm2781, 1, 0
          %v2798 = vsel %vm2782, 1, 0
          %v2799 = vsel %vm2783, 1, 0
          %v2800 = vsel %vm2784, 1, 0
          %v2801 = vsel %vm2785, 1, 0
          %v2802 = vsel %vm2786, 1, 0
          %v2803 = vsel %vm2787, 1, 0
          %v2804 = vsel %vm2788, 1, 0
          %v2805 = vsel %vm2789, 1, 0
          %v2806 = vsel %vm2790, 1, 0
          %vm2807 = vcmp.eq.s32.totalorder %v2791, 1
          %vm2808 = vcmp.eq.s32.totalorder %v2792, 1
          %vm2809 = vcmp.eq.s32.totalorder %v2793, 1
          %vm2810 = vcmp.eq.s32.totalorder %v2794, 1
          %vm2811 = vcmp.eq.s32.totalorder %v2795, 1
          %vm2812 = vcmp.eq.s32.totalorder %v2796, 1
          %vm2813 = vcmp.eq.s32.totalorder %v2797, 1
          %vm2814 = vcmp.eq.s32.totalorder %v2798, 1
          %vm2815 = vcmp.eq.s32.totalorder %v2799, 1
          %vm2816 = vcmp.eq.s32.totalorder %v2800, 1
          %vm2817 = vcmp.eq.s32.totalorder %v2801, 1
          %vm2818 = vcmp.eq.s32.totalorder %v2802, 1
          %vm2819 = vcmp.eq.s32.totalorder %v2803, 1
          %vm2820 = vcmp.eq.s32.totalorder %v2804, 1
          %vm2821 = vcmp.eq.s32.totalorder %v2805, 1
          %vm2822 = vcmp.eq.s32.totalorder %v2806, 1
          %v2823 = vsel %vm2807, %v2353, 0.0
          %v2824 = vsel %vm2808, %v2354, 0.0
          %v2825 = vsel %vm2809, %v2355, 0.0
          %v2826 = vsel %vm2810, %v2356, 0.0
          %v2827 = vsel %vm2811, %v2357, 0.0
          %v2828 = vsel %vm2812, %v2358, 0.0
          %v2829 = vsel %vm2813, %v2359, 0.0
          %v2830 = vsel %vm2814, %v2360, 0.0
          %v2831 = vsel %vm2815, %v2361, 0.0
          %v2832 = vsel %vm2816, %v2362, 0.0
          %v2833 = vsel %vm2817, %v2363, 0.0
          %v2834 = vsel %vm2818, %v2364, 0.0
          %v2835 = vsel %vm2819, %v2365, 0.0
          %v2836 = vsel %vm2820, %v2366, 0.0
          %v2837 = vsel %vm2821, %v2367, 0.0
          %v2838 = vsel %vm2822, %v2368, 0.0
          %v2839 = vsel %vm2807, %v2369, 0.0
          %v2840 = vsel %vm2808, %v2370, 0.0
          %v2841 = vsel %vm2809, %v2371, 0.0
          %v2842 = vsel %vm2810, %v2372, 0.0
          %v2843 = vsel %vm2811, %v2373, 0.0
          %v2844 = vsel %vm2812, %v2374, 0.0
          %v2845 = vsel %vm2813, %v2375, 0.0
          %v2846 = vsel %vm2814, %v2376, 0.0
          %v2847 = vsel %vm2815, %v2377, 0.0
          %v2848 = vsel %vm2816, %v2378, 0.0
          %v2849 = vsel %vm2817, %v2379, 0.0
          %v2850 = vsel %vm2818, %v2380, 0.0
          %v2851 = vsel %vm2819, %v2381, 0.0
          %v2852 = vsel %vm2820, %v2382, 0.0
          %v2853 = vsel %vm2821, %v2383, 0.0
          %v2854 = vsel %vm2822, %v2384, 0.0
          %v2855 = vld [vmem:[#allocation2] sm:$0xff]
          %2856 = vmatpush.msra.mxu0 %v521
          %2857 = vmatpush.msra.mxu0 %v520
          %2858 = vmatpush.msra.mxu0 %v519
          %2859 = vmatpush.msra.mxu0 %v518
          %2860 = vmatpush.msra.mxu0 %v517
          %2861 = vmatpush.msra.mxu0 %v516
          %2862 = vmatpush.msra.mxu0 %v515
          %2863 = vmatpush.msra.mxu0 %v514
          %2864 = vmatpush.msra.mxu0 %v513
          %2865 = vmatpush.msra.mxu0 %v512
          %2866 = vmatpush.msra.mxu0 %v511
          %2867 = vmatpush.msra.mxu0 %v510
          %2868 = vmatpush.msra.mxu0 %v509
          %2869 = vmatpush.msra.mxu0 %v508
          %2870 = vmatpush.msra.mxu0 %v507
          %2871 = vmatpush.msra.mxu0 %v506
          %2872 = vmatmul.f32.gmra.mxu0 %v2839
          %v2873 = vpop.f32.mrf.mxu0
          %v2874 = vadd.f32 0.0, %v2873
          %2875 = vdwg.mxu0
          %2876 = vmatpush.msra.mxu0 %v537
          %2877 = vmatpush.msra.mxu0 %v536
          %2878 = vmatpush.msra.mxu0 %v535
          %2879 = vmatpush.msra.mxu0 %v534
          %2880 = vmatpush.msra.mxu0 %v533
          %2881 = vmatpush.msra.mxu0 %v532
          %2882 = vmatpush.msra.mxu0 %v531
          %2883 = vmatpush.msra.mxu0 %v530
          %2884 = vmatpush.msra.mxu0 %v529
          %2885 = vmatpush.msra.mxu0 %v528
          %2886 = vmatpush.msra.mxu0 %v527
          %2887 = vmatpush.msra.mxu0 %v526
          %2888 = vmatpush.msra.mxu0 %v525
          %2889 = vmatpush.msra.mxu0 %v524
          %2890 = vmatpush.msra.mxu0 %v523
          %2891 = vmatpush.msra.mxu0 %v522
          %2892 = vmatmul.f32.gmra.mxu0 %v2840
          %v2893 = vpop.f32.mrf.mxu0
          %v2894 = vadd.f32 %v2874, %v2893
          %2895 = vdwg.mxu0
          %2896 = vmatpush.msra.mxu0 %v553
          %2897 = vmatpush.msra.mxu0 %v552
          %2898 = vmatpush.msra.mxu0 %v551
          %2899 = vmatpush.msra.mxu0 %v550
          %2900 = vmatpush.msra.mxu0 %v549
          %2901 = vmatpush.msra.mxu0 %v548
          %2902 = vmatpush.msra.mxu0 %v547
          %2903 = vmatpush.msra.mxu0 %v546
          %2904 = vmatpush.msra.mxu0 %v545
          %2905 = vmatpush.msra.mxu0 %v544
          %2906 = vmatpush.msra.mxu0 %v543
          %2907 = vmatpush.msra.mxu0 %v542
          %2908 = vmatpush.msra.mxu0 %v541
          %2909 = vmatpush.msra.mxu0 %v540
          %2910 = vmatpush.msra.mxu0 %v539
          %2911 = vmatpush.msra.mxu0 %v538
          %2912 = vmatmul.f32.gmra.mxu0 %v2841
          %v2913 = vpop.f32.mrf.mxu0
          %v2914 = vadd.f32 %v2894, %v2913
          %2915 = vdwg.mxu0
          %2916 = vmatpush.msra.mxu0 %v569
          %2917 = vmatpush.msra.mxu0 %v568
          %2918 = vmatpush.msra.mxu0 %v567
          %2919 = vmatpush.msra.mxu0 %v566
          %2920 = vmatpush.msra.mxu0 %v565
          %2921 = vmatpush.msra.mxu0 %v564
          %2922 = vmatpush.msra.mxu0 %v563
          %2923 = vmatpush.msra.mxu0 %v562
          %2924 = vmatpush.msra.mxu0 %v561
          %2925 = vmatpush.msra.mxu0 %v560
          %2926 = vmatpush.msra.mxu0 %v559
          %2927 = vmatpush.msra.mxu0 %v558
          %2928 = vmatpush.msra.mxu0 %v557
          %2929 = vmatpush.msra.mxu0 %v556
          %2930 = vmatpush.msra.mxu0 %v555
          %2931 = vmatpush.msra.mxu0 %v554
          %2932 = vmatmul.f32.gmra.mxu0 %v2842
          %v2933 = vpop.f32.mrf.mxu0
          %v2934 = vadd.f32 %v2914, %v2933
          %2935 = vdwg.mxu0
          %2936 = vmatpush.msra.mxu0 %v585
          %2937 = vmatpush.msra.mxu0 %v584
          %2938 = vmatpush.msra.mxu0 %v583
          %2939 = vmatpush.msra.mxu0 %v582
          %2940 = vmatpush.msra.mxu0 %v581
          %2941 = vmatpush.msra.mxu0 %v580
          %2942 = vmatpush.msra.mxu0 %v579
          %2943 = vmatpush.msra.mxu0 %v578
          %2944 = vmatpush.msra.mxu0 %v577
          %2945 = vmatpush.msra.mxu0 %v576
          %2946 = vmatpush.msra.mxu0 %v575
          %2947 = vmatpush.msra.mxu0 %v574
          %2948 = vmatpush.msra.mxu0 %v573
          %2949 = vmatpush.msra.mxu0 %v572
          %2950 = vmatpush.msra.mxu0 %v571
          %2951 = vmatpush.msra.mxu0 %v570
          %2952 = vmatmul.f32.gmra.mxu0 %v2843
          %v2953 = vpop.f32.mrf.mxu0
          %v2954 = vadd.f32 %v2934, %v2953
          %2955 = vdwg.mxu0
          %2956 = vmatpush.msra.mxu0 %v601
          %2957 = vmatpush.msra.mxu0 %v600
          %2958 = vmatpush.msra.mxu0 %v599
          %2959 = vmatpush.msra.mxu0 %v598
          %2960 = vmatpush.msra.mxu0 %v597
          %2961 = vmatpush.msra.mxu0 %v596
          %2962 = vmatpush.msra.mxu0 %v595
          %2963 = vmatpush.msra.mxu0 %v594
          %2964 = vmatpush.msra.mxu0 %v593
          %2965 = vmatpush.msra.mxu0 %v592
          %2966 = vmatpush.msra.mxu0 %v591
          %2967 = vmatpush.msra.mxu0 %v590
          %2968 = vmatpush.msra.mxu0 %v589
          %2969 = vmatpush.msra.mxu0 %v588
          %2970 = vmatpush.msra.mxu0 %v587
          %2971 = vmatpush.msra.mxu0 %v586
          %2972 = vmatmul.f32.gmra.mxu0 %v2844
          %v2973 = vpop.f32.mrf.mxu0
          %v2974 = vadd.f32 %v2954, %v2973
          %2975 = vdwg.mxu0
          %2976 = vmatpush.msra.mxu0 %v617
          %2977 = vmatpush.msra.mxu0 %v616
          %2978 = vmatpush.msra.mxu0 %v615
          %2979 = vmatpush.msra.mxu0 %v614
          %2980 = vmatpush.msra.mxu0 %v613
          %2981 = vmatpush.msra.mxu0 %v612
          %2982 = vmatpush.msra.mxu0 %v611
          %2983 = vmatpush.msra.mxu0 %v610
          %2984 = vmatpush.msra.mxu0 %v609
          %2985 = vmatpush.msra.mxu0 %v608
          %2986 = vmatpush.msra.mxu0 %v607
          %2987 = vmatpush.msra.mxu0 %v606
          %2988 = vmatpush.msra.mxu0 %v605
          %2989 = vmatpush.msra.mxu0 %v604
          %2990 = vmatpush.msra.mxu0 %v603
          %2991 = vmatpush.msra.mxu0 %v602
          %2992 = vmatmul.f32.gmra.mxu0 %v2845
          %v2993 = vpop.f32.mrf.mxu0
          %v2994 = vadd.f32 %v2974, %v2993
          %2995 = vdwg.mxu0
          %2996 = vmatpush.msra.mxu0 %v633
          %2997 = vmatpush.msra.mxu0 %v632
          %2998 = vmatpush.msra.mxu0 %v631
          %2999 = vmatpush.msra.mxu0 %v630
          %3000 = vmatpush.msra.mxu0 %v629
          %3001 = vmatpush.msra.mxu0 %v628
          %3002 = vmatpush.msra.mxu0 %v627
          %3003 = vmatpush.msra.mxu0 %v626
          %3004 = vmatpush.msra.mxu0 %v625
          %3005 = vmatpush.msra.mxu0 %v624
          %3006 = vmatpush.msra.mxu0 %v623
          %3007 = vmatpush.msra.mxu0 %v622
          %3008 = vmatpush.msra.mxu0 %v621
          %3009 = vmatpush.msra.mxu0 %v620
          %3010 = vmatpush.msra.mxu0 %v619
          %3011 = vmatpush.msra.mxu0 %v618
          %3012 = vmatmul.f32.gmra.mxu0 %v2846
          %v3013 = vpop.f32.mrf.mxu0
          %v3014 = vadd.f32 %v2994, %v3013
          %3015 = vdwg.mxu0
          %3016 = vmatpush.msra.mxu0 %v649
          %3017 = vmatpush.msra.mxu0 %v648
          %3018 = vmatpush.msra.mxu0 %v647
          %3019 = vmatpush.msra.mxu0 %v646
          %3020 = vmatpush.msra.mxu0 %v645
          %3021 = vmatpush.msra.mxu0 %v644
          %3022 = vmatpush.msra.mxu0 %v643
          %3023 = vmatpush.msra.mxu0 %v642
          %3024 = vmatpush.msra.mxu0 %v641
          %3025 = vmatpush.msra.mxu0 %v640
          %3026 = vmatpush.msra.mxu0 %v639
          %3027 = vmatpush.msra.mxu0 %v638
          %3028 = vmatpush.msra.mxu0 %v637
          %3029 = vmatpush.msra.mxu0 %v636
          %3030 = vmatpush.msra.mxu0 %v635
          %3031 = vmatpush.msra.mxu0 %v634
          %3032 = vmatmul.f32.gmra.mxu0 %v2847
          %v3033 = vpop.f32.mrf.mxu0
          %v3034 = vadd.f32 %v3014, %v3033
          %3035 = vdwg.mxu0
          %3036 = vmatpush.msra.mxu0 %v665
          %3037 = vmatpush.msra.mxu0 %v664
          %3038 = vmatpush.msra.mxu0 %v663
          %3039 = vmatpush.msra.mxu0 %v662
          %3040 = vmatpush.msra.mxu0 %v661
          %3041 = vmatpush.msra.mxu0 %v660
          %3042 = vmatpush.msra.mxu0 %v659
          %3043 = vmatpush.msra.mxu0 %v658
          %3044 = vmatpush.msra.mxu0 %v657
          %3045 = vmatpush.msra.mxu0 %v656
          %3046 = vmatpush.msra.mxu0 %v655
          %3047 = vmatpush.msra.mxu0 %v654
          %3048 = vmatpush.msra.mxu0 %v653
          %3049 = vmatpush.msra.mxu0 %v652
          %3050 = vmatpush.msra.mxu0 %v651
          %3051 = vmatpush.msra.mxu0 %v650
          %3052 = vmatmul.f32.gmra.mxu0 %v2848
          %v3053 = vpop.f32.mrf.mxu0
          %v3054 = vadd.f32 %v3034, %v3053
          %3055 = vdwg.mxu0
          %3056 = vmatpush.msra.mxu0 %v681
          %3057 = vmatpush.msra.mxu0 %v680
          %3058 = vmatpush.msra.mxu0 %v679
          %3059 = vmatpush.msra.mxu0 %v678
          %3060 = vmatpush.msra.mxu0 %v677
          %3061 = vmatpush.msra.mxu0 %v676
          %3062 = vmatpush.msra.mxu0 %v675
          %3063 = vmatpush.msra.mxu0 %v674
          %3064 = vmatpush.msra.mxu0 %v673
          %3065 = vmatpush.msra.mxu0 %v672
          %3066 = vmatpush.msra.mxu0 %v671
          %3067 = vmatpush.msra.mxu0 %v670
          %3068 = vmatpush.msra.mxu0 %v669
          %3069 = vmatpush.msra.mxu0 %v668
          %3070 = vmatpush.msra.mxu0 %v667
          %3071 = vmatpush.msra.mxu0 %v666
          %3072 = vmatmul.f32.gmra.mxu0 %v2849
          %v3073 = vpop.f32.mrf.mxu0
          %v3074 = vadd.f32 %v3054, %v3073
          %3075 = vdwg.mxu0
          %3076 = vmatpush.msra.mxu0 %v697
          %3077 = vmatpush.msra.mxu0 %v696
          %3078 = vmatpush.msra.mxu0 %v695
          %3079 = vmatpush.msra.mxu0 %v694
          %3080 = vmatpush.msra.mxu0 %v693
          %3081 = vmatpush.msra.mxu0 %v692
          %3082 = vmatpush.msra.mxu0 %v691
          %3083 = vmatpush.msra.mxu0 %v690
          %3084 = vmatpush.msra.mxu0 %v689
          %3085 = vmatpush.msra.mxu0 %v688
          %3086 = vmatpush.msra.mxu0 %v687
          %3087 = vmatpush.msra.mxu0 %v686
          %3088 = vmatpush.msra.mxu0 %v685
          %3089 = vmatpush.msra.mxu0 %v684
          %3090 = vmatpush.msra.mxu0 %v683
          %3091 = vmatpush.msra.mxu0 %v682
          %3092 = vmatmul.f32.gmra.mxu0 %v2850
          %v3093 = vpop.f32.mrf.mxu0
          %v3094 = vadd.f32 %v3074, %v3093
          %3095 = vdwg.mxu0
          %3096 = vmatpush.msra.mxu0 %v713
          %3097 = vmatpush.msra.mxu0 %v712
          %3098 = vmatpush.msra.mxu0 %v711
          %3099 = vmatpush.msra.mxu0 %v710
          %3100 = vmatpush.msra.mxu0 %v709
          %3101 = vmatpush.msra.mxu0 %v708
          %3102 = vmatpush.msra.mxu0 %v707
          %3103 = vmatpush.msra.mxu0 %v706
          %3104 = vmatpush.msra.mxu0 %v705
          %3105 = vmatpush.msra.mxu0 %v704
          %3106 = vmatpush.msra.mxu0 %v703
          %3107 = vmatpush.msra.mxu0 %v702
          %3108 = vmatpush.msra.mxu0 %v701
          %3109 = vmatpush.msra.mxu0 %v700
          %3110 = vmatpush.msra.mxu0 %v699
          %3111 = vmatpush.msra.mxu0 %v698
          %3112 = vmatmul.f32.gmra.mxu0 %v2851
          %v3113 = vpop.f32.mrf.mxu0
          %v3114 = vadd.f32 %v3094, %v3113
          %3115 = vdwg.mxu0
          %3116 = vmatpush.msra.mxu0 %v729
          %3117 = vmatpush.msra.mxu0 %v728
          %3118 = vmatpush.msra.mxu0 %v727
          %3119 = vmatpush.msra.mxu0 %v726
          %3120 = vmatpush.msra.mxu0 %v725
          %3121 = vmatpush.msra.mxu0 %v724
          %3122 = vmatpush.msra.mxu0 %v723
          %3123 = vmatpush.msra.mxu0 %v722
          %3124 = vmatpush.msra.mxu0 %v721
          %3125 = vmatpush.msra.mxu0 %v720
          %3126 = vmatpush.msra.mxu0 %v719
          %3127 = vmatpush.msra.mxu0 %v718
          %3128 = vmatpush.msra.mxu0 %v717
          %3129 = vmatpush.msra.mxu0 %v716
          %3130 = vmatpush.msra.mxu0 %v715
          %3131 = vmatpush.msra.mxu0 %v714
          %3132 = vmatmul.f32.gmra.mxu0 %v2852
          %v3133 = vpop.f32.mrf.mxu0
          %v3134 = vadd.f32 %v3114, %v3133
          %3135 = vdwg.mxu0
          %3136 = vmatpush.msra.mxu0 %v745
          %3137 = vmatpush.msra.mxu0 %v744
          %3138 = vmatpush.msra.mxu0 %v743
          %3139 = vmatpush.msra.mxu0 %v742
          %3140 = vmatpush.msra.mxu0 %v741
          %3141 = vmatpush.msra.mxu0 %v740
          %3142 = vmatpush.msra.mxu0 %v739
          %3143 = vmatpush.msra.mxu0 %v738
          %3144 = vmatpush.msra.mxu0 %v737
          %3145 = vmatpush.msra.mxu0 %v736
          %3146 = vmatpush.msra.mxu0 %v735
          %3147 = vmatpush.msra.mxu0 %v734
          %3148 = vmatpush.msra.mxu0 %v733
          %3149 = vmatpush.msra.mxu0 %v732
          %3150 = vmatpush.msra.mxu0 %v731
          %3151 = vmatpush.msra.mxu0 %v730
          %3152 = vmatmul.f32.gmra.mxu0 %v2853
          %v3153 = vpop.f32.mrf.mxu0
          %v3154 = vadd.f32 %v3134, %v3153
          %3155 = vdwg.mxu0
          %3156 = vmatpush.msra.mxu0 %v761
          %3157 = vmatpush.msra.mxu0 %v760
          %3158 = vmatpush.msra.mxu0 %v759
          %3159 = vmatpush.msra.mxu0 %v758
          %3160 = vmatpush.msra.mxu0 %v757
          %3161 = vmatpush.msra.mxu0 %v756
          %3162 = vmatpush.msra.mxu0 %v755
          %3163 = vmatpush.msra.mxu0 %v754
          %3164 = vmatpush.msra.mxu0 %v753
          %3165 = vmatpush.msra.mxu0 %v752
          %3166 = vmatpush.msra.mxu0 %v751
          %3167 = vmatpush.msra.mxu0 %v750
          %3168 = vmatpush.msra.mxu0 %v749
          %3169 = vmatpush.msra.mxu0 %v748
          %3170 = vmatpush.msra.mxu0 %v747
          %3171 = vmatpush.msra.mxu0 %v746
          %3172 = vmatmul.f32.gmra.mxu0 %v2854
          %v3173 = vpop.f32.mrf.mxu0
          %v3174 = vadd.f32 %v3154, %v3173
          %3175 = vdwg.mxu0
          %v3176 = vadd.f32 %v2855, %v3174
          %3177 = vst [vmem:[#allocation2] sm:$0xff] %v3176
          %v3178 = vld [vmem:[#allocation3] sm:$0xff]
          %v3179 = vadd.f32 %v2823, %v2824
          %v3180 = vadd.f32 %v3179, %v2825
          %v3181 = vadd.f32 %v3180, %v2826
          %v3182 = vadd.f32 %v3181, %v2827
          %v3183 = vadd.f32 %v3182, %v2828
          %v3184 = vadd.f32 %v3183, %v2829
          %v3185 = vadd.f32 %v3184, %v2830
          %v3186 = vadd.f32 %v3185, %v2831
          %v3187 = vadd.f32 %v3186, %v2832
          %v3188 = vadd.f32 %v3187, %v2833
          %v3189 = vadd.f32 %v3188, %v2834
          %v3190 = vadd.f32 %v3189, %v2835
          %v3191 = vadd.f32 %v3190, %v2836
          %v3192 = vadd.f32 %v3191, %v2837
          %v3193 = vadd.f32 %v3192, %v2838
          %3194 = vadd.xlane.f32.xlu0 %v3193
          %v3195 = vpop.xlane.xlu0 %3194
          %v3196 = vadd.f32 %v3178, %v3195
          %vm3197 = vcmask 7168
          %3198 = vst.msk [vmem:[#allocation3] sm:$0xff] %vm3197, %v3196
        $region48: #{tpu_custom_call.1} parent=31 // pred_fallthru
          _
        %p3199 = scmp.eq.s32.totalorder %s25, 1
        // Predicated region
        $region49: #{tpu_custom_call.1} parent=31 // pred_check
          %p3200 = pneg %p3199
        $region50: #{tpu_custom_call.1} parent=31 // pred_check_branch
          %3202 = sbr.rel (%p3200) target = $region52
        $region51: #{tpu_custom_call.1} parent=31 // pred_region
          %v3203 = vld [vmem:[#allocation2] sm:$0xff]
          %3204 = vst [vmem:[#allocation7] sm:$0xff] %v3203
          %v3205 = vld [vmem:[#allocation3] sm:$0xff]
          %vm3206 = vcmask 7168
          %3207 = vst.msk [vmem:[%s242] sm:$0xff] %vm3206, %v3205
        $region52: #{tpu_custom_call.1} parent=31 // pred_fallthru
          _
        %p3208 = scmp.lt.s32.totalorder %s24, 0
        %s3209 = scalar_select %p3208, %s24, 0
        %s3210 = smul.addr %s3209, 8
        %s3211 = scalar_lea.vmem %s4, %s3210
        // Predicated region
        $region53: #{tpu_custom_call.1} parent=31 // pred_check
          %p3212 = pneg %p122
        $region54: #{tpu_custom_call.1} parent=31 // pred_check_branch
          %3214 = sbr.rel (%p3212) target = $region56
        $region55: #{tpu_custom_call.1} parent=31 // pred_region
          %3216 = vsyncadd [#allocation6], 0
          %s3217 = smul.addr %s24, 8
          %s3218 = scalar_lea.hbm %s3, %s3217
          %s3220 = sshll.u32 [#allocation7], 4
          %s3221 = int_to_ptr.vmem [resolvable:$true] %s3220
          %s3222 = sshll.u32 %s3218, 4
          %s3223 = int_to_ptr.hbm [resolvable:$true] %s3222
          %3225 = dma.vmem_to_hbm [thread:$0]  %s3221, 128, %s3223, [#allocation6]
        $region56: #{tpu_custom_call.1} parent=31 // pred_fallthru
          _
        // Predicated region
        $region57: #{tpu_custom_call.1} parent=31 // pred_check
          %p3226 = pneg %p148
        $region58: #{tpu_custom_call.1} parent=31 // pred_check_branch
          %3228 = sbr.rel (%p3226) target = $region60
        $region59: #{tpu_custom_call.1} parent=31 // pred_region
          _
        $region60: #{tpu_custom_call.1} parent=31 // pred_fallthru
          _
        // Predicated region
        $region61: #{tpu_custom_call.1} parent=31 // pred_check
          %p3229 = pneg %p122
        $region62: #{tpu_custom_call.1} parent=31 // pred_check_branch
          %3231 = sbr.rel (%p3229) target = $region64
        $region63: #{tpu_custom_call.1} parent=31 // pred_region
          %3233 = dma.done [#allocation6], 128
        $region64: #{tpu_custom_call.1} parent=31 // pred_fallthru
          _
        // Predicated region
        $region65: #{tpu_custom_call.1} parent=31 // pred_check
          %p3234 = pneg %p148
        $region66: #{tpu_custom_call.1} parent=31 // pred_check_branch
          %3236 = sbr.rel (%p3234) target = $region68
        $region67: #{tpu_custom_call.1} parent=31 // pred_region
          %p3237 = scmp.lt.s32.totalorder %s24, 0
          %s3238 = scalar_select %p3237, %s24, 0
          %s3239 = smul.addr %s3238, 8
          %s3240 = scalar_lea.vmem %s4, %s3239
        $region68: #{tpu_custom_call.1} parent=31 // pred_fallthru
          _
      $region32: #{tpu_custom_call.1} parent=5 // pred_fallthru
        _
      %p3241 = scmp.le.s32.totalorder 2, %s15
      // Predicated region
      $region69: #{tpu_custom_call.1} parent=5 // pred_check
        %p3242 = pneg %p3241
      $region70: #{tpu_custom_call.1} parent=5 // pred_check_branch
        %3244 = sbr.rel (%p3242) target = $region72
      $region71: #{tpu_custom_call.1} parent=5 // pred_region
        %s3245 = ssub.s32 %s15, 2
      $region72: #{tpu_custom_call.1} parent=5 // pred_fallthru
        _
    $region6: #{tpu_custom_call.1} parent=1 // loop_footer
      %s19 = sadd.s32 1, %s15
    $region7: #{tpu_custom_call.1} parent=1 // loop_footer_branch
      %14 = sbr.rel target = $region3
    $region8: #{tpu_custom_call.1} parent=1 // loop_exit
      _
    %3246 = vsyncpa [#allocation5], 1
    %s3247 = scalar_lea.sflag [#allocation5], 1
    %3248 = vsyncpa %s3247, 1
    %3249 = vsyncpa [#allocation6], 1
    %s3250 = scalar_lea.sflag [#allocation6], 1
    %3251 = vsyncpa %s3250, 1

</llo_original>
